<compile_context>
chip_gen: v5e
topology: v5e:2x2
jax: 0.10.0
libtpu: 0.0.40
codegen_flags: <defaults>
</compile_context>

<pallas_src>
import jax
import jax.numpy as jnp
from jax.experimental import pallas as pl
from jax.experimental.pallas import tpu as pltpu

IN_FEATURES = 48 * 7 * 7          # 2352
IN_PAD = 19 * 128                 # 2432: K padded to a multiple of 128 lanes
HIDDEN_RAW = 100
HIDDEN = 128                      # hidden dim padded to lane width
NUM_CLASSES = 10


def _round_up(n, m):
    return (n + m - 1) // m * m


# --------------------------------------------------------------------------- #
# Kernel
# --------------------------------------------------------------------------- #
def _mlp_softmax_kernel(x_ref, w1_ref, b1_ref, w2_ref, b2_ref, w3_ref, b3_ref,
                        o_ref):
    # fc1 + ReLU   (bf16 MXU, f32 accumulation)
    h1 = jnp.dot(x_ref[...], w1_ref[...], preferred_element_type=jnp.float32)
    h1 = jnp.maximum(h1 + b1_ref[...], 0.0).astype(jnp.bfloat16)
    # fc2 + ReLU
    h2 = jnp.dot(h1, w2_ref[...], preferred_element_type=jnp.float32)
    h2 = jnp.maximum(h2 + b2_ref[...], 0.0).astype(jnp.bfloat16)
    # fc3 (logits kept in f32 for the softmax)
    logits = jnp.dot(h2, w3_ref[...], preferred_element_type=jnp.float32)
    logits = logits + b3_ref[...]
    # softmax over the class axis (dim=1 of the 2-D PyTorch view), f32 math
    m = jnp.max(logits, axis=-1, keepdims=True)
    e = jnp.exp(logits - m)
    denom = jnp.sum(e, axis=-1, keepdims=True)
    o_ref[...] = (e * pl.reciprocal(denom, approx=False)).astype(o_ref.dtype)


# --------------------------------------------------------------------------- #
# Parameter preparation (done ONCE, not per forward call)
# --------------------------------------------------------------------------- #
def prepare_params(params):
    """Pad (hidden 100->128, K 2352->2432) and cast weights to bf16 once.

    Zero padding is inert: padded x/w1 K-rows contribute nothing, padded h1/h2
    columns stay exactly 0 through bias(0)+ReLU, and padded w2/w3 rows are 0.
    Biases stay f32 (added to the f32 accumulators)."""
    w1, b1, w2, b2, w3, b3 = params
    hp = HIDDEN - HIDDEN_RAW
    kp = IN_PAD - IN_FEATURES
    w1p = jnp.pad(w1.astype(jnp.float32), ((0, kp), (0, hp))).astype(jnp.bfloat16)
    b1p = jnp.pad(b1.reshape(1, -1).astype(jnp.float32), ((0, 0), (0, hp)))
    w2p = jnp.pad(w2.astype(jnp.float32), ((0, hp), (0, hp))).astype(jnp.bfloat16)
    b2p = jnp.pad(b2.reshape(1, -1).astype(jnp.float32), ((0, 0), (0, hp)))
    w3p = jnp.pad(w3.astype(jnp.float32), ((0, hp), (0, 0))).astype(jnp.bfloat16)
    b3p = b3.reshape(1, -1).astype(jnp.float32)
    return (w1p, b1p, w2p, b2p, w3p, b3p)


# --------------------------------------------------------------------------- #
# Tiling / pallas_call construction
# --------------------------------------------------------------------------- #
def _choose_tb(batch, max_tile):
    """Batch tile: near-minimal padding; >= 2 grid steps for non-trivial
    batches so the 'parallel' batch axis keeps both v7x TensorCores busy."""
    bq = _round_up(max(batch, 1), 8)
    n_steps = pl.cdiv(bq, max_tile)
    if n_steps == 1 and bq > 128:
        n_steps = 2
    return _round_up(pl.cdiv(bq, n_steps), 8)


def _make_pallas_call(tb, b_padded, single_buffer_weights):
    grid = (b_padded // tb,)

    if single_buffer_weights:
        # Constant index_map -> block never changes; one buffer is enough and
        # frees VMEM headroom (matters most on v5e's 16 MiB scoped default).
        def const_spec(shape):
            return pl.BlockSpec(shape, lambda i: (0, 0),
                                pipeline_mode=pl.Buffered(1))
    else:
        def const_spec(shape):
            return pl.BlockSpec(shape, lambda i: (0, 0))

    flops = 2 * b_padded * (IN_PAD * HIDDEN + HIDDEN * HIDDEN
                            + HIDDEN * NUM_CLASSES)
    bytes_accessed = (2 * b_padded * IN_PAD                              # x (bf16)
                      + 2 * (IN_PAD * HIDDEN + HIDDEN * HIDDEN
                             + HIDDEN * NUM_CLASSES)                     # w (bf16)
                      + 4 * (2 * HIDDEN + NUM_CLASSES)                   # b (f32)
                      + 4 * b_padded * NUM_CLASSES)                      # out

    return pl.pallas_call(
        _mlp_softmax_kernel,
        out_shape=jax.ShapeDtypeStruct((b_padded, NUM_CLASSES), jnp.float32),
        grid=grid,
        in_specs=[
            pl.BlockSpec((tb, IN_PAD), lambda i: (i, 0)),    # x tile (streamed)
            const_spec((IN_PAD, HIDDEN)),                    # w1 (VMEM-resident)
            const_spec((1, HIDDEN)),                         # b1
            const_spec((HIDDEN, HIDDEN)),                    # w2
            const_spec((1, HIDDEN)),                         # b2
            const_spec((HIDDEN, NUM_CLASSES)),               # w3
            const_spec((1, NUM_CLASSES)),                    # b3
        ],
        out_specs=pl.BlockSpec((tb, NUM_CLASSES), lambda i: (i, 0)),
        compiler_params=pltpu.CompilerParams(
            dimension_semantics=("parallel",)),
        cost_estimate=pl.CostEstimate(
            flops=flops,
            transcendentals=b_padded * NUM_CLASSES,
            bytes_accessed=bytes_accessed),
    )


def label_predict_net(x, prepared_params, *, tile_b=1024):
    """Forward pass of labelPredictNet.

    x: (..., 48, 7, 7) float32 (leading dims flattened like x.view(-1, 2352)).
    prepared_params: output of prepare_params().
    Returns (B, 10) float32 softmax probabilities.

    tile_b=1024 bf16 rows fits every generation's scoped-VMEM default; on v6e
    you may pass tile_b=2048 (and raise vmem_limit_bytes) for a few extra %.
    """
    x2d = x.reshape(-1, IN_FEATURES).astype(jnp.bfloat16)
    batch = x2d.shape[0]

    # Pad K to the lane-aligned 2432 (matches the padded w1).
    x2d = jnp.pad(x2d, ((0, 0), (0, IN_PAD - IN_FEATURES)))

    tb = _choose_tb(batch, tile_b)
    b_padded = _round_up(batch, tb)
    if b_padded != batch:
        x2d = jnp.pad(x2d, ((0, b_padded - batch), (0, 0)))

    args = (x2d,) + tuple(prepared_params)
    try:
        out = _make_pallas_call(tb, b_padded, True)(*args)
    except Exception:
        # pipeline_mode=pl.Buffered(1) unsupported on this build -> default
        # (double-buffered) weight blocks; only costs ~0.7 MiB of VMEM.
        out = _make_pallas_call(tb, b_padded, False)(*args)
    return out[:batch]


# --------------------------------------------------------------------------- #
# Init + reference
# --------------------------------------------------------------------------- #
def init_params(key):
    """Deterministic init mimicking nn.Linear default (uniform +-1/sqrt(fan_in)).
    Weights stored as (in_features, out_features), f32."""
    def linear(k, fan_in, fan_out):
        kw, kb = jax.random.split(k)
        bound = 1.0 / jnp.sqrt(fan_in)
        w = jax.random.uniform(kw, (fan_in, fan_out), jnp.float32, -bound, bound)
        b = jax.random.uniform(kb, (1, fan_out), jnp.float32, -bound, bound)
        return w, b

    k1, k2, k3 = jax.random.split(key, 3)
    w1, b1 = linear(k1, IN_FEATURES, HIDDEN_RAW)
    w2, b2 = linear(k2, HIDDEN_RAW, HIDDEN_RAW)
    w3, b3 = linear(k3, HIDDEN_RAW, NUM_CLASSES)
    return (w1, b1, w2, b2, w3, b3)


def _reference(x, params):
    w1, b1, w2, b2, w3, b3 = params
    h = x.reshape(-1, IN_FEATURES)
    h = jnp.maximum(h @ w1 + b1, 0.0)
    h = jnp.maximum(h @ w2 + b2, 0.0)
    logits = h @ w3 + b3
    return jax.nn.softmax(logits, axis=-1)


if __name__ == "__main__":
    key = jax.random.PRNGKey(0)
    kx, kp = jax.random.split(key)

    params = init_params(kp)
    prepared = prepare_params(params)     # pad + cast once, reused every call

    for b in (8, 300):                    # exercises 1-step and 2-step grids
        x = jax.random.normal(jax.random.fold_in(kx, b), (b, 48, 7, 7),
                              dtype=jnp.float32)
        out = jax.block_until_ready(label_predict_net(x, prepared))
        ref = _reference(x, params)
        assert out.shape == (b, NUM_CLASSES)
        # bf16 matmul inputs (f32 accumulation) -> loosened tolerance vs the
        # f32 reference; softmax itself is f32 so rows still sum to 1 tightly.
        assert jnp.allclose(out, ref, atol=2e-2, rtol=2e-2)
        assert jnp.allclose(jnp.sum(out, axis=-1), 1.0, atol=1e-5)

    print("KERNEL_OK")
</pallas_src>

<mosaic_0001>
module attributes {stable_mosaic.version = 11 : i64} {
  func.func @_mlp_softmax_kernel(%arg0: i32, %arg1: memref<8x2432xbf16, #tpu.memory_space<vmem>>, %arg2: memref<2432x128xbf16, #tpu.memory_space<vmem>>, %arg3: memref<1x128xf32, #tpu.memory_space<vmem>>, %arg4: memref<128x128xbf16, #tpu.memory_space<vmem>>, %arg5: memref<1x128xf32, #tpu.memory_space<vmem>>, %arg6: memref<128x10xbf16, #tpu.memory_space<vmem>>, %arg7: memref<1x10xf32, #tpu.memory_space<vmem>>, %arg8: memref<8x10xf32, #tpu.memory_space<vmem>>) attributes {dimension_semantics = [#tpu.dimension_semantics<parallel>], iteration_bounds = array<i64: 1>, scalar_prefetch = 0 : i64, scratch_operands = 0 : i64, tpu.core_type = #tpu.core_type<tc>, window_params = [{transform_indices = @transform_0, window_bounds = array<i64: 8, 2432>}, {pipeline_mode = #tpu.pipeline_mode<synchronous>, transform_indices = @transform_1, window_bounds = array<i64: 2432, 128>}, {pipeline_mode = #tpu.pipeline_mode<synchronous>, transform_indices = @transform_2, window_bounds = array<i64: 1, 128>}, {pipeline_mode = #tpu.pipeline_mode<synchronous>, transform_indices = @transform_3, window_bounds = array<i64: 128, 128>}, {pipeline_mode = #tpu.pipeline_mode<synchronous>, transform_indices = @transform_4, window_bounds = array<i64: 1, 128>}, {pipeline_mode = #tpu.pipeline_mode<synchronous>, transform_indices = @transform_5, window_bounds = array<i64: 128, 10>}, {pipeline_mode = #tpu.pipeline_mode<synchronous>, transform_indices = @transform_6, window_bounds = array<i64: 1, 10>}, {transform_indices = @transform_7, window_bounds = array<i64: 8, 10>}]} {
    %c0 = arith.constant 0 : index
    %c0_0 = arith.constant 0 : index
    %0 = vector.load %arg1[%c0, %c0_0] : memref<8x2432xbf16, #tpu.memory_space<vmem>>, vector<8x2432xbf16>
    %c0_1 = arith.constant 0 : index
    %c0_2 = arith.constant 0 : index
    %1 = vector.load %arg2[%c0_1, %c0_2] : memref<2432x128xbf16, #tpu.memory_space<vmem>>, vector<2432x128xbf16>
    %cst = arith.constant dense<0.000000e+00> : vector<8x128xf32>
    %2 = tpu.matmul %0, %1, %cst {dimension_numbers = #tpu.dot_dimension_numbers<[1], [0], [0], [1], [0, 0, 1, 1], [], []>} : vector<8x2432xbf16>, vector<2432x128xbf16>, vector<8x128xf32> -> vector<8x128xf32>
    %c0_3 = arith.constant 0 : index
    %c0_4 = arith.constant 0 : index
    %3 = vector.load %arg3[%c0_3, %c0_4] : memref<1x128xf32, #tpu.memory_space<vmem>>, vector<1x128xf32>
    %4 = vector.broadcast %3 : vector<1x128xf32> to vector<8x128xf32>
    %5 = arith.addf %2, %4 : vector<8x128xf32>
    %cst_5 = arith.constant 0.000000e+00 : f32
    %6 = vector.broadcast %cst_5 : f32 to vector<8x128xf32>
    %7 = arith.maximumf %5, %6 : vector<8x128xf32>
    %8 = arith.truncf %7 : vector<8x128xf32> to vector<8x128xbf16>
    %c0_6 = arith.constant 0 : index
    %c0_7 = arith.constant 0 : index
    %9 = vector.load %arg4[%c0_6, %c0_7] : memref<128x128xbf16, #tpu.memory_space<vmem>>, vector<128x128xbf16>
    %cst_8 = arith.constant dense<0.000000e+00> : vector<8x128xf32>
    %10 = tpu.matmul %8, %9, %cst_8 {dimension_numbers = #tpu.dot_dimension_numbers<[1], [0], [0], [1], [0, 0, 1, 1], [], []>} : vector<8x128xbf16>, vector<128x128xbf16>, vector<8x128xf32> -> vector<8x128xf32>
    %c0_9 = arith.constant 0 : index
    %c0_10 = arith.constant 0 : index
    %11 = vector.load %arg5[%c0_9, %c0_10] : memref<1x128xf32, #tpu.memory_space<vmem>>, vector<1x128xf32>
    %12 = vector.broadcast %11 : vector<1x128xf32> to vector<8x128xf32>
    %13 = arith.addf %10, %12 : vector<8x128xf32>
    %cst_11 = arith.constant 0.000000e+00 : f32
    %14 = vector.broadcast %cst_11 : f32 to vector<8x128xf32>
    %15 = arith.maximumf %13, %14 : vector<8x128xf32>
    %16 = arith.truncf %15 : vector<8x128xf32> to vector<8x128xbf16>
    %c0_12 = arith.constant 0 : index
    %c0_13 = arith.constant 0 : index
    %17 = vector.load %arg6[%c0_12, %c0_13] : memref<128x10xbf16, #tpu.memory_space<vmem>>, vector<128x10xbf16>
    %cst_14 = arith.constant dense<0.000000e+00> : vector<8x10xf32>
    %18 = tpu.matmul %16, %17, %cst_14 {dimension_numbers = #tpu.dot_dimension_numbers<[1], [0], [0], [1], [0, 0, 1, 1], [], []>} : vector<8x128xbf16>, vector<128x10xbf16>, vector<8x10xf32> -> vector<8x10xf32>
    %c0_15 = arith.constant 0 : index
    %c0_16 = arith.constant 0 : index
    %19 = vector.load %arg7[%c0_15, %c0_16] : memref<1x10xf32, #tpu.memory_space<vmem>>, vector<1x10xf32>
    %20 = vector.broadcast %19 : vector<1x10xf32> to vector<8x10xf32>
    %21 = arith.addf %18, %20 : vector<8x10xf32>
    %cst_17 = arith.constant dense<0xFF800000> : vector<8xf32>
    %22 = vector.multi_reduction <maximumf>, %21, %cst_17 [1] : vector<8x10xf32> to vector<8xf32>
    %23 = vector.shape_cast %22 : vector<8xf32> to vector<8x1xf32>
    %24 = vector.broadcast %23 : vector<8x1xf32> to vector<8x10xf32>
    %25 = arith.subf %21, %24 : vector<8x10xf32>
    %26 = math.exp %25 : vector<8x10xf32>
    %cst_18 = arith.constant dense<0.000000e+00> : vector<8xf32>
    %27 = vector.multi_reduction <add>, %26, %cst_18 [1] : vector<8x10xf32> to vector<8xf32>
    %28 = vector.shape_cast %27 : vector<8xf32> to vector<8x1xf32>
    %29 = tpu.reciprocal %28 : vector<8x1xf32> -> vector<8x1xf32>
    %30 = vector.broadcast %29 : vector<8x1xf32> to vector<8x10xf32>
    %31 = arith.mulf %26, %30 : vector<8x10xf32>
    %c0_19 = arith.constant 0 : index
    %c0_20 = arith.constant 0 : index
    %32 = vector.load %arg8[%c0_19, %c0_20] : memref<8x10xf32, #tpu.memory_space<vmem>>, vector<8x10xf32>
    tpu.vector_store %arg8[%c0_19, %c0_20], %31 {strides = array<i32>} : memref<8x10xf32, #tpu.memory_space<vmem>>, vector<8x10xf32>,
    return
  }
  func.func @transform_0(%arg0: i32) -> (i32, i32) {
    %c0_i32 = arith.constant 0 : i32
    %c0_i32_0 = arith.constant 0 : i32
    return %arg0, %c0_i32 : i32, i32
  }
  func.func @transform_1(%arg0: i32) -> (i32, i32) {
    %c0_i32 = arith.constant 0 : i32
    %c0_i32_0 = arith.constant 0 : i32
    %c0_i32_1 = arith.constant 0 : i32
    return %c0_i32, %c0_i32_0 : i32, i32
  }
  func.func @transform_2(%arg0: i32) -> (i32, i32) {
    %c0_i32 = arith.constant 0 : i32
    %c0_i32_0 = arith.constant 0 : i32
    %c0_i32_1 = arith.constant 0 : i32
    return %c0_i32, %c0_i32_0 : i32, i32
  }
  func.func @transform_3(%arg0: i32) -> (i32, i32) {
    %c0_i32 = arith.constant 0 : i32
    %c0_i32_0 = arith.constant 0 : i32
    %c0_i32_1 = arith.constant 0 : i32
    return %c0_i32, %c0_i32_0 : i32, i32
  }
  func.func @transform_4(%arg0: i32) -> (i32, i32) {
    %c0_i32 = arith.constant 0 : i32
    %c0_i32_0 = arith.constant 0 : i32
    %c0_i32_1 = arith.constant 0 : i32
    return %c0_i32, %c0_i32_0 : i32, i32
  }
  func.func @transform_5(%arg0: i32) -> (i32, i32) {
    %c0_i32 = arith.constant 0 : i32
    %c0_i32_0 = arith.constant 0 : i32
    %c0_i32_1 = arith.constant 0 : i32
    return %c0_i32, %c0_i32_0 : i32, i32
  }
  func.func @transform_6(%arg0: i32) -> (i32, i32) {
    %c0_i32 = arith.constant 0 : i32
    %c0_i32_0 = arith.constant 0 : i32
    %c0_i32_1 = arith.constant 0 : i32
    return %c0_i32, %c0_i32_0 : i32, i32
  }
  func.func @transform_7(%arg0: i32) -> (i32, i32) {
    %c0_i32 = arith.constant 0 : i32
    %c0_i32_0 = arith.constant 0 : i32
    return %arg0, %c0_i32 : i32, i32
  }
}

module attributes {stable_mosaic.version = 11 : i64} {
  func.func @_mlp_softmax_kernel(%arg0: i32, %arg1: memref<8x2432xbf16, #tpu.memory_space<vmem>>, %arg2: memref<2432x128xbf16, #tpu.memory_space<vmem>>, %arg3: memref<1x128xf32, #tpu.memory_space<vmem>>, %arg4: memref<128x128xbf16, #tpu.memory_space<vmem>>, %arg5: memref<1x128xf32, #tpu.memory_space<vmem>>, %arg6: memref<128x10xbf16, #tpu.memory_space<vmem>>, %arg7: memref<1x10xf32, #tpu.memory_space<vmem>>, %arg8: memref<8x10xf32, #tpu.memory_space<vmem>>) attributes {dimension_semantics = [#tpu.dimension_semantics<parallel>], iteration_bounds = array<i64: 1>, scalar_prefetch = 0 : i64, scratch_operands = 0 : i64, tpu.core_type = #tpu.core_type<tc>, window_params = [{transform_indices = @transform_0, window_bounds = array<i64: 8, 2432>}, {pipeline_mode = #tpu.pipeline_mode<synchronous>, transform_indices = @transform_1, window_bounds = array<i64: 2432, 128>}, {pipeline_mode = #tpu.pipeline_mode<synchronous>, transform_indices = @transform_2, window_bounds = array<i64: 1, 128>}, {pipeline_mode = #tpu.pipeline_mode<synchronous>, transform_indices = @transform_3, window_bounds = array<i64: 128, 128>}, {pipeline_mode = #tpu.pipeline_mode<synchronous>, transform_indices = @transform_4, window_bounds = array<i64: 1, 128>}, {pipeline_mode = #tpu.pipeline_mode<synchronous>, transform_indices = @transform_5, window_bounds = array<i64: 128, 10>}, {pipeline_mode = #tpu.pipeline_mode<synchronous>, transform_indices = @transform_6, window_bounds = array<i64: 1, 10>}, {transform_indices = @transform_7, window_bounds = array<i64: 8, 10>}]} {
    %c0 = arith.constant 0 : index
    %c0_0 = arith.constant 0 : index
    %0 = vector.load %arg1[%c0, %c0_0] : memref<8x2432xbf16, #tpu.memory_space<vmem>>, vector<8x2432xbf16>
    %c0_1 = arith.constant 0 : index
    %c0_2 = arith.constant 0 : index
    %1 = vector.load %arg2[%c0_1, %c0_2] : memref<2432x128xbf16, #tpu.memory_space<vmem>>, vector<2432x128xbf16>
    %cst = arith.constant dense<0.000000e+00> : vector<8x128xf32>
    %2 = tpu.matmul %0, %1, %cst {dimension_numbers = #tpu.dot_dimension_numbers<[1], [0], [0], [1], [0, 0, 1, 1], [], []>} : vector<8x2432xbf16>, vector<2432x128xbf16>, vector<8x128xf32> -> vector<8x128xf32>
    %c0_3 = arith.constant 0 : index
    %c0_4 = arith.constant 0 : index
    %3 = vector.load %arg3[%c0_3, %c0_4] : memref<1x128xf32, #tpu.memory_space<vmem>>, vector<1x128xf32>
    %4 = vector.broadcast %3 : vector<1x128xf32> to vector<8x128xf32>
    %5 = arith.addf %2, %4 : vector<8x128xf32>
    %cst_5 = arith.constant 0.000000e+00 : f32
    %6 = vector.broadcast %cst_5 : f32 to vector<8x128xf32>
    %7 = arith.maximumf %5, %6 : vector<8x128xf32>
    %8 = arith.truncf %7 : vector<8x128xf32> to vector<8x128xbf16>
    %c0_6 = arith.constant 0 : index
    %c0_7 = arith.constant 0 : index
    %9 = vector.load %arg4[%c0_6, %c0_7] : memref<128x128xbf16, #tpu.memory_space<vmem>>, vector<128x128xbf16>
    %cst_8 = arith.constant dense<0.000000e+00> : vector<8x128xf32>
    %10 = tpu.matmul %8, %9, %cst_8 {dimension_numbers = #tpu.dot_dimension_numbers<[1], [0], [0], [1], [0, 0, 1, 1], [], []>} : vector<8x128xbf16>, vector<128x128xbf16>, vector<8x128xf32> -> vector<8x128xf32>
    %c0_9 = arith.constant 0 : index
    %c0_10 = arith.constant 0 : index
    %11 = vector.load %arg5[%c0_9, %c0_10] : memref<1x128xf32, #tpu.memory_space<vmem>>, vector<1x128xf32>
    %12 = vector.broadcast %11 : vector<1x128xf32> to vector<8x128xf32>
    %13 = arith.addf %10, %12 : vector<8x128xf32>
    %cst_11 = arith.constant 0.000000e+00 : f32
    %14 = vector.broadcast %cst_11 : f32 to vector<8x128xf32>
    %15 = arith.maximumf %13, %14 : vector<8x128xf32>
    %16 = arith.truncf %15 : vector<8x128xf32> to vector<8x128xbf16>
    %c0_12 = arith.constant 0 : index
    %c0_13 = arith.constant 0 : index
    %17 = vector.load %arg6[%c0_12, %c0_13] : memref<128x10xbf16, #tpu.memory_space<vmem>>, vector<128x10xbf16>
    %cst_14 = arith.constant dense<0.000000e+00> : vector<8x10xf32>
    %18 = tpu.matmul %16, %17, %cst_14 {dimension_numbers = #tpu.dot_dimension_numbers<[1], [0], [0], [1], [0, 0, 1, 1], [], []>} : vector<8x128xbf16>, vector<128x10xbf16>, vector<8x10xf32> -> vector<8x10xf32>
    %c0_15 = arith.constant 0 : index
    %c0_16 = arith.constant 0 : index
    %19 = vector.load %arg7[%c0_15, %c0_16] : memref<1x10xf32, #tpu.memory_space<vmem>>, vector<1x10xf32>
    %20 = vector.broadcast %19 : vector<1x10xf32> to vector<8x10xf32>
    %21 = arith.addf %18, %20 : vector<8x10xf32>
    %cst_17 = arith.constant dense<0xFF800000> : vector<8xf32>
    %22 = vector.multi_reduction <maximumf>, %21, %cst_17 [1] : vector<8x10xf32> to vector<8xf32>
    %23 = vector.shape_cast %22 : vector<8xf32> to vector<8x1xf32>
    %24 = vector.broadcast %23 : vector<8x1xf32> to vector<8x10xf32>
    %25 = arith.subf %21, %24 : vector<8x10xf32>
    %26 = math.exp %25 : vector<8x10xf32>
    %cst_18 = arith.constant dense<0.000000e+00> : vector<8xf32>
    %27 = vector.multi_reduction <add>, %26, %cst_18 [1] : vector<8x10xf32> to vector<8xf32>
    %28 = vector.shape_cast %27 : vector<8xf32> to vector<8x1xf32>
    %29 = tpu.reciprocal %28 : vector<8x1xf32> -> vector<8x1xf32>
    %30 = vector.broadcast %29 : vector<8x1xf32> to vector<8x10xf32>
    %31 = arith.mulf %26, %30 : vector<8x10xf32>
    %c0_19 = arith.constant 0 : index
    %c0_20 = arith.constant 0 : index
    %32 = vector.load %arg8[%c0_19, %c0_20] : memref<8x10xf32, #tpu.memory_space<vmem>>, vector<8x10xf32>
    tpu.vector_store %arg8[%c0_19, %c0_20], %31 {strides = array<i32>} : memref<8x10xf32, #tpu.memory_space<vmem>>, vector<8x10xf32>,
    return
  }
  func.func @transform_0(%arg0: i32) -> (i32, i32) {
    %c0_i32 = arith.constant 0 : i32
    %c0_i32_0 = arith.constant 0 : i32
    return %arg0, %c0_i32 : i32, i32
  }
  func.func @transform_1(%arg0: i32) -> (i32, i32) {
    %c0_i32 = arith.constant 0 : i32
    %c0_i32_0 = arith.constant 0 : i32
    %c0_i32_1 = arith.constant 0 : i32
    return %c0_i32, %c0_i32_0 : i32, i32
  }
  func.func @transform_2(%arg0: i32) -> (i32, i32) {
    %c0_i32 = arith.constant 0 : i32
    %c0_i32_0 = arith.constant 0 : i32
    %c0_i32_1 = arith.constant 0 : i32
    return %c0_i32, %c0_i32_0 : i32, i32
  }
  func.func @transform_3(%arg0: i32) -> (i32, i32) {
    %c0_i32 = arith.constant 0 : i32
    %c0_i32_0 = arith.constant 0 : i32
    %c0_i32_1 = arith.constant 0 : i32
    return %c0_i32, %c0_i32_0 : i32, i32
  }
  func.func @transform_4(%arg0: i32) -> (i32, i32) {
    %c0_i32 = arith.constant 0 : i32
    %c0_i32_0 = arith.constant 0 : i32
    %c0_i32_1 = arith.constant 0 : i32
    return %c0_i32, %c0_i32_0 : i32, i32
  }
  func.func @transform_5(%arg0: i32) -> (i32, i32) {
    %c0_i32 = arith.constant 0 : i32
    %c0_i32_0 = arith.constant 0 : i32
    %c0_i32_1 = arith.constant 0 : i32
    return %c0_i32, %c0_i32_0 : i32, i32
  }
  func.func @transform_6(%arg0: i32) -> (i32, i32) {
    %c0_i32 = arith.constant 0 : i32
    %c0_i32_0 = arith.constant 0 : i32
    %c0_i32_1 = arith.constant 0 : i32
    return %c0_i32, %c0_i32_0 : i32, i32
  }
  func.func @transform_7(%arg0: i32) -> (i32, i32) {
    %c0_i32 = arith.constant 0 : i32
    %c0_i32_0 = arith.constant 0 : i32
    return %arg0, %c0_i32 : i32, i32
  }
}

</mosaic_0001>

<llo_original>
// kernel: tpu_custom_call.1
$region0: #{tpu_custom_call.1}
  #allocation0 [shape = 'u32[]', space=smem, size = 0x4, offset = 0x4, fixed_abs, tag = 'smem constant byte address 0x4 - core index']
  #allocation1 [shape = 'u32[72,128]{1,0:T(1,128)}', space=vmem, size = 0x9000, scoped, tag = 'internal scratch']
  %s0 = inlined_call_operand.hbm [shape: bf16[8,2432], index: 0, kind: input, shape index: {}]
  %s1 = inlined_call_operand.hbm [shape: bf16[2432,128], index: 1, kind: input, shape index: {}]
  %s2 = inlined_call_operand.vmem [shape: f32[1,128], index: 2, kind: input, shape index: {}]
  %s3 = inlined_call_operand.vmem [shape: bf16[128,128], index: 3, kind: input, shape index: {}]
  %s4 = inlined_call_operand.vmem [shape: f32[1,128], index: 4, kind: input, shape index: {}]
  %s5 = inlined_call_operand.vmem [shape: bf16[128,10], index: 5, kind: input, shape index: {}]
  %s6 = inlined_call_operand.vmem [shape: f32[1,10], index: 6, kind: input, shape index: {}]
  %s7 = inlined_call_operand.hbm [shape: f32[8,10], index: 7, kind: output, shape index: {}]
  %s8 = sld [smem:[#allocation0]]
  $region46: #{tpu_custom_call.1} parent=0
    _
  %s10 = ssub.s32 1, %s8
  %s11 = scalar_select 0, %s10, %s8
  $region1: #{tpu_custom_call.1} parent=0
    #allocation2 [shape = 'u8[38912]{0}', space=vmem, size = 0x9800, scoped, tag = 'input window, operand 0, single buffered']
    #allocation3 [shape = 's32[1]{0}', space=sflag, size = 0x4, scoped, tag = 'scoped memory for tpu_custom_call.1']
    #allocation4 [shape = 's32[1]{0}', space=sflag, size = 0x4, scoped, tag = 'scoped memory for tpu_custom_call.1']
    #allocation5 [shape = 'u8[622592]{0}', space=vmem, size = 0x98000, scoped, tag = 'input window, operand 1, single buffered']
    #allocation6 [shape = 's32[1]{0}', space=sflag, size = 0x4, scoped, tag = 'scoped memory for tpu_custom_call.1']
    #allocation7 [shape = 'u8[4096]{0}', space=vmem, size = 0x1000, scoped, tag = 'output window, operand 0, single buffered']
    %12 = vsyncpa [#allocation3], 0
    %13 = vsyncpa [#allocation6], 0
    %14 = vsyncpa [#allocation4], 0
    // Predicated region
    $region2: #{tpu_custom_call.1} parent=1 // pred_check
      _
    $region3: #{tpu_custom_call.1} parent=1 // pred_check_branch
      %16 = sbr.rel (0) target = $region5
    $region4: #{tpu_custom_call.1} parent=1 // pred_region
      %18 = vsyncadd [#allocation3], 0
      %s20 = sshll.u32 %s0, 4
      %s21 = int_to_ptr.hbm [resolvable:$true] %s20
      %s22 = sshll.u32 [#allocation2], 4
      %s23 = int_to_ptr.vmem [resolvable:$true] %s22
      %25 = dma.hbm_to_vmem [thread:$0]  %s21, 1216, %s23, [#allocation3]
    $region5: #{tpu_custom_call.1} parent=1 // pred_fallthru
      _
    // Predicated region
    $region6: #{tpu_custom_call.1} parent=1 // pred_check
      _
    $region7: #{tpu_custom_call.1} parent=1 // pred_check_branch
      %27 = sbr.rel (0) target = $region9
    $region8: #{tpu_custom_call.1} parent=1 // pred_region
      %29 = vsyncadd [#allocation6], 0
      %s30 = sshll.u32 %s1, 4
      %s31 = int_to_ptr.hbm [resolvable:$true] %s30
      %s32 = sshll.u32 [#allocation5], 4
      %s33 = int_to_ptr.vmem [resolvable:$true] %s32
      %38 = dma.hbm_to_vmem [thread:$0]  %s31, 19456, %s33, [#allocation6], 64, 64, 4
    $region9: #{tpu_custom_call.1} parent=1 // pred_fallthru
      _
    // Predicated region
    $region10: #{tpu_custom_call.1} parent=1 // pred_check
      _
    $region11: #{tpu_custom_call.1} parent=1 // pred_check_branch
      %40 = sbr.rel (0) target = $region13
    $region12: #{tpu_custom_call.1} parent=1 // pred_region
      _
    $region13: #{tpu_custom_call.1} parent=1 // pred_fallthru
      _
    // Predicated region
    $region14: #{tpu_custom_call.1} parent=1 // pred_check
      _
    $region15: #{tpu_custom_call.1} parent=1 // pred_check_branch
      %42 = sbr.rel (0) target = $region17
    $region16: #{tpu_custom_call.1} parent=1 // pred_region
      _
    $region17: #{tpu_custom_call.1} parent=1 // pred_fallthru
      _
    // Predicated region
    $region18: #{tpu_custom_call.1} parent=1 // pred_check
      _
    $region19: #{tpu_custom_call.1} parent=1 // pred_check_branch
      %44 = sbr.rel (0) target = $region21
    $region20: #{tpu_custom_call.1} parent=1 // pred_region
      _
    $region21: #{tpu_custom_call.1} parent=1 // pred_fallthru
      _
    // Predicated region
    $region22: #{tpu_custom_call.1} parent=1 // pred_check
      _
    $region23: #{tpu_custom_call.1} parent=1 // pred_check_branch
      %46 = sbr.rel (0) target = $region25
    $region24: #{tpu_custom_call.1} parent=1 // pred_region
      _
    $region25: #{tpu_custom_call.1} parent=1 // pred_fallthru
      _
    // Predicated region
    $region26: #{tpu_custom_call.1} parent=1 // pred_check
      _
    $region27: #{tpu_custom_call.1} parent=1 // pred_check_branch
      %48 = sbr.rel (0) target = $region29
    $region28: #{tpu_custom_call.1} parent=1 // pred_region
      _
    $region29: #{tpu_custom_call.1} parent=1 // pred_fallthru
      _
    // Predicated region
    $region30: #{tpu_custom_call.1} parent=1 // pred_check
      _
    $region31: #{tpu_custom_call.1} parent=1 // pred_check_branch
      %50 = sbr.rel (0) target = $region33
    $region32: #{tpu_custom_call.1} parent=1 // pred_region
      %52 = dma.done [#allocation3], 1216
    $region33: #{tpu_custom_call.1} parent=1 // pred_fallthru
      _
    // Predicated region
    $region34: #{tpu_custom_call.1} parent=1 // pred_check
      _
    $region35: #{tpu_custom_call.1} parent=1 // pred_check_branch
      %54 = sbr.rel (0) target = $region37
    $region36: #{tpu_custom_call.1} parent=1 // pred_region
      %56 = dma.done [#allocation6], 19456
    $region37: #{tpu_custom_call.1} parent=1 // pred_fallthru
      _
    %v57 = vld [vmem:[#allocation2] sm:$0xff]
    %v58 = vld [vmem:[#allocation2 + $0x8] sm:$0xff]
    %v59 = vld [vmem:[#allocation2 + $0x10] sm:$0xff]
    %v60 = vld [vmem:[#allocation2 + $0x18] sm:$0xff]
    %v61 = vld [vmem:[#allocation2 + $0x20] sm:$0xff]
    %v62 = vld [vmem:[#allocation2 + $0x28] sm:$0xff]
    %v63 = vld [vmem:[#allocation2 + $0x30] sm:$0xff]
    %v64 = vld [vmem:[#allocation2 + $0x38] sm:$0xff]
    %v65 = vld [vmem:[#allocation2 + $0x40] sm:$0xff]
    %v66 = vld [vmem:[#allocation2 + $0x48] sm:$0xf]
    %v67 = vld [vmem:[#allocation5] sm:$0xf]
    %v68 = vld [vmem:[#allocation5 + $0x4] sm:$0xf]
    %v69 = vld [vmem:[#allocation5 + $0x8] sm:$0xf]
    %v70 = vld [vmem:[#allocation5 + $0xc] sm:$0xf]
    %v71 = vld [vmem:[#allocation5 + $0x10] sm:$0xf]
    %v72 = vld [vmem:[#allocation5 + $0x14] sm:$0xf]
    %v73 = vld [vmem:[#allocation5 + $0x18] sm:$0xf]
    %v74 = vld [vmem:[#allocation5 + $0x1c] sm:$0xf]
    %v75 = vld [vmem:[#allocation5 + $0x20] sm:$0xf]
    %v76 = vld [vmem:[#allocation5 + $0x24] sm:$0xf]
    %v77 = vld [vmem:[#allocation5 + $0x28] sm:$0xf]
    %v78 = vld [vmem:[#allocation5 + $0x2c] sm:$0xf]
    %v79 = vld [vmem:[#allocation5 + $0x30] sm:$0xf]
    %v80 = vld [vmem:[#allocation5 + $0x34] sm:$0xf]
    %v81 = vld [vmem:[#allocation5 + $0x38] sm:$0xf]
    %v82 = vld [vmem:[#allocation5 + $0x3c] sm:$0xf]
    %v83 = vld [vmem:[#allocation5 + $0x40] sm:$0xf]
    %v84 = vld [vmem:[#allocation5 + $0x44] sm:$0xf]
    %v85 = vld [vmem:[#allocation5 + $0x48] sm:$0xf]
    %v86 = vld [vmem:[#allocation5 + $0x4c] sm:$0xf]
    %v87 = vld [vmem:[#allocation5 + $0x50] sm:$0xf]
    %v88 = vld [vmem:[#allocation5 + $0x54] sm:$0xf]
    %v89 = vld [vmem:[#allocation5 + $0x58] sm:$0xf]
    %v90 = vld [vmem:[#allocation5 + $0x5c] sm:$0xf]
    %v91 = vld [vmem:[#allocation5 + $0x60] sm:$0xf]
    %v92 = vld [vmem:[#allocation5 + $0x64] sm:$0xf]
    %v93 = vld [vmem:[#allocation5 + $0x68] sm:$0xf]
    %v94 = vld [vmem:[#allocation5 + $0x6c] sm:$0xf]
    %v95 = vld [vmem:[#allocation5 + $0x70] sm:$0xf]
    %v96 = vld [vmem:[#allocation5 + $0x74] sm:$0xf]
    %v97 = vld [vmem:[#allocation5 + $0x78] sm:$0xf]
    %v98 = vld [vmem:[#allocation5 + $0x7c] sm:$0xf]
    %v99 = vld [vmem:[#allocation5 + $0x80] sm:$0xf]
    %v100 = vld [vmem:[#allocation5 + $0x84] sm:$0xf]
    %v101 = vld [vmem:[#allocation5 + $0x88] sm:$0xf]
    %v102 = vld [vmem:[#allocation5 + $0x8c] sm:$0xf]
    %v103 = vld [vmem:[#allocation5 + $0x90] sm:$0xf]
    %v104 = vld [vmem:[#allocation5 + $0x94] sm:$0xf]
    %v105 = vld [vmem:[#allocation5 + $0x98] sm:$0xf]
    %v106 = vld [vmem:[#allocation5 + $0x9c] sm:$0xf]
    %v107 = vld [vmem:[#allocation5 + $0xa0] sm:$0xf]
    %v108 = vld [vmem:[#allocation5 + $0xa4] sm:$0xf]
    %v109 = vld [vmem:[#allocation5 + $0xa8] sm:$0xf]
    %v110 = vld [vmem:[#allocation5 + $0xac] sm:$0xf]
    %v111 = vld [vmem:[#allocation5 + $0xb0] sm:$0xf]
    %v112 = vld [vmem:[#allocation5 + $0xb4] sm:$0xf]
    %v113 = vld [vmem:[#allocation5 + $0xb8] sm:$0xf]
    %v114 = vld [vmem:[#allocation5 + $0xbc] sm:$0xf]
    %v115 = vld [vmem:[#allocation5 + $0xc0] sm:$0xf]
    %v116 = vld [vmem:[#allocation5 + $0xc4] sm:$0xf]
    %v117 = vld [vmem:[#allocation5 + $0xc8] sm:$0xf]
    %v118 = vld [vmem:[#allocation5 + $0xcc] sm:$0xf]
    %v119 = vld [vmem:[#allocation5 + $0xd0] sm:$0xf]
    %v120 = vld [vmem:[#allocation5 + $0xd4] sm:$0xf]
    %v121 = vld [vmem:[#allocation5 + $0xd8] sm:$0xf]
    %v122 = vld [vmem:[#allocation5 + $0xdc] sm:$0xf]
    %v123 = vld [vmem:[#allocation5 + $0xe0] sm:$0xf]
    %v124 = vld [vmem:[#allocation5 + $0xe4] sm:$0xf]
    %v125 = vld [vmem:[#allocation5 + $0xe8] sm:$0xf]
    %v126 = vld [vmem:[#allocation5 + $0xec] sm:$0xf]
    %v127 = vld [vmem:[#allocation5 + $0xf0] sm:$0xf]
    %v128 = vld [vmem:[#allocation5 + $0xf4] sm:$0xf]
    %v129 = vld [vmem:[#allocation5 + $0xf8] sm:$0xf]
    %v130 = vld [vmem:[#allocation5 + $0xfc] sm:$0xf]
    %v131 = vld [vmem:[#allocation5 + $0x100] sm:$0xf]
    %v132 = vld [vmem:[#allocation5 + $0x104] sm:$0xf]
    %v133 = vld [vmem:[#allocation5 + $0x108] sm:$0xf]
    %v134 = vld [vmem:[#allocation5 + $0x10c] sm:$0xf]
    %v135 = vld [vmem:[#allocation5 + $0x110] sm:$0xf]
    %v136 = vld [vmem:[#allocation5 + $0x114] sm:$0xf]
    %v137 = vld [vmem:[#allocation5 + $0x118] sm:$0xf]
    %v138 = vld [vmem:[#allocation5 + $0x11c] sm:$0xf]
    %v139 = vld [vmem:[#allocation5 + $0x120] sm:$0xf]
    %v140 = vld [vmem:[#allocation5 + $0x124] sm:$0xf]
    %v141 = vld [vmem:[#allocation5 + $0x128] sm:$0xf]
    %v142 = vld [vmem:[#allocation5 + $0x12c] sm:$0xf]
    %v143 = vld [vmem:[#allocation5 + $0x130] sm:$0xf]
    %v144 = vld [vmem:[#allocation5 + $0x134] sm:$0xf]
    %v145 = vld [vmem:[#allocation5 + $0x138] sm:$0xf]
    %v146 = vld [vmem:[#allocation5 + $0x13c] sm:$0xf]
    %v147 = vld [vmem:[#allocation5 + $0x140] sm:$0xf]
    %v148 = vld [vmem:[#allocation5 + $0x144] sm:$0xf]
    %v149 = vld [vmem:[#allocation5 + $0x148] sm:$0xf]
    %v150 = vld [vmem:[#allocation5 + $0x14c] sm:$0xf]
    %v151 = vld [vmem:[#allocation5 + $0x150] sm:$0xf]
    %v152 = vld [vmem:[#allocation5 + $0x154] sm:$0xf]
    %v153 = vld [vmem:[#allocation5 + $0x158] sm:$0xf]
    %v154 = vld [vmem:[#allocation5 + $0x15c] sm:$0xf]
    %v155 = vld [vmem:[#allocation5 + $0x160] sm:$0xf]
    %v156 = vld [vmem:[#allocation5 + $0x164] sm:$0xf]
    %v157 = vld [vmem:[#allocation5 + $0x168] sm:$0xf]
    %v158 = vld [vmem:[#allocation5 + $0x16c] sm:$0xf]
    %v159 = vld [vmem:[#allocation5 + $0x170] sm:$0xf]
    %v160 = vld [vmem:[#allocation5 + $0x174] sm:$0xf]
    %v161 = vld [vmem:[#allocation5 + $0x178] sm:$0xf]
    %v162 = vld [vmem:[#allocation5 + $0x17c] sm:$0xf]
    %v163 = vld [vmem:[#allocation5 + $0x180] sm:$0xf]
    %v164 = vld [vmem:[#allocation5 + $0x184] sm:$0xf]
    %v165 = vld [vmem:[#allocation5 + $0x188] sm:$0xf]
    %v166 = vld [vmem:[#allocation5 + $0x18c] sm:$0xf]
    %v167 = vld [vmem:[#allocation5 + $0x190] sm:$0xf]
    %v168 = vld [vmem:[#allocation5 + $0x194] sm:$0xf]
    %v169 = vld [vmem:[#allocation5 + $0x198] sm:$0xf]
    %v170 = vld [vmem:[#allocation5 + $0x19c] sm:$0xf]
    %v171 = vld [vmem:[#allocation5 + $0x1a0] sm:$0xf]
    %v172 = vld [vmem:[#allocation5 + $0x1a4] sm:$0xf]
    %v173 = vld [vmem:[#allocation5 + $0x1a8] sm:$0xf]
    %v174 = vld [vmem:[#allocation5 + $0x1ac] sm:$0xf]
    %v175 = vld [vmem:[#allocation5 + $0x1b0] sm:$0xf]
    %v176 = vld [vmem:[#allocation5 + $0x1b4] sm:$0xf]
    %v177 = vld [vmem:[#allocation5 + $0x1b8] sm:$0xf]
    %v178 = vld [vmem:[#allocation5 + $0x1bc] sm:$0xf]
    %v179 = vld [vmem:[#allocation5 + $0x1c0] sm:$0xf]
    %v180 = vld [vmem:[#allocation5 + $0x1c4] sm:$0xf]
    %v181 = vld [vmem:[#allocation5 + $0x1c8] sm:$0xf]
    %v182 = vld [vmem:[#allocation5 + $0x1cc] sm:$0xf]
    %v183 = vld [vmem:[#allocation5 + $0x1d0] sm:$0xf]
    %v184 = vld [vmem:[#allocation5 + $0x1d4] sm:$0xf]
    %v185 = vld [vmem:[#allocation5 + $0x1d8] sm:$0xf]
    %v186 = vld [vmem:[#allocation5 + $0x1dc] sm:$0xf]
    %v187 = vld [vmem:[#allocation5 + $0x1e0] sm:$0xf]
    %v188 = vld [vmem:[#allocation5 + $0x1e4] sm:$0xf]
    %v189 = vld [vmem:[#allocation5 + $0x1e8] sm:$0xf]
    %v190 = vld [vmem:[#allocation5 + $0x1ec] sm:$0xf]
    %v191 = vld [vmem:[#allocation5 + $0x1f0] sm:$0xf]
    %v192 = vld [vmem:[#allocation5 + $0x1f4] sm:$0xf]
    %v193 = vld [vmem:[#allocation5 + $0x1f8] sm:$0xf]
    %v194 = vld [vmem:[#allocation5 + $0x1fc] sm:$0xf]
    %v195 = vld [vmem:[#allocation5 + $0x200] sm:$0xf]
    %v196 = vld [vmem:[#allocation5 + $0x204] sm:$0xf]
    %v197 = vld [vmem:[#allocation5 + $0x208] sm:$0xf]
    %v198 = vld [vmem:[#allocation5 + $0x20c] sm:$0xf]
    %v199 = vld [vmem:[#allocation5 + $0x210] sm:$0xf]
    %v200 = vld [vmem:[#allocation5 + $0x214] sm:$0xf]
    %v201 = vld [vmem:[#allocation5 + $0x218] sm:$0xf]
    %v202 = vld [vmem:[#allocation5 + $0x21c] sm:$0xf]
    %v203 = vld [vmem:[#allocation5 + $0x220] sm:$0xf]
    %v204 = vld [vmem:[#allocation5 + $0x224] sm:$0xf]
    %v205 = vld [vmem:[#allocation5 + $0x228] sm:$0xf]
    %v206 = vld [vmem:[#allocation5 + $0x22c] sm:$0xf]
    %v207 = vld [vmem:[#allocation5 + $0x230] sm:$0xf]
    %v208 = vld [vmem:[#allocation5 + $0x234] sm:$0xf]
    %v209 = vld [vmem:[#allocation5 + $0x238] sm:$0xf]
    %v210 = vld [vmem:[#allocation5 + $0x23c] sm:$0xf]
    %v211 = vld [vmem:[#allocation5 + $0x240] sm:$0xf]
    %v212 = vld [vmem:[#allocation5 + $0x244] sm:$0xf]
    %v213 = vld [vmem:[#allocation5 + $0x248] sm:$0xf]
    %v214 = vld [vmem:[#allocation5 + $0x24c] sm:$0xf]
    %v215 = vld [vmem:[#allocation5 + $0x250] sm:$0xf]
    %v216 = vld [vmem:[#allocation5 + $0x254] sm:$0xf]
    %v217 = vld [vmem:[#allocation5 + $0x258] sm:$0xf]
    %v218 = vld [vmem:[#allocation5 + $0x25c] sm:$0xf]
    %v219 = vld [vmem:[#allocation5 + $0x260] sm:$0xf]
    %v220 = vld [vmem:[#allocation5 + $0x264] sm:$0xf]
    %v221 = vld [vmem:[#allocation5 + $0x268] sm:$0xf]
    %v222 = vld [vmem:[#allocation5 + $0x26c] sm:$0xf]
    %v223 = vld [vmem:[#allocation5 + $0x270] sm:$0xf]
    %v224 = vld [vmem:[#allocation5 + $0x274] sm:$0xf]
    %v225 = vld [vmem:[#allocation5 + $0x278] sm:$0xf]
    %v226 = vld [vmem:[#allocation5 + $0x27c] sm:$0xf]
    %v227 = vld [vmem:[#allocation5 + $0x280] sm:$0xf]
    %v228 = vld [vmem:[#allocation5 + $0x284] sm:$0xf]
    %v229 = vld [vmem:[#allocation5 + $0x288] sm:$0xf]
    %v230 = vld [vmem:[#allocation5 + $0x28c] sm:$0xf]
    %v231 = vld [vmem:[#allocation5 + $0x290] sm:$0xf]
    %v232 = vld [vmem:[#allocation5 + $0x294] sm:$0xf]
    %v233 = vld [vmem:[#allocation5 + $0x298] sm:$0xf]
    %v234 = vld [vmem:[#allocation5 + $0x29c] sm:$0xf]
    %v235 = vld [vmem:[#allocation5 + $0x2a0] sm:$0xf]
    %v236 = vld [vmem:[#allocation5 + $0x2a4] sm:$0xf]
    %v237 = vld [vmem:[#allocation5 + $0x2a8] sm:$0xf]
    %v238 = vld [vmem:[#allocation5 + $0x2ac] sm:$0xf]
    %v239 = vld [vmem:[#allocation5 + $0x2b0] sm:$0xf]
    %v240 = vld [vmem:[#allocation5 + $0x2b4] sm:$0xf]
    %v241 = vld [vmem:[#allocation5 + $0x2b8] sm:$0xf]
    %v242 = vld [vmem:[#allocation5 + $0x2bc] sm:$0xf]
    %v243 = vld [vmem:[#allocation5 + $0x2c0] sm:$0xf]
    %v244 = vld [vmem:[#allocation5 + $0x2c4] sm:$0xf]
    %v245 = vld [vmem:[#allocation5 + $0x2c8] sm:$0xf]
    %v246 = vld [vmem:[#allocation5 + $0x2cc] sm:$0xf]
    %v247 = vld [vmem:[#allocation5 + $0x2d0] sm:$0xf]
    %v248 = vld [vmem:[#allocation5 + $0x2d4] sm:$0xf]
    %v249 = vld [vmem:[#allocation5 + $0x2d8] sm:$0xf]
    %v250 = vld [vmem:[#allocation5 + $0x2dc] sm:$0xf]
    %v251 = vld [vmem:[#allocation5 + $0x2e0] sm:$0xf]
    %v252 = vld [vmem:[#allocation5 + $0x2e4] sm:$0xf]
    %v253 = vld [vmem:[#allocation5 + $0x2e8] sm:$0xf]
    %v254 = vld [vmem:[#allocation5 + $0x2ec] sm:$0xf]
    %v255 = vld [vmem:[#allocation5 + $0x2f0] sm:$0xf]
    %v256 = vld [vmem:[#allocation5 + $0x2f4] sm:$0xf]
    %v257 = vld [vmem:[#allocation5 + $0x2f8] sm:$0xf]
    %v258 = vld [vmem:[#allocation5 + $0x2fc] sm:$0xf]
    %v259 = vld [vmem:[#allocation5 + $0x300] sm:$0xf]
    %v260 = vld [vmem:[#allocation5 + $0x304] sm:$0xf]
    %v261 = vld [vmem:[#allocation5 + $0x308] sm:$0xf]
    %v262 = vld [vmem:[#allocation5 + $0x30c] sm:$0xf]
    %v263 = vld [vmem:[#allocation5 + $0x310] sm:$0xf]
    %v264 = vld [vmem:[#allocation5 + $0x314] sm:$0xf]
    %v265 = vld [vmem:[#allocation5 + $0x318] sm:$0xf]
    %v266 = vld [vmem:[#allocation5 + $0x31c] sm:$0xf]
    %v267 = vld [vmem:[#allocation5 + $0x320] sm:$0xf]
    %v268 = vld [vmem:[#allocation5 + $0x324] sm:$0xf]
    %v269 = vld [vmem:[#allocation5 + $0x328] sm:$0xf]
    %v270 = vld [vmem:[#allocation5 + $0x32c] sm:$0xf]
    %v271 = vld [vmem:[#allocation5 + $0x330] sm:$0xf]
    %v272 = vld [vmem:[#allocation5 + $0x334] sm:$0xf]
    %v273 = vld [vmem:[#allocation5 + $0x338] sm:$0xf]
    %v274 = vld [vmem:[#allocation5 + $0x33c] sm:$0xf]
    %v275 = vld [vmem:[#allocation5 + $0x340] sm:$0xf]
    %v276 = vld [vmem:[#allocation5 + $0x344] sm:$0xf]
    %v277 = vld [vmem:[#allocation5 + $0x348] sm:$0xf]
    %v278 = vld [vmem:[#allocation5 + $0x34c] sm:$0xf]
    %v279 = vld [vmem:[#allocation5 + $0x350] sm:$0xf]
    %v280 = vld [vmem:[#allocation5 + $0x354] sm:$0xf]
    %v281 = vld [vmem:[#allocation5 + $0x358] sm:$0xf]
    %v282 = vld [vmem:[#allocation5 + $0x35c] sm:$0xf]
    %v283 = vld [vmem:[#allocation5 + $0x360] sm:$0xf]
    %v284 = vld [vmem:[#allocation5 + $0x364] sm:$0xf]
    %v285 = vld [vmem:[#allocation5 + $0x368] sm:$0xf]
    %v286 = vld [vmem:[#allocation5 + $0x36c] sm:$0xf]
    %v287 = vld [vmem:[#allocation5 + $0x370] sm:$0xf]
    %v288 = vld [vmem:[#allocation5 + $0x374] sm:$0xf]
    %v289 = vld [vmem:[#allocation5 + $0x378] sm:$0xf]
    %v290 = vld [vmem:[#allocation5 + $0x37c] sm:$0xf]
    %v291 = vld [vmem:[#allocation5 + $0x380] sm:$0xf]
    %v292 = vld [vmem:[#allocation5 + $0x384] sm:$0xf]
    %v293 = vld [vmem:[#allocation5 + $0x388] sm:$0xf]
    %v294 = vld [vmem:[#allocation5 + $0x38c] sm:$0xf]
    %v295 = vld [vmem:[#allocation5 + $0x390] sm:$0xf]
    %v296 = vld [vmem:[#allocation5 + $0x394] sm:$0xf]
    %v297 = vld [vmem:[#allocation5 + $0x398] sm:$0xf]
    %v298 = vld [vmem:[#allocation5 + $0x39c] sm:$0xf]
    %v299 = vld [vmem:[#allocation5 + $0x3a0] sm:$0xf]
    %v300 = vld [vmem:[#allocation5 + $0x3a4] sm:$0xf]
    %v301 = vld [vmem:[#allocation5 + $0x3a8] sm:$0xf]
    %v302 = vld [vmem:[#allocation5 + $0x3ac] sm:$0xf]
    %v303 = vld [vmem:[#allocation5 + $0x3b0] sm:$0xf]
    %v304 = vld [vmem:[#allocation5 + $0x3b4] sm:$0xf]
    %v305 = vld [vmem:[#allocation5 + $0x3b8] sm:$0xf]
    %v306 = vld [vmem:[#allocation5 + $0x3bc] sm:$0xf]
    %v307 = vld [vmem:[#allocation5 + $0x3c0] sm:$0xf]
    %v308 = vld [vmem:[#allocation5 + $0x3c4] sm:$0xf]
    %v309 = vld [vmem:[#allocation5 + $0x3c8] sm:$0xf]
    %v310 = vld [vmem:[#allocation5 + $0x3cc] sm:$0xf]
    %v311 = vld [vmem:[#allocation5 + $0x3d0] sm:$0xf]
    %v312 = vld [vmem:[#allocation5 + $0x3d4] sm:$0xf]
    %v313 = vld [vmem:[#allocation5 + $0x3d8] sm:$0xf]
    %v314 = vld [vmem:[#allocation5 + $0x3dc] sm:$0xf]
    %v315 = vld [vmem:[#allocation5 + $0x3e0] sm:$0xf]
    %v316 = vld [vmem:[#allocation5 + $0x3e4] sm:$0xf]
    %v317 = vld [vmem:[#allocation5 + $0x3e8] sm:$0xf]
    %v318 = vld [vmem:[#allocation5 + $0x3ec] sm:$0xf]
    %v319 = vld [vmem:[#allocation5 + $0x3f0] sm:$0xf]
    %v320 = vld [vmem:[#allocation5 + $0x3f4] sm:$0xf]
    %v321 = vld [vmem:[#allocation5 + $0x3f8] sm:$0xf]
    %v322 = vld [vmem:[#allocation5 + $0x3fc] sm:$0xf]
    %v323 = vld [vmem:[#allocation5 + $0x400] sm:$0xf]
    %v324 = vld [vmem:[#allocation5 + $0x404] sm:$0xf]
    %v325 = vld [vmem:[#allocation5 + $0x408] sm:$0xf]
    %v326 = vld [vmem:[#allocation5 + $0x40c] sm:$0xf]
    %v327 = vld [vmem:[#allocation5 + $0x410] sm:$0xf]
    %v328 = vld [vmem:[#allocation5 + $0x414] sm:$0xf]
    %v329 = vld [vmem:[#allocation5 + $0x418] sm:$0xf]
    %v330 = vld [vmem:[#allocation5 + $0x41c] sm:$0xf]
    %v331 = vld [vmem:[#allocation5 + $0x420] sm:$0xf]
    %v332 = vld [vmem:[#allocation5 + $0x424] sm:$0xf]
    %v333 = vld [vmem:[#allocation5 + $0x428] sm:$0xf]
    %v334 = vld [vmem:[#allocation5 + $0x42c] sm:$0xf]
    %v335 = vld [vmem:[#allocation5 + $0x430] sm:$0xf]
    %v336 = vld [vmem:[#allocation5 + $0x434] sm:$0xf]
    %v337 = vld [vmem:[#allocation5 + $0x438] sm:$0xf]
    %v338 = vld [vmem:[#allocation5 + $0x43c] sm:$0xf]
    %v339 = vld [vmem:[#allocation5 + $0x440] sm:$0xf]
    %v340 = vld [vmem:[#allocation5 + $0x444] sm:$0xf]
    %v341 = vld [vmem:[#allocation5 + $0x448] sm:$0xf]
    %v342 = vld [vmem:[#allocation5 + $0x44c] sm:$0xf]
    %v343 = vld [vmem:[#allocation5 + $0x450] sm:$0xf]
    %v344 = vld [vmem:[#allocation5 + $0x454] sm:$0xf]
    %v345 = vld [vmem:[#allocation5 + $0x458] sm:$0xf]
    %v346 = vld [vmem:[#allocation5 + $0x45c] sm:$0xf]
    %v347 = vld [vmem:[#allocation5 + $0x460] sm:$0xf]
    %v348 = vld [vmem:[#allocation5 + $0x464] sm:$0xf]
    %v349 = vld [vmem:[#allocation5 + $0x468] sm:$0xf]
    %v350 = vld [vmem:[#allocation5 + $0x46c] sm:$0xf]
    %v351 = vld [vmem:[#allocation5 + $0x470] sm:$0xf]
    %v352 = vld [vmem:[#allocation5 + $0x474] sm:$0xf]
    %v353 = vld [vmem:[#allocation5 + $0x478] sm:$0xf]
    %v354 = vld [vmem:[#allocation5 + $0x47c] sm:$0xf]
    %v355 = vld [vmem:[#allocation5 + $0x480] sm:$0xf]
    %v356 = vld [vmem:[#allocation5 + $0x484] sm:$0xf]
    %v357 = vld [vmem:[#allocation5 + $0x488] sm:$0xf]
    %v358 = vld [vmem:[#allocation5 + $0x48c] sm:$0xf]
    %v359 = vld [vmem:[#allocation5 + $0x490] sm:$0xf]
    %v360 = vld [vmem:[#allocation5 + $0x494] sm:$0xf]
    %v361 = vld [vmem:[#allocation5 + $0x498] sm:$0xf]
    %v362 = vld [vmem:[#allocation5 + $0x49c] sm:$0xf]
    %v363 = vld [vmem:[#allocation5 + $0x4a0] sm:$0xf]
    %v364 = vld [vmem:[#allocation5 + $0x4a4] sm:$0xf]
    %v365 = vld [vmem:[#allocation5 + $0x4a8] sm:$0xf]
    %v366 = vld [vmem:[#allocation5 + $0x4ac] sm:$0xf]
    %v367 = vld [vmem:[#allocation5 + $0x4b0] sm:$0xf]
    %v368 = vld [vmem:[#allocation5 + $0x4b4] sm:$0xf]
    %v369 = vld [vmem:[#allocation5 + $0x4b8] sm:$0xf]
    %v370 = vld [vmem:[#allocation5 + $0x4bc] sm:$0xf]
    %v371 = vld [vmem:[%s2] sm:$0x1]
    %v373 = vperm.slane %v371, 0
    %v385 = vunpack.c.l.b16 %v57
    %v386 = vunpack.c.h.b16 %v57
    %v387 = vunpack.c.l.b16 %v58
    %v388 = vunpack.c.h.b16 %v58
    %v389 = vunpack.c.l.b16 %v59
    %v390 = vunpack.c.h.b16 %v59
    %v391 = vunpack.c.l.b16 %v60
    %v392 = vunpack.c.h.b16 %v60
    %v393 = vunpack.c.l.b16 %v61
    %v394 = vunpack.c.h.b16 %v61
    %v395 = vunpack.c.l.b16 %v62
    %v396 = vunpack.c.h.b16 %v62
    %v397 = vunpack.c.l.b16 %v63
    %v398 = vunpack.c.h.b16 %v63
    %v399 = vunpack.c.l.b16 %v64
    %v400 = vunpack.c.h.b16 %v64
    %v401 = vunpack.c.l.b16 %v65
    %v402 = vunpack.c.h.b16 %v65
    %v403 = vunpack.c.l.b16 %v66
    %v404 = vpack.c.b16 %v385, %v385
    %v405 = vpack.c.b16 %v386, %v386
    %v406 = vpack.c.b16 %v387, %v387
    %v407 = vpack.c.b16 %v388, %v388
    %v408 = vpack.c.b16 %v389, %v389
    %v409 = vpack.c.b16 %v390, %v390
    %v410 = vpack.c.b16 %v391, %v391
    %v411 = vpack.c.b16 %v392, %v392
    %v412 = vpack.c.b16 %v393, %v393
    %v413 = vpack.c.b16 %v394, %v394
    %v414 = vpack.c.b16 %v395, %v395
    %v415 = vpack.c.b16 %v396, %v396
    %v416 = vpack.c.b16 %v397, %v397
    %v417 = vpack.c.b16 %v398, %v398
    %v418 = vpack.c.b16 %v399, %v399
    %v419 = vpack.c.b16 %v400, %v400
    %v420 = vpack.c.b16 %v401, %v401
    %v421 = vpack.c.b16 %v402, %v402
    %v422 = vpack.c.b16 %v403, %v403
    %v746 = vunpack.c.l.b16 %v67
    %v747 = vunpack.c.l.b16 %v68
    %v748 = vunpack.c.l.b16 %v69
    %v749 = vunpack.c.l.b16 %v70
    %v750 = vunpack.c.l.b16 %v71
    %v751 = vunpack.c.l.b16 %v72
    %v752 = vunpack.c.l.b16 %v73
    %v753 = vunpack.c.l.b16 %v74
    %v754 = vunpack.c.l.b16 %v75
    %v755 = vunpack.c.l.b16 %v76
    %v756 = vunpack.c.l.b16 %v77
    %v757 = vunpack.c.l.b16 %v78
    %v758 = vunpack.c.l.b16 %v79
    %v759 = vunpack.c.l.b16 %v80
    %v760 = vunpack.c.l.b16 %v81
    %v761 = vunpack.c.l.b16 %v82
    %v762 = vunpack.c.l.b16 %v83
    %v763 = vunpack.c.l.b16 %v84
    %v764 = vunpack.c.l.b16 %v85
    %v765 = vunpack.c.l.b16 %v86
    %v766 = vunpack.c.l.b16 %v87
    %v767 = vunpack.c.l.b16 %v88
    %v768 = vunpack.c.l.b16 %v89
    %v769 = vunpack.c.l.b16 %v90
    %v770 = vunpack.c.l.b16 %v91
    %v771 = vunpack.c.l.b16 %v92
    %v772 = vunpack.c.l.b16 %v93
    %v773 = vunpack.c.l.b16 %v94
    %v774 = vunpack.c.l.b16 %v95
    %v775 = vunpack.c.l.b16 %v96
    %v776 = vunpack.c.l.b16 %v97
    %v777 = vunpack.c.l.b16 %v98
    %v778 = vunpack.c.l.b16 %v99
    %v779 = vunpack.c.l.b16 %v100
    %v780 = vunpack.c.l.b16 %v101
    %v781 = vunpack.c.l.b16 %v102
    %v782 = vunpack.c.l.b16 %v103
    %v783 = vunpack.c.l.b16 %v104
    %v784 = vunpack.c.l.b16 %v105
    %v785 = vunpack.c.l.b16 %v106
    %v786 = vunpack.c.l.b16 %v107
    %v787 = vunpack.c.l.b16 %v108
    %v788 = vunpack.c.l.b16 %v109
    %v789 = vunpack.c.l.b16 %v110
    %v790 = vunpack.c.l.b16 %v111
    %v791 = vunpack.c.l.b16 %v112
    %v792 = vunpack.c.l.b16 %v113
    %v793 = vunpack.c.l.b16 %v114
    %v794 = vunpack.c.l.b16 %v115
    %v795 = vunpack.c.l.b16 %v116
    %v796 = vunpack.c.l.b16 %v117
    %v797 = vunpack.c.l.b16 %v118
    %v798 = vunpack.c.l.b16 %v119
    %v799 = vunpack.c.l.b16 %v120
    %v800 = vunpack.c.l.b16 %v121
    %v801 = vunpack.c.l.b16 %v122
    %v802 = vunpack.c.l.b16 %v123
    %v803 = vunpack.c.l.b16 %v124
    %v804 = vunpack.c.l.b16 %v125
    %v805 = vunpack.c.l.b16 %v126
    %v806 = vunpack.c.l.b16 %v127
    %v807 = vunpack.c.l.b16 %v128
    %v808 = vunpack.c.l.b16 %v129
    %v809 = vunpack.c.l.b16 %v130
    %v810 = vunpack.c.l.b16 %v131
    %v811 = vunpack.c.l.b16 %v132
    %v812 = vunpack.c.l.b16 %v133
    %v813 = vunpack.c.l.b16 %v134
    %v814 = vunpack.c.l.b16 %v135
    %v815 = vunpack.c.l.b16 %v136
    %v816 = vunpack.c.l.b16 %v137
    %v817 = vunpack.c.l.b16 %v138
    %v818 = vunpack.c.l.b16 %v139
    %v819 = vunpack.c.l.b16 %v140
    %v820 = vunpack.c.l.b16 %v141
    %v821 = vunpack.c.l.b16 %v142
    %v822 = vunpack.c.l.b16 %v143
    %v823 = vunpack.c.l.b16 %v144
    %v824 = vunpack.c.l.b16 %v145
    %v825 = vunpack.c.l.b16 %v146
    %v826 = vunpack.c.l.b16 %v147
    %v827 = vunpack.c.l.b16 %v148
    %v828 = vunpack.c.l.b16 %v149
    %v829 = vunpack.c.l.b16 %v150
    %v830 = vunpack.c.l.b16 %v151
    %v831 = vunpack.c.l.b16 %v152
    %v832 = vunpack.c.l.b16 %v153
    %v833 = vunpack.c.l.b16 %v154
    %v834 = vunpack.c.l.b16 %v155
    %v835 = vunpack.c.l.b16 %v156
    %v836 = vunpack.c.l.b16 %v157
    %v837 = vunpack.c.l.b16 %v158
    %v838 = vunpack.c.l.b16 %v159
    %v839 = vunpack.c.l.b16 %v160
    %v840 = vunpack.c.l.b16 %v161
    %v841 = vunpack.c.l.b16 %v162
    %v842 = vunpack.c.l.b16 %v163
    %v843 = vunpack.c.l.b16 %v164
    %v844 = vunpack.c.l.b16 %v165
    %v845 = vunpack.c.l.b16 %v166
    %v846 = vunpack.c.l.b16 %v167
    %v847 = vunpack.c.l.b16 %v168
    %v848 = vunpack.c.l.b16 %v169
    %v849 = vunpack.c.l.b16 %v170
    %v850 = vunpack.c.l.b16 %v171
    %v851 = vunpack.c.l.b16 %v172
    %v852 = vunpack.c.l.b16 %v173
    %v853 = vunpack.c.l.b16 %v174
    %v854 = vunpack.c.l.b16 %v175
    %v855 = vunpack.c.l.b16 %v176
    %v856 = vunpack.c.l.b16 %v177
    %v857 = vunpack.c.l.b16 %v178
    %v858 = vunpack.c.l.b16 %v179
    %v859 = vunpack.c.l.b16 %v180
    %v860 = vunpack.c.l.b16 %v181
    %v861 = vunpack.c.l.b16 %v182
    %v862 = vunpack.c.l.b16 %v183
    %v863 = vunpack.c.l.b16 %v184
    %v864 = vunpack.c.l.b16 %v185
    %v865 = vunpack.c.l.b16 %v186
    %v866 = vunpack.c.l.b16 %v187
    %v867 = vunpack.c.l.b16 %v188
    %v868 = vunpack.c.l.b16 %v189
    %v869 = vunpack.c.l.b16 %v190
    %v870 = vunpack.c.l.b16 %v191
    %v871 = vunpack.c.l.b16 %v192
    %v872 = vunpack.c.l.b16 %v193
    %v873 = vunpack.c.l.b16 %v194
    %v874 = vunpack.c.l.b16 %v195
    %v875 = vunpack.c.l.b16 %v196
    %v876 = vunpack.c.l.b16 %v197
    %v877 = vunpack.c.l.b16 %v198
    %v878 = vunpack.c.l.b16 %v199
    %v879 = vunpack.c.l.b16 %v200
    %v880 = vunpack.c.l.b16 %v201
    %v881 = vunpack.c.l.b16 %v202
    %v882 = vunpack.c.l.b16 %v203
    %v883 = vunpack.c.l.b16 %v204
    %v884 = vunpack.c.l.b16 %v205
    %v885 = vunpack.c.l.b16 %v206
    %v886 = vunpack.c.l.b16 %v207
    %v887 = vunpack.c.l.b16 %v208
    %v888 = vunpack.c.l.b16 %v209
    %v889 = vunpack.c.l.b16 %v210
    %v890 = vunpack.c.l.b16 %v211
    %v891 = vunpack.c.l.b16 %v212
    %v892 = vunpack.c.l.b16 %v213
    %v893 = vunpack.c.l.b16 %v214
    %v894 = vunpack.c.l.b16 %v215
    %v895 = vunpack.c.l.b16 %v216
    %v896 = vunpack.c.l.b16 %v217
    %v897 = vunpack.c.l.b16 %v218
    %v898 = vunpack.c.l.b16 %v219
    %v899 = vunpack.c.l.b16 %v220
    %v900 = vunpack.c.l.b16 %v221
    %v901 = vunpack.c.l.b16 %v222
    %v902 = vunpack.c.l.b16 %v223
    %v903 = vunpack.c.l.b16 %v224
    %v904 = vunpack.c.l.b16 %v225
    %v905 = vunpack.c.l.b16 %v226
    %v906 = vunpack.c.l.b16 %v227
    %v907 = vunpack.c.l.b16 %v228
    %v908 = vunpack.c.l.b16 %v229
    %v909 = vunpack.c.l.b16 %v230
    %v910 = vunpack.c.l.b16 %v231
    %v911 = vunpack.c.l.b16 %v232
    %v912 = vunpack.c.l.b16 %v233
    %v913 = vunpack.c.l.b16 %v234
    %v914 = vunpack.c.l.b16 %v235
    %v915 = vunpack.c.l.b16 %v236
    %v916 = vunpack.c.l.b16 %v237
    %v917 = vunpack.c.l.b16 %v238
    %v918 = vunpack.c.l.b16 %v239
    %v919 = vunpack.c.l.b16 %v240
    %v920 = vunpack.c.l.b16 %v241
    %v921 = vunpack.c.l.b16 %v242
    %v922 = vunpack.c.l.b16 %v243
    %v923 = vunpack.c.l.b16 %v244
    %v924 = vunpack.c.l.b16 %v245
    %v925 = vunpack.c.l.b16 %v246
    %v926 = vunpack.c.l.b16 %v247
    %v927 = vunpack.c.l.b16 %v248
    %v928 = vunpack.c.l.b16 %v249
    %v929 = vunpack.c.l.b16 %v250
    %v930 = vunpack.c.l.b16 %v251
    %v931 = vunpack.c.l.b16 %v252
    %v932 = vunpack.c.l.b16 %v253
    %v933 = vunpack.c.l.b16 %v254
    %v934 = vunpack.c.l.b16 %v255
    %v935 = vunpack.c.l.b16 %v256
    %v936 = vunpack.c.l.b16 %v257
    %v937 = vunpack.c.l.b16 %v258
    %v938 = vunpack.c.l.b16 %v259
    %v939 = vunpack.c.l.b16 %v260
    %v940 = vunpack.c.l.b16 %v261
    %v941 = vunpack.c.l.b16 %v262
    %v942 = vunpack.c.l.b16 %v263
    %v943 = vunpack.c.l.b16 %v264
    %v944 = vunpack.c.l.b16 %v265
    %v945 = vunpack.c.l.b16 %v266
    %v946 = vunpack.c.l.b16 %v267
    %v947 = vunpack.c.l.b16 %v268
    %v948 = vunpack.c.l.b16 %v269
    %v949 = vunpack.c.l.b16 %v270
    %v950 = vunpack.c.l.b16 %v271
    %v951 = vunpack.c.l.b16 %v272
    %v952 = vunpack.c.l.b16 %v273
    %v953 = vunpack.c.l.b16 %v274
    %v954 = vunpack.c.l.b16 %v275
    %v955 = vunpack.c.l.b16 %v276
    %v956 = vunpack.c.l.b16 %v277
    %v957 = vunpack.c.l.b16 %v278
    %v958 = vunpack.c.l.b16 %v279
    %v959 = vunpack.c.l.b16 %v280
    %v960 = vunpack.c.l.b16 %v281
    %v961 = vunpack.c.l.b16 %v282
    %v962 = vunpack.c.l.b16 %v283
    %v963 = vunpack.c.l.b16 %v284
    %v964 = vunpack.c.l.b16 %v285
    %v965 = vunpack.c.l.b16 %v286
    %v966 = vunpack.c.l.b16 %v287
    %v967 = vunpack.c.l.b16 %v288
    %v968 = vunpack.c.l.b16 %v289
    %v969 = vunpack.c.l.b16 %v290
    %v970 = vunpack.c.l.b16 %v291
    %v971 = vunpack.c.l.b16 %v292
    %v972 = vunpack.c.l.b16 %v293
    %v973 = vunpack.c.l.b16 %v294
    %v974 = vunpack.c.l.b16 %v295
    %v975 = vunpack.c.l.b16 %v296
    %v976 = vunpack.c.l.b16 %v297
    %v977 = vunpack.c.l.b16 %v298
    %v978 = vunpack.c.l.b16 %v299
    %v979 = vunpack.c.l.b16 %v300
    %v980 = vunpack.c.l.b16 %v301
    %v981 = vunpack.c.l.b16 %v302
    %v982 = vunpack.c.l.b16 %v303
    %v983 = vunpack.c.l.b16 %v304
    %v984 = vunpack.c.l.b16 %v305
    %v985 = vunpack.c.l.b16 %v306
    %v986 = vunpack.c.l.b16 %v307
    %v987 = vunpack.c.l.b16 %v308
    %v988 = vunpack.c.l.b16 %v309
    %v989 = vunpack.c.l.b16 %v310
    %v990 = vunpack.c.l.b16 %v311
    %v991 = vunpack.c.l.b16 %v312
    %v992 = vunpack.c.l.b16 %v313
    %v993 = vunpack.c.l.b16 %v314
    %v994 = vunpack.c.l.b16 %v315
    %v995 = vunpack.c.l.b16 %v316
    %v996 = vunpack.c.l.b16 %v317
    %v997 = vunpack.c.l.b16 %v318
    %v998 = vunpack.c.l.b16 %v319
    %v999 = vunpack.c.l.b16 %v320
    %v1000 = vunpack.c.l.b16 %v321
    %v1001 = vunpack.c.l.b16 %v322
    %v1002 = vunpack.c.l.b16 %v323
    %v1003 = vunpack.c.l.b16 %v324
    %v1004 = vunpack.c.l.b16 %v325
    %v1005 = vunpack.c.l.b16 %v326
    %v1006 = vunpack.c.l.b16 %v327
    %v1007 = vunpack.c.l.b16 %v328
    %v1008 = vunpack.c.l.b16 %v329
    %v1009 = vunpack.c.l.b16 %v330
    %v1010 = vunpack.c.l.b16 %v331
    %v1011 = vunpack.c.l.b16 %v332
    %v1012 = vunpack.c.l.b16 %v333
    %v1013 = vunpack.c.l.b16 %v334
    %v1014 = vunpack.c.l.b16 %v335
    %v1015 = vunpack.c.l.b16 %v336
    %v1016 = vunpack.c.l.b16 %v337
    %v1017 = vunpack.c.l.b16 %v338
    %v1018 = vunpack.c.l.b16 %v339
    %v1019 = vunpack.c.l.b16 %v340
    %v1020 = vunpack.c.l.b16 %v341
    %v1021 = vunpack.c.l.b16 %v342
    %v1022 = vunpack.c.l.b16 %v343
    %v1023 = vunpack.c.l.b16 %v344
    %v1024 = vunpack.c.l.b16 %v345
    %v1025 = vunpack.c.l.b16 %v346
    %v1026 = vunpack.c.l.b16 %v347
    %v1027 = vunpack.c.l.b16 %v348
    %v1028 = vunpack.c.l.b16 %v349
    %v1029 = vunpack.c.l.b16 %v350
    %v1030 = vunpack.c.l.b16 %v351
    %v1031 = vunpack.c.l.b16 %v352
    %v1032 = vunpack.c.l.b16 %v353
    %v1033 = vunpack.c.l.b16 %v354
    %v1034 = vunpack.c.l.b16 %v355
    %v1035 = vunpack.c.l.b16 %v356
    %v1036 = vunpack.c.l.b16 %v357
    %v1037 = vunpack.c.l.b16 %v358
    %v1038 = vunpack.c.l.b16 %v359
    %v1039 = vunpack.c.l.b16 %v360
    %v1040 = vunpack.c.l.b16 %v361
    %v1041 = vunpack.c.l.b16 %v362
    %v1042 = vunpack.c.l.b16 %v363
    %v1043 = vunpack.c.l.b16 %v364
    %v1044 = vunpack.c.l.b16 %v365
    %v1045 = vunpack.c.l.b16 %v366
    %v1046 = vunpack.c.l.b16 %v367
    %v1047 = vunpack.c.l.b16 %v368
    %v1048 = vunpack.c.l.b16 %v369
    %v1049 = vunpack.c.l.b16 %v370
    %v1050 = vpack.c.b16 %v747, %v746
    %v1051 = vpack.c.b16 %v749, %v748
    %v1052 = vpack.c.b16 %v751, %v750
    %v1053 = vpack.c.b16 %v753, %v752
    %v1054 = vpack.c.b16 %v755, %v754
    %v1055 = vpack.c.b16 %v757, %v756
    %v1056 = vpack.c.b16 %v759, %v758
    %v1057 = vpack.c.b16 %v761, %v760
    %v1058 = vpack.c.b16 %v763, %v762
    %v1059 = vpack.c.b16 %v765, %v764
    %v1060 = vpack.c.b16 %v767, %v766
    %v1061 = vpack.c.b16 %v769, %v768
    %v1062 = vpack.c.b16 %v771, %v770
    %v1063 = vpack.c.b16 %v773, %v772
    %v1064 = vpack.c.b16 %v775, %v774
    %v1065 = vpack.c.b16 %v777, %v776
    %v1066 = vpack.c.b16 %v779, %v778
    %v1067 = vpack.c.b16 %v781, %v780
    %v1068 = vpack.c.b16 %v783, %v782
    %v1069 = vpack.c.b16 %v785, %v784
    %v1070 = vpack.c.b16 %v787, %v786
    %v1071 = vpack.c.b16 %v789, %v788
    %v1072 = vpack.c.b16 %v791, %v790
    %v1073 = vpack.c.b16 %v793, %v792
    %v1074 = vpack.c.b16 %v795, %v794
    %v1075 = vpack.c.b16 %v797, %v796
    %v1076 = vpack.c.b16 %v799, %v798
    %v1077 = vpack.c.b16 %v801, %v800
    %v1078 = vpack.c.b16 %v803, %v802
    %v1079 = vpack.c.b16 %v805, %v804
    %v1080 = vpack.c.b16 %v807, %v806
    %v1081 = vpack.c.b16 %v809, %v808
    %v1082 = vpack.c.b16 %v811, %v810
    %v1083 = vpack.c.b16 %v813, %v812
    %v1084 = vpack.c.b16 %v815, %v814
    %v1085 = vpack.c.b16 %v817, %v816
    %v1086 = vpack.c.b16 %v819, %v818
    %v1087 = vpack.c.b16 %v821, %v820
    %v1088 = vpack.c.b16 %v823, %v822
    %v1089 = vpack.c.b16 %v825, %v824
    %v1090 = vpack.c.b16 %v827, %v826
    %v1091 = vpack.c.b16 %v829, %v828
    %v1092 = vpack.c.b16 %v831, %v830
    %v1093 = vpack.c.b16 %v833, %v832
    %v1094 = vpack.c.b16 %v835, %v834
    %v1095 = vpack.c.b16 %v837, %v836
    %v1096 = vpack.c.b16 %v839, %v838
    %v1097 = vpack.c.b16 %v841, %v840
    %v1098 = vpack.c.b16 %v843, %v842
    %v1099 = vpack.c.b16 %v845, %v844
    %v1100 = vpack.c.b16 %v847, %v846
    %v1101 = vpack.c.b16 %v849, %v848
    %v1102 = vpack.c.b16 %v851, %v850
    %v1103 = vpack.c.b16 %v853, %v852
    %v1104 = vpack.c.b16 %v855, %v854
    %v1105 = vpack.c.b16 %v857, %v856
    %v1106 = vpack.c.b16 %v859, %v858
    %v1107 = vpack.c.b16 %v861, %v860
    %v1108 = vpack.c.b16 %v863, %v862
    %v1109 = vpack.c.b16 %v865, %v864
    %v1110 = vpack.c.b16 %v867, %v866
    %v1111 = vpack.c.b16 %v869, %v868
    %v1112 = vpack.c.b16 %v871, %v870
    %v1113 = vpack.c.b16 %v873, %v872
    %v1114 = vpack.c.b16 %v875, %v874
    %v1115 = vpack.c.b16 %v877, %v876
    %v1116 = vpack.c.b16 %v879, %v878
    %v1117 = vpack.c.b16 %v881, %v880
    %v1118 = vpack.c.b16 %v883, %v882
    %v1119 = vpack.c.b16 %v885, %v884
    %v1120 = vpack.c.b16 %v887, %v886
    %v1121 = vpack.c.b16 %v889, %v888
    %v1122 = vpack.c.b16 %v891, %v890
    %v1123 = vpack.c.b16 %v893, %v892
    %v1124 = vpack.c.b16 %v895, %v894
    %v1125 = vpack.c.b16 %v897, %v896
    %v1126 = vpack.c.b16 %v899, %v898
    %v1127 = vpack.c.b16 %v901, %v900
    %v1128 = vpack.c.b16 %v903, %v902
    %v1129 = vpack.c.b16 %v905, %v904
    %v1130 = vpack.c.b16 %v907, %v906
    %v1131 = vpack.c.b16 %v909, %v908
    %v1132 = vpack.c.b16 %v911, %v910
    %v1133 = vpack.c.b16 %v913, %v912
    %v1134 = vpack.c.b16 %v915, %v914
    %v1135 = vpack.c.b16 %v917, %v916
    %v1136 = vpack.c.b16 %v919, %v918
    %v1137 = vpack.c.b16 %v921, %v920
    %v1138 = vpack.c.b16 %v923, %v922
    %v1139 = vpack.c.b16 %v925, %v924
    %v1140 = vpack.c.b16 %v927, %v926
    %v1141 = vpack.c.b16 %v929, %v928
    %v1142 = vpack.c.b16 %v931, %v930
    %v1143 = vpack.c.b16 %v933, %v932
    %v1144 = vpack.c.b16 %v935, %v934
    %v1145 = vpack.c.b16 %v937, %v936
    %v1146 = vpack.c.b16 %v939, %v938
    %v1147 = vpack.c.b16 %v941, %v940
    %v1148 = vpack.c.b16 %v943, %v942
    %v1149 = vpack.c.b16 %v945, %v944
    %v1150 = vpack.c.b16 %v947, %v946
    %v1151 = vpack.c.b16 %v949, %v948
    %v1152 = vpack.c.b16 %v951, %v950
    %v1153 = vpack.c.b16 %v953, %v952
    %v1154 = vpack.c.b16 %v955, %v954
    %v1155 = vpack.c.b16 %v957, %v956
    %v1156 = vpack.c.b16 %v959, %v958
    %v1157 = vpack.c.b16 %v961, %v960
    %v1158 = vpack.c.b16 %v963, %v962
    %v1159 = vpack.c.b16 %v965, %v964
    %v1160 = vpack.c.b16 %v967, %v966
    %v1161 = vpack.c.b16 %v969, %v968
    %v1162 = vpack.c.b16 %v971, %v970
    %v1163 = vpack.c.b16 %v973, %v972
    %v1164 = vpack.c.b16 %v975, %v974
    %v1165 = vpack.c.b16 %v977, %v976
    %v1166 = vpack.c.b16 %v979, %v978
    %v1167 = vpack.c.b16 %v981, %v980
    %v1168 = vpack.c.b16 %v983, %v982
    %v1169 = vpack.c.b16 %v985, %v984
    %v1170 = vpack.c.b16 %v987, %v986
    %v1171 = vpack.c.b16 %v989, %v988
    %v1172 = vpack.c.b16 %v991, %v990
    %v1173 = vpack.c.b16 %v993, %v992
    %v1174 = vpack.c.b16 %v995, %v994
    %v1175 = vpack.c.b16 %v997, %v996
    %v1176 = vpack.c.b16 %v999, %v998
    %v1177 = vpack.c.b16 %v1001, %v1000
    %v1178 = vpack.c.b16 %v1003, %v1002
    %v1179 = vpack.c.b16 %v1005, %v1004
    %v1180 = vpack.c.b16 %v1007, %v1006
    %v1181 = vpack.c.b16 %v1009, %v1008
    %v1182 = vpack.c.b16 %v1011, %v1010
    %v1183 = vpack.c.b16 %v1013, %v1012
    %v1184 = vpack.c.b16 %v1015, %v1014
    %v1185 = vpack.c.b16 %v1017, %v1016
    %v1186 = vpack.c.b16 %v1019, %v1018
    %v1187 = vpack.c.b16 %v1021, %v1020
    %v1188 = vpack.c.b16 %v1023, %v1022
    %v1189 = vpack.c.b16 %v1025, %v1024
    %v1190 = vpack.c.b16 %v1027, %v1026
    %v1191 = vpack.c.b16 %v1029, %v1028
    %v1192 = vpack.c.b16 %v1031, %v1030
    %v1193 = vpack.c.b16 %v1033, %v1032
    %v1194 = vpack.c.b16 %v1035, %v1034
    %v1195 = vpack.c.b16 %v1037, %v1036
    %v1196 = vpack.c.b16 %v1039, %v1038
    %v1197 = vpack.c.b16 %v1041, %v1040
    %v1198 = vpack.c.b16 %v1043, %v1042
    %v1199 = vpack.c.b16 %v1045, %v1044
    %v1200 = vpack.c.b16 %v1047, %v1046
    %v1201 = vpack.c.b16 %v1049, %v1048
    %1354 = vmatpush.bf16.msra.mxu0 %v1057
    %1355 = vmatpush.bf16.msra.mxu0 %v1056
    %1356 = vmatpush.bf16.msra.mxu0 %v1055
    %1357 = vmatpush.bf16.msra.mxu0 %v1054
    %1358 = vmatpush.bf16.msra.mxu0 %v1053
    %1359 = vmatpush.bf16.msra.mxu0 %v1052
    %1360 = vmatpush.bf16.msra.mxu0 %v1051
    %1361 = vmatpush.bf16.msra.mxu0 %v1050
    %1362 = vmatmul.bf16.gmra.mxu0 %v404
    %v1363 = vpop.f32.mrf.mxu0
    %v1364 = vadd.f32 %v373, %v1363
    %v1365 = vpop.f32.mrf.mxu0
    %1366 = vdwg.mxu0
    %1367 = vmatpush.bf16.msra.mxu0 %v1065
    %1368 = vmatpush.bf16.msra.mxu0 %v1064
    %1369 = vmatpush.bf16.msra.mxu0 %v1063
    %1370 = vmatpush.bf16.msra.mxu0 %v1062
    %1371 = vmatpush.bf16.msra.mxu0 %v1061
    %1372 = vmatpush.bf16.msra.mxu0 %v1060
    %1373 = vmatpush.bf16.msra.mxu0 %v1059
    %1374 = vmatpush.bf16.msra.mxu0 %v1058
    %1375 = vmatmul.bf16.gmra.mxu0 %v405
    %v1376 = vpop.f32.mrf.mxu0
    %v1377 = vadd.f32 %v1364, %v1376
    %v1378 = vpop.f32.mrf.mxu0
    %1379 = vdwg.mxu0
    %1380 = vmatpush.bf16.msra.mxu0 %v1073
    %1381 = vmatpush.bf16.msra.mxu0 %v1072
    %1382 = vmatpush.bf16.msra.mxu0 %v1071
    %1383 = vmatpush.bf16.msra.mxu0 %v1070
    %1384 = vmatpush.bf16.msra.mxu0 %v1069
    %1385 = vmatpush.bf16.msra.mxu0 %v1068
    %1386 = vmatpush.bf16.msra.mxu0 %v1067
    %1387 = vmatpush.bf16.msra.mxu0 %v1066
    %1388 = vmatmul.bf16.gmra.mxu0 %v406
    %v1389 = vpop.f32.mrf.mxu0
    %v1390 = vadd.f32 %v1377, %v1389
    %v1391 = vpop.f32.mrf.mxu0
    %1392 = vdwg.mxu0
    %1393 = vmatpush.bf16.msra.mxu0 %v1081
    %1394 = vmatpush.bf16.msra.mxu0 %v1080
    %1395 = vmatpush.bf16.msra.mxu0 %v1079
    %1396 = vmatpush.bf16.msra.mxu0 %v1078
    %1397 = vmatpush.bf16.msra.mxu0 %v1077
    %1398 = vmatpush.bf16.msra.mxu0 %v1076
    %1399 = vmatpush.bf16.msra.mxu0 %v1075
    %1400 = vmatpush.bf16.msra.mxu0 %v1074
    %1401 = vmatmul.bf16.gmra.mxu0 %v407
    %v1402 = vpop.f32.mrf.mxu0
    %v1403 = vadd.f32 %v1390, %v1402
    %v1404 = vpop.f32.mrf.mxu0
    %1405 = vdwg.mxu0
    %1406 = vmatpush.bf16.msra.mxu0 %v1089
    %1407 = vmatpush.bf16.msra.mxu0 %v1088
    %1408 = vmatpush.bf16.msra.mxu0 %v1087
    %1409 = vmatpush.bf16.msra.mxu0 %v1086
    %1410 = vmatpush.bf16.msra.mxu0 %v1085
    %1411 = vmatpush.bf16.msra.mxu0 %v1084
    %1412 = vmatpush.bf16.msra.mxu0 %v1083
    %1413 = vmatpush.bf16.msra.mxu0 %v1082
    %1414 = vmatmul.bf16.gmra.mxu0 %v408
    %v1415 = vpop.f32.mrf.mxu0
    %v1416 = vadd.f32 %v1403, %v1415
    %v1417 = vpop.f32.mrf.mxu0
    %1418 = vdwg.mxu0
    %1419 = vmatpush.bf16.msra.mxu0 %v1097
    %1420 = vmatpush.bf16.msra.mxu0 %v1096
    %1421 = vmatpush.bf16.msra.mxu0 %v1095
    %1422 = vmatpush.bf16.msra.mxu0 %v1094
    %1423 = vmatpush.bf16.msra.mxu0 %v1093
    %1424 = vmatpush.bf16.msra.mxu0 %v1092
    %1425 = vmatpush.bf16.msra.mxu0 %v1091
    %1426 = vmatpush.bf16.msra.mxu0 %v1090
    %1427 = vmatmul.bf16.gmra.mxu0 %v409
    %v1428 = vpop.f32.mrf.mxu0
    %v1429 = vadd.f32 %v1416, %v1428
    %v1430 = vpop.f32.mrf.mxu0
    %1431 = vdwg.mxu0
    %1432 = vmatpush.bf16.msra.mxu0 %v1105
    %1433 = vmatpush.bf16.msra.mxu0 %v1104
    %1434 = vmatpush.bf16.msra.mxu0 %v1103
    %1435 = vmatpush.bf16.msra.mxu0 %v1102
    %1436 = vmatpush.bf16.msra.mxu0 %v1101
    %1437 = vmatpush.bf16.msra.mxu0 %v1100
    %1438 = vmatpush.bf16.msra.mxu0 %v1099
    %1439 = vmatpush.bf16.msra.mxu0 %v1098
    %1440 = vmatmul.bf16.gmra.mxu0 %v410
    %v1441 = vpop.f32.mrf.mxu0
    %v1442 = vadd.f32 %v1429, %v1441
    %v1443 = vpop.f32.mrf.mxu0
    %1444 = vdwg.mxu0
    %1445 = vmatpush.bf16.msra.mxu0 %v1113
    %1446 = vmatpush.bf16.msra.mxu0 %v1112
    %1447 = vmatpush.bf16.msra.mxu0 %v1111
    %1448 = vmatpush.bf16.msra.mxu0 %v1110
    %1449 = vmatpush.bf16.msra.mxu0 %v1109
    %1450 = vmatpush.bf16.msra.mxu0 %v1108
    %1451 = vmatpush.bf16.msra.mxu0 %v1107
    %1452 = vmatpush.bf16.msra.mxu0 %v1106
    %1453 = vmatmul.bf16.gmra.mxu0 %v411
    %v1454 = vpop.f32.mrf.mxu0
    %v1455 = vadd.f32 %v1442, %v1454
    %v1456 = vpop.f32.mrf.mxu0
    %1457 = vdwg.mxu0
    %1458 = vmatpush.bf16.msra.mxu0 %v1121
    %1459 = vmatpush.bf16.msra.mxu0 %v1120
    %1460 = vmatpush.bf16.msra.mxu0 %v1119
    %1461 = vmatpush.bf16.msra.mxu0 %v1118
    %1462 = vmatpush.bf16.msra.mxu0 %v1117
    %1463 = vmatpush.bf16.msra.mxu0 %v1116
    %1464 = vmatpush.bf16.msra.mxu0 %v1115
    %1465 = vmatpush.bf16.msra.mxu0 %v1114
    %1466 = vmatmul.bf16.gmra.mxu0 %v412
    %v1467 = vpop.f32.mrf.mxu0
    %v1468 = vadd.f32 %v1455, %v1467
    %v1469 = vpop.f32.mrf.mxu0
    %1470 = vdwg.mxu0
    %1471 = vmatpush.bf16.msra.mxu0 %v1129
    %1472 = vmatpush.bf16.msra.mxu0 %v1128
    %1473 = vmatpush.bf16.msra.mxu0 %v1127
    %1474 = vmatpush.bf16.msra.mxu0 %v1126
    %1475 = vmatpush.bf16.msra.mxu0 %v1125
    %1476 = vmatpush.bf16.msra.mxu0 %v1124
    %1477 = vmatpush.bf16.msra.mxu0 %v1123
    %1478 = vmatpush.bf16.msra.mxu0 %v1122
    %1479 = vmatmul.bf16.gmra.mxu0 %v413
    %v1480 = vpop.f32.mrf.mxu0
    %v1481 = vadd.f32 %v1468, %v1480
    %v1482 = vpop.f32.mrf.mxu0
    %1483 = vdwg.mxu0
    %1484 = vmatpush.bf16.msra.mxu0 %v1137
    %1485 = vmatpush.bf16.msra.mxu0 %v1136
    %1486 = vmatpush.bf16.msra.mxu0 %v1135
    %1487 = vmatpush.bf16.msra.mxu0 %v1134
    %1488 = vmatpush.bf16.msra.mxu0 %v1133
    %1489 = vmatpush.bf16.msra.mxu0 %v1132
    %1490 = vmatpush.bf16.msra.mxu0 %v1131
    %1491 = vmatpush.bf16.msra.mxu0 %v1130
    %1492 = vmatmul.bf16.gmra.mxu0 %v414
    %v1493 = vpop.f32.mrf.mxu0
    %v1494 = vadd.f32 %v1481, %v1493
    %v1495 = vpop.f32.mrf.mxu0
    %1496 = vdwg.mxu0
    %1497 = vmatpush.bf16.msra.mxu0 %v1145
    %1498 = vmatpush.bf16.msra.mxu0 %v1144
    %1499 = vmatpush.bf16.msra.mxu0 %v1143
    %1500 = vmatpush.bf16.msra.mxu0 %v1142
    %1501 = vmatpush.bf16.msra.mxu0 %v1141
    %1502 = vmatpush.bf16.msra.mxu0 %v1140
    %1503 = vmatpush.bf16.msra.mxu0 %v1139
    %1504 = vmatpush.bf16.msra.mxu0 %v1138
    %1505 = vmatmul.bf16.gmra.mxu0 %v415
    %v1506 = vpop.f32.mrf.mxu0
    %v1507 = vadd.f32 %v1494, %v1506
    %v1508 = vpop.f32.mrf.mxu0
    %1509 = vdwg.mxu0
    %1510 = vmatpush.bf16.msra.mxu0 %v1153
    %1511 = vmatpush.bf16.msra.mxu0 %v1152
    %1512 = vmatpush.bf16.msra.mxu0 %v1151
    %1513 = vmatpush.bf16.msra.mxu0 %v1150
    %1514 = vmatpush.bf16.msra.mxu0 %v1149
    %1515 = vmatpush.bf16.msra.mxu0 %v1148
    %1516 = vmatpush.bf16.msra.mxu0 %v1147
    %1517 = vmatpush.bf16.msra.mxu0 %v1146
    %1518 = vmatmul.bf16.gmra.mxu0 %v416
    %v1519 = vpop.f32.mrf.mxu0
    %v1520 = vadd.f32 %v1507, %v1519
    %v1521 = vpop.f32.mrf.mxu0
    %1522 = vdwg.mxu0
    %1523 = vmatpush.bf16.msra.mxu0 %v1161
    %1524 = vmatpush.bf16.msra.mxu0 %v1160
    %1525 = vmatpush.bf16.msra.mxu0 %v1159
    %1526 = vmatpush.bf16.msra.mxu0 %v1158
    %1527 = vmatpush.bf16.msra.mxu0 %v1157
    %1528 = vmatpush.bf16.msra.mxu0 %v1156
    %1529 = vmatpush.bf16.msra.mxu0 %v1155
    %1530 = vmatpush.bf16.msra.mxu0 %v1154
    %1531 = vmatmul.bf16.gmra.mxu0 %v417
    %v1532 = vpop.f32.mrf.mxu0
    %v1533 = vadd.f32 %v1520, %v1532
    %v1534 = vpop.f32.mrf.mxu0
    %1535 = vdwg.mxu0
    %1536 = vmatpush.bf16.msra.mxu0 %v1169
    %1537 = vmatpush.bf16.msra.mxu0 %v1168
    %1538 = vmatpush.bf16.msra.mxu0 %v1167
    %1539 = vmatpush.bf16.msra.mxu0 %v1166
    %1540 = vmatpush.bf16.msra.mxu0 %v1165
    %1541 = vmatpush.bf16.msra.mxu0 %v1164
    %1542 = vmatpush.bf16.msra.mxu0 %v1163
    %1543 = vmatpush.bf16.msra.mxu0 %v1162
    %1544 = vmatmul.bf16.gmra.mxu0 %v418
    %v1545 = vpop.f32.mrf.mxu0
    %v1546 = vadd.f32 %v1533, %v1545
    %v1547 = vpop.f32.mrf.mxu0
    %1548 = vdwg.mxu0
    %1549 = vmatpush.bf16.msra.mxu0 %v1177
    %1550 = vmatpush.bf16.msra.mxu0 %v1176
    %1551 = vmatpush.bf16.msra.mxu0 %v1175
    %1552 = vmatpush.bf16.msra.mxu0 %v1174
    %1553 = vmatpush.bf16.msra.mxu0 %v1173
    %1554 = vmatpush.bf16.msra.mxu0 %v1172
    %1555 = vmatpush.bf16.msra.mxu0 %v1171
    %1556 = vmatpush.bf16.msra.mxu0 %v1170
    %1557 = vmatmul.bf16.gmra.mxu0 %v419
    %v1558 = vpop.f32.mrf.mxu0
    %v1559 = vadd.f32 %v1546, %v1558
    %v1560 = vpop.f32.mrf.mxu0
    %1561 = vdwg.mxu0
    %1562 = vmatpush.bf16.msra.mxu0 %v1185
    %1563 = vmatpush.bf16.msra.mxu0 %v1184
    %1564 = vmatpush.bf16.msra.mxu0 %v1183
    %1565 = vmatpush.bf16.msra.mxu0 %v1182
    %1566 = vmatpush.bf16.msra.mxu0 %v1181
    %1567 = vmatpush.bf16.msra.mxu0 %v1180
    %1568 = vmatpush.bf16.msra.mxu0 %v1179
    %1569 = vmatpush.bf16.msra.mxu0 %v1178
    %1570 = vmatmul.bf16.gmra.mxu0 %v420
    %v1571 = vpop.f32.mrf.mxu0
    %v1572 = vadd.f32 %v1559, %v1571
    %v1573 = vpop.f32.mrf.mxu0
    %1574 = vdwg.mxu0
    %1575 = vmatpush.bf16.msra.mxu0 %v1193
    %1576 = vmatpush.bf16.msra.mxu0 %v1192
    %1577 = vmatpush.bf16.msra.mxu0 %v1191
    %1578 = vmatpush.bf16.msra.mxu0 %v1190
    %1579 = vmatpush.bf16.msra.mxu0 %v1189
    %1580 = vmatpush.bf16.msra.mxu0 %v1188
    %1581 = vmatpush.bf16.msra.mxu0 %v1187
    %1582 = vmatpush.bf16.msra.mxu0 %v1186
    %1583 = vmatmul.bf16.gmra.mxu0 %v421
    %v1584 = vpop.f32.mrf.mxu0
    %v1585 = vadd.f32 %v1572, %v1584
    %v1586 = vpop.f32.mrf.mxu0
    %1587 = vdwg.mxu0
    %1588 = vmatpush.bf16.msra.mxu0 %v1201
    %1589 = vmatpush.bf16.msra.mxu0 %v1200
    %1590 = vmatpush.bf16.msra.mxu0 %v1199
    %1591 = vmatpush.bf16.msra.mxu0 %v1198
    %1592 = vmatpush.bf16.msra.mxu0 %v1197
    %1593 = vmatpush.bf16.msra.mxu0 %v1196
    %1594 = vmatpush.bf16.msra.mxu0 %v1195
    %1595 = vmatpush.bf16.msra.mxu0 %v1194
    %1596 = vmatmul.bf16.gmra.mxu0 %v422
    %v1597 = vpop.f32.mrf.mxu0
    %v1598 = vadd.f32 %v1585, %v1597
    %v1599 = vpop.f32.mrf.mxu0
    %1600 = vdwg.mxu0
    %v1601 = vmax.f32 %v1598, 0.0
    %v1602 = vpack.c.bf16 %v1601, %v1601
    %v1603 = vld [vmem:[%s3] sm:$0xf]
    %v1604 = vld [vmem:[%s3 + $0x4] sm:$0xf]
    %v1605 = vld [vmem:[%s3 + $0x8] sm:$0xf]
    %v1606 = vld [vmem:[%s3 + $0xc] sm:$0xf]
    %v1607 = vld [vmem:[%s3 + $0x10] sm:$0xf]
    %v1608 = vld [vmem:[%s3 + $0x14] sm:$0xf]
    %v1609 = vld [vmem:[%s3 + $0x18] sm:$0xf]
    %v1610 = vld [vmem:[%s3 + $0x1c] sm:$0xf]
    %v1611 = vld [vmem:[%s3 + $0x20] sm:$0xf]
    %v1612 = vld [vmem:[%s3 + $0x24] sm:$0xf]
    %v1613 = vld [vmem:[%s3 + $0x28] sm:$0xf]
    %v1614 = vld [vmem:[%s3 + $0x2c] sm:$0xf]
    %v1615 = vld [vmem:[%s3 + $0x30] sm:$0xf]
    %v1616 = vld [vmem:[%s3 + $0x34] sm:$0xf]
    %v1617 = vld [vmem:[%s3 + $0x38] sm:$0xf]
    %v1618 = vld [vmem:[%s3 + $0x3c] sm:$0xf]
    %v1619 = vld [vmem:[%s4] sm:$0x1]
    %v1621 = vperm.slane %v1619, 0
    %v1639 = vunpack.c.l.b16 %v1603
    %v1640 = vunpack.c.l.b16 %v1604
    %v1641 = vunpack.c.l.b16 %v1605
    %v1642 = vunpack.c.l.b16 %v1606
    %v1643 = vunpack.c.l.b16 %v1607
    %v1644 = vunpack.c.l.b16 %v1608
    %v1645 = vunpack.c.l.b16 %v1609
    %v1646 = vunpack.c.l.b16 %v1610
    %v1647 = vunpack.c.l.b16 %v1611
    %v1648 = vunpack.c.l.b16 %v1612
    %v1649 = vunpack.c.l.b16 %v1613
    %v1650 = vunpack.c.l.b16 %v1614
    %v1651 = vunpack.c.l.b16 %v1615
    %v1652 = vunpack.c.l.b16 %v1616
    %v1653 = vunpack.c.l.b16 %v1617
    %v1654 = vunpack.c.l.b16 %v1618
    %v1655 = vpack.c.b16 %v1640, %v1639
    %v1656 = vpack.c.b16 %v1642, %v1641
    %v1657 = vpack.c.b16 %v1644, %v1643
    %v1658 = vpack.c.b16 %v1646, %v1645
    %v1659 = vpack.c.b16 %v1648, %v1647
    %v1660 = vpack.c.b16 %v1650, %v1649
    %v1661 = vpack.c.b16 %v1652, %v1651
    %v1662 = vpack.c.b16 %v1654, %v1653
    %1671 = vmatpush.bf16.msra.mxu0 %v1662
    %1672 = vmatpush.bf16.msra.mxu0 %v1661
    %1673 = vmatpush.bf16.msra.mxu0 %v1660
    %1674 = vmatpush.bf16.msra.mxu0 %v1659
    %1675 = vmatpush.bf16.msra.mxu0 %v1658
    %1676 = vmatpush.bf16.msra.mxu0 %v1657
    %1677 = vmatpush.bf16.msra.mxu0 %v1656
    %1678 = vmatpush.bf16.msra.mxu0 %v1655
    %1679 = vmatmul.bf16.gmra.mxu0 %v1602
    %v1680 = vpop.f32.mrf.mxu0
    %v1681 = vadd.f32 %v1621, %v1680
    %v1682 = vpop.f32.mrf.mxu0
    %1683 = vdwg.mxu0
    %v1684 = vmax.f32 %v1681, 0.0
    %v1685 = vpack.c.bf16 %v1684, %v1684
    %v1686 = vld [vmem:[%s5] sm:$0xf]
    %v1687 = vld [vmem:[%s5 + $0x4] sm:$0xf]
    %v1688 = vld [vmem:[%s5 + $0x8] sm:$0xf]
    %v1689 = vld [vmem:[%s5 + $0xc] sm:$0xf]
    %v1690 = vld [vmem:[%s5 + $0x10] sm:$0xf]
    %v1691 = vld [vmem:[%s5 + $0x14] sm:$0xf]
    %v1692 = vld [vmem:[%s5 + $0x18] sm:$0xf]
    %v1693 = vld [vmem:[%s5 + $0x1c] sm:$0xf]
    %v1694 = vld [vmem:[%s5 + $0x20] sm:$0xf]
    %v1695 = vld [vmem:[%s5 + $0x24] sm:$0xf]
    %v1696 = vld [vmem:[%s5 + $0x28] sm:$0xf]
    %v1697 = vld [vmem:[%s5 + $0x2c] sm:$0xf]
    %v1698 = vld [vmem:[%s5 + $0x30] sm:$0xf]
    %v1699 = vld [vmem:[%s5 + $0x34] sm:$0xf]
    %v1700 = vld [vmem:[%s5 + $0x38] sm:$0xf]
    %v1701 = vld [vmem:[%s5 + $0x3c] sm:$0xf]
    %v1702 = vld [vmem:[%s6] sm:$0x1]
    %v1704 = vperm.slane %v1702, 0
    %v1722 = vunpack.c.l.b16 %v1686
    %v1723 = vunpack.c.l.b16 %v1687
    %v1724 = vunpack.c.l.b16 %v1688
    %v1725 = vunpack.c.l.b16 %v1689
    %v1726 = vunpack.c.l.b16 %v1690
    %v1727 = vunpack.c.l.b16 %v1691
    %v1728 = vunpack.c.l.b16 %v1692
    %v1729 = vunpack.c.l.b16 %v1693
    %v1730 = vunpack.c.l.b16 %v1694
    %v1731 = vunpack.c.l.b16 %v1695
    %v1732 = vunpack.c.l.b16 %v1696
    %v1733 = vunpack.c.l.b16 %v1697
    %v1734 = vunpack.c.l.b16 %v1698
    %v1735 = vunpack.c.l.b16 %v1699
    %v1736 = vunpack.c.l.b16 %v1700
    %v1737 = vunpack.c.l.b16 %v1701
    %v1738 = vpack.c.b16 %v1723, %v1722
    %v1739 = vpack.c.b16 %v1725, %v1724
    %v1740 = vpack.c.b16 %v1727, %v1726
    %v1741 = vpack.c.b16 %v1729, %v1728
    %v1742 = vpack.c.b16 %v1731, %v1730
    %v1743 = vpack.c.b16 %v1733, %v1732
    %v1744 = vpack.c.b16 %v1735, %v1734
    %v1745 = vpack.c.b16 %v1737, %v1736
    %1754 = vmatpush.bf16.msra.mxu0 %v1745
    %1755 = vmatpush.bf16.msra.mxu0 %v1744
    %1756 = vmatpush.bf16.msra.mxu0 %v1743
    %1757 = vmatpush.bf16.msra.mxu0 %v1742
    %1758 = vmatpush.bf16.msra.mxu0 %v1741
    %1759 = vmatpush.bf16.msra.mxu0 %v1740
    %1760 = vmatpush.bf16.msra.mxu0 %v1739
    %1761 = vmatpush.bf16.msra.mxu0 %v1738
    %1762 = vmatmul.bf16.gmra.mxu0 %v1685
    %v1763 = vpop.f32.mrf.mxu0
    %v1764 = vadd.f32 %v1704, %v1763
    %v1765 = vpop.f32.mrf.mxu0
    %1766 = vdwg.mxu0
    %vm1767 = vcmask 80896
    %v1768 = vsel %vm1767, %v1764, -inf
    %1769 = vmax.xlane.f32.xlu0 %v1768
    %v1770 = vpop.xlane.xlu0 %1769
    %v1771 = vsub.f32 %v1764, %v1770
    %v1772 = vmul.f32 %v1771, 1.442695
    %v1773 = vpow.pop %v1772
    %v1774 = vsel %vm1767, %v1773, 0.0
    %1775 = vadd.xlane.f32.xlu0 %v1774
    %v1776 = vpop.xlane.xlu0 %1775
    %v1777 = vrcp.pop %v1776
    %v1778 = vmul.f32 %v1776, %v1777
    %v1779 = vsub.f32 1.0, %v1778
    %v1780 = vmul.f32 %v1777, %v1779
    %v1781 = vadd.f32 %v1777, %v1780
    %vm1782 = vweird.f32 %v1776
    %vm1783 = vweird.f32 %v1777
    %vm1784 = vmor %vm1782, %vm1783
    %v1785 = vsel %vm1784, %v1777, %v1781
    %v1786 = vand.u32 2147483647, %v1776
    %vm1787 = vcmp.eq.f32.partialorder %v1786, 8.507059e+37
    %v1788 = vand.u32 %v1776, 2147483648
    %v1789 = vor.u32 1.1754944e-38, %v1788
    %v1790 = vsel %vm1787, %v1789, %v1785
    %v1791 = vmul.f32 %v1773, %v1790
    %1792 = vst.msk [vmem:[#allocation7] sm:$0xff] %vm1767, %v1791
    // Predicated region
    $region38: #{tpu_custom_call.1} parent=1 // pred_check
      _
    $region39: #{tpu_custom_call.1} parent=1 // pred_check_branch
      %1794 = sbr.rel (0) target = $region41
    $region40: #{tpu_custom_call.1} parent=1 // pred_region
      %1796 = vsyncadd [#allocation4], 0
      %s1798 = sshll.u32 [#allocation7], 4
      %s1799 = int_to_ptr.vmem [resolvable:$true] %s1798
      %s1800 = sshll.u32 %s7, 4
      %s1801 = int_to_ptr.hbm [resolvable:$true] %s1800
      %1803 = dma.vmem_to_hbm [thread:$0]  %s1799, 128, %s1801, [#allocation4]
    $region41: #{tpu_custom_call.1} parent=1 // pred_fallthru
      _
    // Predicated region
    $region42: #{tpu_custom_call.1} parent=1 // pred_check
      _
    $region43: #{tpu_custom_call.1} parent=1 // pred_check_branch
      %1805 = sbr.rel (0) target = $region45
    $region44: #{tpu_custom_call.1} parent=1 // pred_region
      %1807 = dma.done [#allocation4], 128
    $region45: #{tpu_custom_call.1} parent=1 // pred_fallthru
      _
    %1808 = vsyncpa [#allocation3], 1
    %1809 = vsyncpa [#allocation6], 1
    %1810 = vsyncpa [#allocation4], 1

// kernel: tpu_custom_call.1
$region0: #{tpu_custom_call.1}
  #allocation0 [shape = 'u32[]', space=smem, size = 0x4, offset = 0x4, fixed_abs, tag = 'smem constant byte address 0x4 - core index']
  #allocation1 [shape = 'u32[72,128]{1,0:T(1,128)}', space=vmem, size = 0x9000, scoped, tag = 'internal scratch']
  %s0 = inlined_call_operand.hbm [shape: bf16[8,2432], index: 0, kind: input, shape index: {}]
  %s1 = inlined_call_operand.hbm [shape: bf16[2432,128], index: 1, kind: input, shape index: {}]
  %s2 = inlined_call_operand.vmem [shape: f32[1,128], index: 2, kind: input, shape index: {}]
  %s3 = inlined_call_operand.vmem [shape: bf16[128,128], index: 3, kind: input, shape index: {}]
  %s4 = inlined_call_operand.vmem [shape: f32[1,128], index: 4, kind: input, shape index: {}]
  %s5 = inlined_call_operand.vmem [shape: bf16[128,10], index: 5, kind: input, shape index: {}]
  %s6 = inlined_call_operand.vmem [shape: f32[1,10], index: 6, kind: input, shape index: {}]
  %s7 = inlined_call_operand.hbm [shape: f32[8,10], index: 7, kind: output, shape index: {}]
  %s8 = sld [smem:[#allocation0]]
  $region46: #{tpu_custom_call.1} parent=0
    _
  %s10 = ssub.s32 1, %s8
  %s11 = scalar_select 0, %s10, %s8
  $region1: #{tpu_custom_call.1} parent=0
    #allocation2 [shape = 'u8[38912]{0}', space=vmem, size = 0x9800, scoped, tag = 'input window, operand 0, single buffered']
    #allocation3 [shape = 's32[1]{0}', space=sflag, size = 0x4, scoped, tag = 'scoped memory for tpu_custom_call.1']
    #allocation4 [shape = 's32[1]{0}', space=sflag, size = 0x4, scoped, tag = 'scoped memory for tpu_custom_call.1']
    #allocation5 [shape = 'u8[622592]{0}', space=vmem, size = 0x98000, scoped, tag = 'input window, operand 1, single buffered']
    #allocation6 [shape = 's32[1]{0}', space=sflag, size = 0x4, scoped, tag = 'scoped memory for tpu_custom_call.1']
    #allocation7 [shape = 'u8[4096]{0}', space=vmem, size = 0x1000, scoped, tag = 'output window, operand 0, single buffered']
    %12 = vsyncpa [#allocation3], 0
    %13 = vsyncpa [#allocation6], 0
    %14 = vsyncpa [#allocation4], 0
    // Predicated region
    $region2: #{tpu_custom_call.1} parent=1 // pred_check
      _
    $region3: #{tpu_custom_call.1} parent=1 // pred_check_branch
      %16 = sbr.rel (0) target = $region5
    $region4: #{tpu_custom_call.1} parent=1 // pred_region
      %18 = vsyncadd [#allocation3], 0
      %s20 = sshll.u32 %s0, 4
      %s21 = int_to_ptr.hbm [resolvable:$true] %s20
      %s22 = sshll.u32 [#allocation2], 4
      %s23 = int_to_ptr.vmem [resolvable:$true] %s22
      %25 = dma.hbm_to_vmem [thread:$0]  %s21, 1216, %s23, [#allocation3]
    $region5: #{tpu_custom_call.1} parent=1 // pred_fallthru
      _
    // Predicated region
    $region6: #{tpu_custom_call.1} parent=1 // pred_check
      _
    $region7: #{tpu_custom_call.1} parent=1 // pred_check_branch
      %27 = sbr.rel (0) target = $region9
    $region8: #{tpu_custom_call.1} parent=1 // pred_region
      %29 = vsyncadd [#allocation6], 0
      %s30 = sshll.u32 %s1, 4
      %s31 = int_to_ptr.hbm [resolvable:$true] %s30
      %s32 = sshll.u32 [#allocation5], 4
      %s33 = int_to_ptr.vmem [resolvable:$true] %s32
      %38 = dma.hbm_to_vmem [thread:$0]  %s31, 19456, %s33, [#allocation6], 64, 64, 4
    $region9: #{tpu_custom_call.1} parent=1 // pred_fallthru
      _
    // Predicated region
    $region10: #{tpu_custom_call.1} parent=1 // pred_check
      _
    $region11: #{tpu_custom_call.1} parent=1 // pred_check_branch
      %40 = sbr.rel (0) target = $region13
    $region12: #{tpu_custom_call.1} parent=1 // pred_region
      _
    $region13: #{tpu_custom_call.1} parent=1 // pred_fallthru
      _
    // Predicated region
    $region14: #{tpu_custom_call.1} parent=1 // pred_check
      _
    $region15: #{tpu_custom_call.1} parent=1 // pred_check_branch
      %42 = sbr.rel (0) target = $region17
    $region16: #{tpu_custom_call.1} parent=1 // pred_region
      _
    $region17: #{tpu_custom_call.1} parent=1 // pred_fallthru
      _
    // Predicated region
    $region18: #{tpu_custom_call.1} parent=1 // pred_check
      _
    $region19: #{tpu_custom_call.1} parent=1 // pred_check_branch
      %44 = sbr.rel (0) target = $region21
    $region20: #{tpu_custom_call.1} parent=1 // pred_region
      _
    $region21: #{tpu_custom_call.1} parent=1 // pred_fallthru
      _
    // Predicated region
    $region22: #{tpu_custom_call.1} parent=1 // pred_check
      _
    $region23: #{tpu_custom_call.1} parent=1 // pred_check_branch
      %46 = sbr.rel (0) target = $region25
    $region24: #{tpu_custom_call.1} parent=1 // pred_region
      _
    $region25: #{tpu_custom_call.1} parent=1 // pred_fallthru
      _
    // Predicated region
    $region26: #{tpu_custom_call.1} parent=1 // pred_check
      _
    $region27: #{tpu_custom_call.1} parent=1 // pred_check_branch
      %48 = sbr.rel (0) target = $region29
    $region28: #{tpu_custom_call.1} parent=1 // pred_region
      _
    $region29: #{tpu_custom_call.1} parent=1 // pred_fallthru
      _
    // Predicated region
    $region30: #{tpu_custom_call.1} parent=1 // pred_check
      _
    $region31: #{tpu_custom_call.1} parent=1 // pred_check_branch
      %50 = sbr.rel (0) target = $region33
    $region32: #{tpu_custom_call.1} parent=1 // pred_region
      %52 = dma.done [#allocation3], 1216
    $region33: #{tpu_custom_call.1} parent=1 // pred_fallthru
      _
    // Predicated region
    $region34: #{tpu_custom_call.1} parent=1 // pred_check
      _
    $region35: #{tpu_custom_call.1} parent=1 // pred_check_branch
      %54 = sbr.rel (0) target = $region37
    $region36: #{tpu_custom_call.1} parent=1 // pred_region
      %56 = dma.done [#allocation6], 19456
    $region37: #{tpu_custom_call.1} parent=1 // pred_fallthru
      _
    %v57 = vld [vmem:[#allocation2] sm:$0xff]
    %v58 = vld [vmem:[#allocation2 + $0x8] sm:$0xff]
    %v59 = vld [vmem:[#allocation2 + $0x10] sm:$0xff]
    %v60 = vld [vmem:[#allocation2 + $0x18] sm:$0xff]
    %v61 = vld [vmem:[#allocation2 + $0x20] sm:$0xff]
    %v62 = vld [vmem:[#allocation2 + $0x28] sm:$0xff]
    %v63 = vld [vmem:[#allocation2 + $0x30] sm:$0xff]
    %v64 = vld [vmem:[#allocation2 + $0x38] sm:$0xff]
    %v65 = vld [vmem:[#allocation2 + $0x40] sm:$0xff]
    %v66 = vld [vmem:[#allocation2 + $0x48] sm:$0xf]
    %v67 = vld [vmem:[#allocation5] sm:$0xf]
    %v68 = vld [vmem:[#allocation5 + $0x4] sm:$0xf]
    %v69 = vld [vmem:[#allocation5 + $0x8] sm:$0xf]
    %v70 = vld [vmem:[#allocation5 + $0xc] sm:$0xf]
    %v71 = vld [vmem:[#allocation5 + $0x10] sm:$0xf]
    %v72 = vld [vmem:[#allocation5 + $0x14] sm:$0xf]
    %v73 = vld [vmem:[#allocation5 + $0x18] sm:$0xf]
    %v74 = vld [vmem:[#allocation5 + $0x1c] sm:$0xf]
    %v75 = vld [vmem:[#allocation5 + $0x20] sm:$0xf]
    %v76 = vld [vmem:[#allocation5 + $0x24] sm:$0xf]
    %v77 = vld [vmem:[#allocation5 + $0x28] sm:$0xf]
    %v78 = vld [vmem:[#allocation5 + $0x2c] sm:$0xf]
    %v79 = vld [vmem:[#allocation5 + $0x30] sm:$0xf]
    %v80 = vld [vmem:[#allocation5 + $0x34] sm:$0xf]
    %v81 = vld [vmem:[#allocation5 + $0x38] sm:$0xf]
    %v82 = vld [vmem:[#allocation5 + $0x3c] sm:$0xf]
    %v83 = vld [vmem:[#allocation5 + $0x40] sm:$0xf]
    %v84 = vld [vmem:[#allocation5 + $0x44] sm:$0xf]
    %v85 = vld [vmem:[#allocation5 + $0x48] sm:$0xf]
    %v86 = vld [vmem:[#allocation5 + $0x4c] sm:$0xf]
    %v87 = vld [vmem:[#allocation5 + $0x50] sm:$0xf]
    %v88 = vld [vmem:[#allocation5 + $0x54] sm:$0xf]
    %v89 = vld [vmem:[#allocation5 + $0x58] sm:$0xf]
    %v90 = vld [vmem:[#allocation5 + $0x5c] sm:$0xf]
    %v91 = vld [vmem:[#allocation5 + $0x60] sm:$0xf]
    %v92 = vld [vmem:[#allocation5 + $0x64] sm:$0xf]
    %v93 = vld [vmem:[#allocation5 + $0x68] sm:$0xf]
    %v94 = vld [vmem:[#allocation5 + $0x6c] sm:$0xf]
    %v95 = vld [vmem:[#allocation5 + $0x70] sm:$0xf]
    %v96 = vld [vmem:[#allocation5 + $0x74] sm:$0xf]
    %v97 = vld [vmem:[#allocation5 + $0x78] sm:$0xf]
    %v98 = vld [vmem:[#allocation5 + $0x7c] sm:$0xf]
    %v99 = vld [vmem:[#allocation5 + $0x80] sm:$0xf]
    %v100 = vld [vmem:[#allocation5 + $0x84] sm:$0xf]
    %v101 = vld [vmem:[#allocation5 + $0x88] sm:$0xf]
    %v102 = vld [vmem:[#allocation5 + $0x8c] sm:$0xf]
    %v103 = vld [vmem:[#allocation5 + $0x90] sm:$0xf]
    %v104 = vld [vmem:[#allocation5 + $0x94] sm:$0xf]
    %v105 = vld [vmem:[#allocation5 + $0x98] sm:$0xf]
    %v106 = vld [vmem:[#allocation5 + $0x9c] sm:$0xf]
    %v107 = vld [vmem:[#allocation5 + $0xa0] sm:$0xf]
    %v108 = vld [vmem:[#allocation5 + $0xa4] sm:$0xf]
    %v109 = vld [vmem:[#allocation5 + $0xa8] sm:$0xf]
    %v110 = vld [vmem:[#allocation5 + $0xac] sm:$0xf]
    %v111 = vld [vmem:[#allocation5 + $0xb0] sm:$0xf]
    %v112 = vld [vmem:[#allocation5 + $0xb4] sm:$0xf]
    %v113 = vld [vmem:[#allocation5 + $0xb8] sm:$0xf]
    %v114 = vld [vmem:[#allocation5 + $0xbc] sm:$0xf]
    %v115 = vld [vmem:[#allocation5 + $0xc0] sm:$0xf]
    %v116 = vld [vmem:[#allocation5 + $0xc4] sm:$0xf]
    %v117 = vld [vmem:[#allocation5 + $0xc8] sm:$0xf]
    %v118 = vld [vmem:[#allocation5 + $0xcc] sm:$0xf]
    %v119 = vld [vmem:[#allocation5 + $0xd0] sm:$0xf]
    %v120 = vld [vmem:[#allocation5 + $0xd4] sm:$0xf]
    %v121 = vld [vmem:[#allocation5 + $0xd8] sm:$0xf]
    %v122 = vld [vmem:[#allocation5 + $0xdc] sm:$0xf]
    %v123 = vld [vmem:[#allocation5 + $0xe0] sm:$0xf]
    %v124 = vld [vmem:[#allocation5 + $0xe4] sm:$0xf]
    %v125 = vld [vmem:[#allocation5 + $0xe8] sm:$0xf]
    %v126 = vld [vmem:[#allocation5 + $0xec] sm:$0xf]
    %v127 = vld [vmem:[#allocation5 + $0xf0] sm:$0xf]
    %v128 = vld [vmem:[#allocation5 + $0xf4] sm:$0xf]
    %v129 = vld [vmem:[#allocation5 + $0xf8] sm:$0xf]
    %v130 = vld [vmem:[#allocation5 + $0xfc] sm:$0xf]
    %v131 = vld [vmem:[#allocation5 + $0x100] sm:$0xf]
    %v132 = vld [vmem:[#allocation5 + $0x104] sm:$0xf]
    %v133 = vld [vmem:[#allocation5 + $0x108] sm:$0xf]
    %v134 = vld [vmem:[#allocation5 + $0x10c] sm:$0xf]
    %v135 = vld [vmem:[#allocation5 + $0x110] sm:$0xf]
    %v136 = vld [vmem:[#allocation5 + $0x114] sm:$0xf]
    %v137 = vld [vmem:[#allocation5 + $0x118] sm:$0xf]
    %v138 = vld [vmem:[#allocation5 + $0x11c] sm:$0xf]
    %v139 = vld [vmem:[#allocation5 + $0x120] sm:$0xf]
    %v140 = vld [vmem:[#allocation5 + $0x124] sm:$0xf]
    %v141 = vld [vmem:[#allocation5 + $0x128] sm:$0xf]
    %v142 = vld [vmem:[#allocation5 + $0x12c] sm:$0xf]
    %v143 = vld [vmem:[#allocation5 + $0x130] sm:$0xf]
    %v144 = vld [vmem:[#allocation5 + $0x134] sm:$0xf]
    %v145 = vld [vmem:[#allocation5 + $0x138] sm:$0xf]
    %v146 = vld [vmem:[#allocation5 + $0x13c] sm:$0xf]
    %v147 = vld [vmem:[#allocation5 + $0x140] sm:$0xf]
    %v148 = vld [vmem:[#allocation5 + $0x144] sm:$0xf]
    %v149 = vld [vmem:[#allocation5 + $0x148] sm:$0xf]
    %v150 = vld [vmem:[#allocation5 + $0x14c] sm:$0xf]
    %v151 = vld [vmem:[#allocation5 + $0x150] sm:$0xf]
    %v152 = vld [vmem:[#allocation5 + $0x154] sm:$0xf]
    %v153 = vld [vmem:[#allocation5 + $0x158] sm:$0xf]
    %v154 = vld [vmem:[#allocation5 + $0x15c] sm:$0xf]
    %v155 = vld [vmem:[#allocation5 + $0x160] sm:$0xf]
    %v156 = vld [vmem:[#allocation5 + $0x164] sm:$0xf]
    %v157 = vld [vmem:[#allocation5 + $0x168] sm:$0xf]
    %v158 = vld [vmem:[#allocation5 + $0x16c] sm:$0xf]
    %v159 = vld [vmem:[#allocation5 + $0x170] sm:$0xf]
    %v160 = vld [vmem:[#allocation5 + $0x174] sm:$0xf]
    %v161 = vld [vmem:[#allocation5 + $0x178] sm:$0xf]
    %v162 = vld [vmem:[#allocation5 + $0x17c] sm:$0xf]
    %v163 = vld [vmem:[#allocation5 + $0x180] sm:$0xf]
    %v164 = vld [vmem:[#allocation5 + $0x184] sm:$0xf]
    %v165 = vld [vmem:[#allocation5 + $0x188] sm:$0xf]
    %v166 = vld [vmem:[#allocation5 + $0x18c] sm:$0xf]
    %v167 = vld [vmem:[#allocation5 + $0x190] sm:$0xf]
    %v168 = vld [vmem:[#allocation5 + $0x194] sm:$0xf]
    %v169 = vld [vmem:[#allocation5 + $0x198] sm:$0xf]
    %v170 = vld [vmem:[#allocation5 + $0x19c] sm:$0xf]
    %v171 = vld [vmem:[#allocation5 + $0x1a0] sm:$0xf]
    %v172 = vld [vmem:[#allocation5 + $0x1a4] sm:$0xf]
    %v173 = vld [vmem:[#allocation5 + $0x1a8] sm:$0xf]
    %v174 = vld [vmem:[#allocation5 + $0x1ac] sm:$0xf]
    %v175 = vld [vmem:[#allocation5 + $0x1b0] sm:$0xf]
    %v176 = vld [vmem:[#allocation5 + $0x1b4] sm:$0xf]
    %v177 = vld [vmem:[#allocation5 + $0x1b8] sm:$0xf]
    %v178 = vld [vmem:[#allocation5 + $0x1bc] sm:$0xf]
    %v179 = vld [vmem:[#allocation5 + $0x1c0] sm:$0xf]
    %v180 = vld [vmem:[#allocation5 + $0x1c4] sm:$0xf]
    %v181 = vld [vmem:[#allocation5 + $0x1c8] sm:$0xf]
    %v182 = vld [vmem:[#allocation5 + $0x1cc] sm:$0xf]
    %v183 = vld [vmem:[#allocation5 + $0x1d0] sm:$0xf]
    %v184 = vld [vmem:[#allocation5 + $0x1d4] sm:$0xf]
    %v185 = vld [vmem:[#allocation5 + $0x1d8] sm:$0xf]
    %v186 = vld [vmem:[#allocation5 + $0x1dc] sm:$0xf]
    %v187 = vld [vmem:[#allocation5 + $0x1e0] sm:$0xf]
    %v188 = vld [vmem:[#allocation5 + $0x1e4] sm:$0xf]
    %v189 = vld [vmem:[#allocation5 + $0x1e8] sm:$0xf]
    %v190 = vld [vmem:[#allocation5 + $0x1ec] sm:$0xf]
    %v191 = vld [vmem:[#allocation5 + $0x1f0] sm:$0xf]
    %v192 = vld [vmem:[#allocation5 + $0x1f4] sm:$0xf]
    %v193 = vld [vmem:[#allocation5 + $0x1f8] sm:$0xf]
    %v194 = vld [vmem:[#allocation5 + $0x1fc] sm:$0xf]
    %v195 = vld [vmem:[#allocation5 + $0x200] sm:$0xf]
    %v196 = vld [vmem:[#allocation5 + $0x204] sm:$0xf]
    %v197 = vld [vmem:[#allocation5 + $0x208] sm:$0xf]
    %v198 = vld [vmem:[#allocation5 + $0x20c] sm:$0xf]
    %v199 = vld [vmem:[#allocation5 + $0x210] sm:$0xf]
    %v200 = vld [vmem:[#allocation5 + $0x214] sm:$0xf]
    %v201 = vld [vmem:[#allocation5 + $0x218] sm:$0xf]
    %v202 = vld [vmem:[#allocation5 + $0x21c] sm:$0xf]
    %v203 = vld [vmem:[#allocation5 + $0x220] sm:$0xf]
    %v204 = vld [vmem:[#allocation5 + $0x224] sm:$0xf]
    %v205 = vld [vmem:[#allocation5 + $0x228] sm:$0xf]
    %v206 = vld [vmem:[#allocation5 + $0x22c] sm:$0xf]
    %v207 = vld [vmem:[#allocation5 + $0x230] sm:$0xf]
    %v208 = vld [vmem:[#allocation5 + $0x234] sm:$0xf]
    %v209 = vld [vmem:[#allocation5 + $0x238] sm:$0xf]
    %v210 = vld [vmem:[#allocation5 + $0x23c] sm:$0xf]
    %v211 = vld [vmem:[#allocation5 + $0x240] sm:$0xf]
    %v212 = vld [vmem:[#allocation5 + $0x244] sm:$0xf]
    %v213 = vld [vmem:[#allocation5 + $0x248] sm:$0xf]
    %v214 = vld [vmem:[#allocation5 + $0x24c] sm:$0xf]
    %v215 = vld [vmem:[#allocation5 + $0x250] sm:$0xf]
    %v216 = vld [vmem:[#allocation5 + $0x254] sm:$0xf]
    %v217 = vld [vmem:[#allocation5 + $0x258] sm:$0xf]
    %v218 = vld [vmem:[#allocation5 + $0x25c] sm:$0xf]
    %v219 = vld [vmem:[#allocation5 + $0x260] sm:$0xf]
    %v220 = vld [vmem:[#allocation5 + $0x264] sm:$0xf]
    %v221 = vld [vmem:[#allocation5 + $0x268] sm:$0xf]
    %v222 = vld [vmem:[#allocation5 + $0x26c] sm:$0xf]
    %v223 = vld [vmem:[#allocation5 + $0x270] sm:$0xf]
    %v224 = vld [vmem:[#allocation5 + $0x274] sm:$0xf]
    %v225 = vld [vmem:[#allocation5 + $0x278] sm:$0xf]
    %v226 = vld [vmem:[#allocation5 + $0x27c] sm:$0xf]
    %v227 = vld [vmem:[#allocation5 + $0x280] sm:$0xf]
    %v228 = vld [vmem:[#allocation5 + $0x284] sm:$0xf]
    %v229 = vld [vmem:[#allocation5 + $0x288] sm:$0xf]
    %v230 = vld [vmem:[#allocation5 + $0x28c] sm:$0xf]
    %v231 = vld [vmem:[#allocation5 + $0x290] sm:$0xf]
    %v232 = vld [vmem:[#allocation5 + $0x294] sm:$0xf]
    %v233 = vld [vmem:[#allocation5 + $0x298] sm:$0xf]
    %v234 = vld [vmem:[#allocation5 + $0x29c] sm:$0xf]
    %v235 = vld [vmem:[#allocation5 + $0x2a0] sm:$0xf]
    %v236 = vld [vmem:[#allocation5 + $0x2a4] sm:$0xf]
    %v237 = vld [vmem:[#allocation5 + $0x2a8] sm:$0xf]
    %v238 = vld [vmem:[#allocation5 + $0x2ac] sm:$0xf]
    %v239 = vld [vmem:[#allocation5 + $0x2b0] sm:$0xf]
    %v240 = vld [vmem:[#allocation5 + $0x2b4] sm:$0xf]
    %v241 = vld [vmem:[#allocation5 + $0x2b8] sm:$0xf]
    %v242 = vld [vmem:[#allocation5 + $0x2bc] sm:$0xf]
    %v243 = vld [vmem:[#allocation5 + $0x2c0] sm:$0xf]
    %v244 = vld [vmem:[#allocation5 + $0x2c4] sm:$0xf]
    %v245 = vld [vmem:[#allocation5 + $0x2c8] sm:$0xf]
    %v246 = vld [vmem:[#allocation5 + $0x2cc] sm:$0xf]
    %v247 = vld [vmem:[#allocation5 + $0x2d0] sm:$0xf]
    %v248 = vld [vmem:[#allocation5 + $0x2d4] sm:$0xf]
    %v249 = vld [vmem:[#allocation5 + $0x2d8] sm:$0xf]
    %v250 = vld [vmem:[#allocation5 + $0x2dc] sm:$0xf]
    %v251 = vld [vmem:[#allocation5 + $0x2e0] sm:$0xf]
    %v252 = vld [vmem:[#allocation5 + $0x2e4] sm:$0xf]
    %v253 = vld [vmem:[#allocation5 + $0x2e8] sm:$0xf]
    %v254 = vld [vmem:[#allocation5 + $0x2ec] sm:$0xf]
    %v255 = vld [vmem:[#allocation5 + $0x2f0] sm:$0xf]
    %v256 = vld [vmem:[#allocation5 + $0x2f4] sm:$0xf]
    %v257 = vld [vmem:[#allocation5 + $0x2f8] sm:$0xf]
    %v258 = vld [vmem:[#allocation5 + $0x2fc] sm:$0xf]
    %v259 = vld [vmem:[#allocation5 + $0x300] sm:$0xf]
    %v260 = vld [vmem:[#allocation5 + $0x304] sm:$0xf]
    %v261 = vld [vmem:[#allocation5 + $0x308] sm:$0xf]
    %v262 = vld [vmem:[#allocation5 + $0x30c] sm:$0xf]
    %v263 = vld [vmem:[#allocation5 + $0x310] sm:$0xf]
    %v264 = vld [vmem:[#allocation5 + $0x314] sm:$0xf]
    %v265 = vld [vmem:[#allocation5 + $0x318] sm:$0xf]
    %v266 = vld [vmem:[#allocation5 + $0x31c] sm:$0xf]
    %v267 = vld [vmem:[#allocation5 + $0x320] sm:$0xf]
    %v268 = vld [vmem:[#allocation5 + $0x324] sm:$0xf]
    %v269 = vld [vmem:[#allocation5 + $0x328] sm:$0xf]
    %v270 = vld [vmem:[#allocation5 + $0x32c] sm:$0xf]
    %v271 = vld [vmem:[#allocation5 + $0x330] sm:$0xf]
    %v272 = vld [vmem:[#allocation5 + $0x334] sm:$0xf]
    %v273 = vld [vmem:[#allocation5 + $0x338] sm:$0xf]
    %v274 = vld [vmem:[#allocation5 + $0x33c] sm:$0xf]
    %v275 = vld [vmem:[#allocation5 + $0x340] sm:$0xf]
    %v276 = vld [vmem:[#allocation5 + $0x344] sm:$0xf]
    %v277 = vld [vmem:[#allocation5 + $0x348] sm:$0xf]
    %v278 = vld [vmem:[#allocation5 + $0x34c] sm:$0xf]
    %v279 = vld [vmem:[#allocation5 + $0x350] sm:$0xf]
    %v280 = vld [vmem:[#allocation5 + $0x354] sm:$0xf]
    %v281 = vld [vmem:[#allocation5 + $0x358] sm:$0xf]
    %v282 = vld [vmem:[#allocation5 + $0x35c] sm:$0xf]
    %v283 = vld [vmem:[#allocation5 + $0x360] sm:$0xf]
    %v284 = vld [vmem:[#allocation5 + $0x364] sm:$0xf]
    %v285 = vld [vmem:[#allocation5 + $0x368] sm:$0xf]
    %v286 = vld [vmem:[#allocation5 + $0x36c] sm:$0xf]
    %v287 = vld [vmem:[#allocation5 + $0x370] sm:$0xf]
    %v288 = vld [vmem:[#allocation5 + $0x374] sm:$0xf]
    %v289 = vld [vmem:[#allocation5 + $0x378] sm:$0xf]
    %v290 = vld [vmem:[#allocation5 + $0x37c] sm:$0xf]
    %v291 = vld [vmem:[#allocation5 + $0x380] sm:$0xf]
    %v292 = vld [vmem:[#allocation5 + $0x384] sm:$0xf]
    %v293 = vld [vmem:[#allocation5 + $0x388] sm:$0xf]
    %v294 = vld [vmem:[#allocation5 + $0x38c] sm:$0xf]
    %v295 = vld [vmem:[#allocation5 + $0x390] sm:$0xf]
    %v296 = vld [vmem:[#allocation5 + $0x394] sm:$0xf]
    %v297 = vld [vmem:[#allocation5 + $0x398] sm:$0xf]
    %v298 = vld [vmem:[#allocation5 + $0x39c] sm:$0xf]
    %v299 = vld [vmem:[#allocation5 + $0x3a0] sm:$0xf]
    %v300 = vld [vmem:[#allocation5 + $0x3a4] sm:$0xf]
    %v301 = vld [vmem:[#allocation5 + $0x3a8] sm:$0xf]
    %v302 = vld [vmem:[#allocation5 + $0x3ac] sm:$0xf]
    %v303 = vld [vmem:[#allocation5 + $0x3b0] sm:$0xf]
    %v304 = vld [vmem:[#allocation5 + $0x3b4] sm:$0xf]
    %v305 = vld [vmem:[#allocation5 + $0x3b8] sm:$0xf]
    %v306 = vld [vmem:[#allocation5 + $0x3bc] sm:$0xf]
    %v307 = vld [vmem:[#allocation5 + $0x3c0] sm:$0xf]
    %v308 = vld [vmem:[#allocation5 + $0x3c4] sm:$0xf]
    %v309 = vld [vmem:[#allocation5 + $0x3c8] sm:$0xf]
    %v310 = vld [vmem:[#allocation5 + $0x3cc] sm:$0xf]
    %v311 = vld [vmem:[#allocation5 + $0x3d0] sm:$0xf]
    %v312 = vld [vmem:[#allocation5 + $0x3d4] sm:$0xf]
    %v313 = vld [vmem:[#allocation5 + $0x3d8] sm:$0xf]
    %v314 = vld [vmem:[#allocation5 + $0x3dc] sm:$0xf]
    %v315 = vld [vmem:[#allocation5 + $0x3e0] sm:$0xf]
    %v316 = vld [vmem:[#allocation5 + $0x3e4] sm:$0xf]
    %v317 = vld [vmem:[#allocation5 + $0x3e8] sm:$0xf]
    %v318 = vld [vmem:[#allocation5 + $0x3ec] sm:$0xf]
    %v319 = vld [vmem:[#allocation5 + $0x3f0] sm:$0xf]
    %v320 = vld [vmem:[#allocation5 + $0x3f4] sm:$0xf]
    %v321 = vld [vmem:[#allocation5 + $0x3f8] sm:$0xf]
    %v322 = vld [vmem:[#allocation5 + $0x3fc] sm:$0xf]
    %v323 = vld [vmem:[#allocation5 + $0x400] sm:$0xf]
    %v324 = vld [vmem:[#allocation5 + $0x404] sm:$0xf]
    %v325 = vld [vmem:[#allocation5 + $0x408] sm:$0xf]
    %v326 = vld [vmem:[#allocation5 + $0x40c] sm:$0xf]
    %v327 = vld [vmem:[#allocation5 + $0x410] sm:$0xf]
    %v328 = vld [vmem:[#allocation5 + $0x414] sm:$0xf]
    %v329 = vld [vmem:[#allocation5 + $0x418] sm:$0xf]
    %v330 = vld [vmem:[#allocation5 + $0x41c] sm:$0xf]
    %v331 = vld [vmem:[#allocation5 + $0x420] sm:$0xf]
    %v332 = vld [vmem:[#allocation5 + $0x424] sm:$0xf]
    %v333 = vld [vmem:[#allocation5 + $0x428] sm:$0xf]
    %v334 = vld [vmem:[#allocation5 + $0x42c] sm:$0xf]
    %v335 = vld [vmem:[#allocation5 + $0x430] sm:$0xf]
    %v336 = vld [vmem:[#allocation5 + $0x434] sm:$0xf]
    %v337 = vld [vmem:[#allocation5 + $0x438] sm:$0xf]
    %v338 = vld [vmem:[#allocation5 + $0x43c] sm:$0xf]
    %v339 = vld [vmem:[#allocation5 + $0x440] sm:$0xf]
    %v340 = vld [vmem:[#allocation5 + $0x444] sm:$0xf]
    %v341 = vld [vmem:[#allocation5 + $0x448] sm:$0xf]
    %v342 = vld [vmem:[#allocation5 + $0x44c] sm:$0xf]
    %v343 = vld [vmem:[#allocation5 + $0x450] sm:$0xf]
    %v344 = vld [vmem:[#allocation5 + $0x454] sm:$0xf]
    %v345 = vld [vmem:[#allocation5 + $0x458] sm:$0xf]
    %v346 = vld [vmem:[#allocation5 + $0x45c] sm:$0xf]
    %v347 = vld [vmem:[#allocation5 + $0x460] sm:$0xf]
    %v348 = vld [vmem:[#allocation5 + $0x464] sm:$0xf]
    %v349 = vld [vmem:[#allocation5 + $0x468] sm:$0xf]
    %v350 = vld [vmem:[#allocation5 + $0x46c] sm:$0xf]
    %v351 = vld [vmem:[#allocation5 + $0x470] sm:$0xf]
    %v352 = vld [vmem:[#allocation5 + $0x474] sm:$0xf]
    %v353 = vld [vmem:[#allocation5 + $0x478] sm:$0xf]
    %v354 = vld [vmem:[#allocation5 + $0x47c] sm:$0xf]
    %v355 = vld [vmem:[#allocation5 + $0x480] sm:$0xf]
    %v356 = vld [vmem:[#allocation5 + $0x484] sm:$0xf]
    %v357 = vld [vmem:[#allocation5 + $0x488] sm:$0xf]
    %v358 = vld [vmem:[#allocation5 + $0x48c] sm:$0xf]
    %v359 = vld [vmem:[#allocation5 + $0x490] sm:$0xf]
    %v360 = vld [vmem:[#allocation5 + $0x494] sm:$0xf]
    %v361 = vld [vmem:[#allocation5 + $0x498] sm:$0xf]
    %v362 = vld [vmem:[#allocation5 + $0x49c] sm:$0xf]
    %v363 = vld [vmem:[#allocation5 + $0x4a0] sm:$0xf]
    %v364 = vld [vmem:[#allocation5 + $0x4a4] sm:$0xf]
    %v365 = vld [vmem:[#allocation5 + $0x4a8] sm:$0xf]
    %v366 = vld [vmem:[#allocation5 + $0x4ac] sm:$0xf]
    %v367 = vld [vmem:[#allocation5 + $0x4b0] sm:$0xf]
    %v368 = vld [vmem:[#allocation5 + $0x4b4] sm:$0xf]
    %v369 = vld [vmem:[#allocation5 + $0x4b8] sm:$0xf]
    %v370 = vld [vmem:[#allocation5 + $0x4bc] sm:$0xf]
    %v371 = vld [vmem:[%s2] sm:$0x1]
    %v373 = vperm.slane %v371, 0
    %v385 = vunpack.c.l.b16 %v57
    %v386 = vunpack.c.h.b16 %v57
    %v387 = vunpack.c.l.b16 %v58
    %v388 = vunpack.c.h.b16 %v58
    %v389 = vunpack.c.l.b16 %v59
    %v390 = vunpack.c.h.b16 %v59
    %v391 = vunpack.c.l.b16 %v60
    %v392 = vunpack.c.h.b16 %v60
    %v393 = vunpack.c.l.b16 %v61
    %v394 = vunpack.c.h.b16 %v61
    %v395 = vunpack.c.l.b16 %v62
    %v396 = vunpack.c.h.b16 %v62
    %v397 = vunpack.c.l.b16 %v63
    %v398 = vunpack.c.h.b16 %v63
    %v399 = vunpack.c.l.b16 %v64
    %v400 = vunpack.c.h.b16 %v64
    %v401 = vunpack.c.l.b16 %v65
    %v402 = vunpack.c.h.b16 %v65
    %v403 = vunpack.c.l.b16 %v66
    %v404 = vpack.c.b16 %v385, %v385
    %v405 = vpack.c.b16 %v386, %v386
    %v406 = vpack.c.b16 %v387, %v387
    %v407 = vpack.c.b16 %v388, %v388
    %v408 = vpack.c.b16 %v389, %v389
    %v409 = vpack.c.b16 %v390, %v390
    %v410 = vpack.c.b16 %v391, %v391
    %v411 = vpack.c.b16 %v392, %v392
    %v412 = vpack.c.b16 %v393, %v393
    %v413 = vpack.c.b16 %v394, %v394
    %v414 = vpack.c.b16 %v395, %v395
    %v415 = vpack.c.b16 %v396, %v396
    %v416 = vpack.c.b16 %v397, %v397
    %v417 = vpack.c.b16 %v398, %v398
    %v418 = vpack.c.b16 %v399, %v399
    %v419 = vpack.c.b16 %v400, %v400
    %v420 = vpack.c.b16 %v401, %v401
    %v421 = vpack.c.b16 %v402, %v402
    %v422 = vpack.c.b16 %v403, %v403
    %v746 = vunpack.c.l.b16 %v67
    %v747 = vunpack.c.l.b16 %v68
    %v748 = vunpack.c.l.b16 %v69
    %v749 = vunpack.c.l.b16 %v70
    %v750 = vunpack.c.l.b16 %v71
    %v751 = vunpack.c.l.b16 %v72
    %v752 = vunpack.c.l.b16 %v73
    %v753 = vunpack.c.l.b16 %v74
    %v754 = vunpack.c.l.b16 %v75
    %v755 = vunpack.c.l.b16 %v76
    %v756 = vunpack.c.l.b16 %v77
    %v757 = vunpack.c.l.b16 %v78
    %v758 = vunpack.c.l.b16 %v79
    %v759 = vunpack.c.l.b16 %v80
    %v760 = vunpack.c.l.b16 %v81
    %v761 = vunpack.c.l.b16 %v82
    %v762 = vunpack.c.l.b16 %v83
    %v763 = vunpack.c.l.b16 %v84
    %v764 = vunpack.c.l.b16 %v85
    %v765 = vunpack.c.l.b16 %v86
    %v766 = vunpack.c.l.b16 %v87
    %v767 = vunpack.c.l.b16 %v88
    %v768 = vunpack.c.l.b16 %v89
    %v769 = vunpack.c.l.b16 %v90
    %v770 = vunpack.c.l.b16 %v91
    %v771 = vunpack.c.l.b16 %v92
    %v772 = vunpack.c.l.b16 %v93
    %v773 = vunpack.c.l.b16 %v94
    %v774 = vunpack.c.l.b16 %v95
    %v775 = vunpack.c.l.b16 %v96
    %v776 = vunpack.c.l.b16 %v97
    %v777 = vunpack.c.l.b16 %v98
    %v778 = vunpack.c.l.b16 %v99
    %v779 = vunpack.c.l.b16 %v100
    %v780 = vunpack.c.l.b16 %v101
    %v781 = vunpack.c.l.b16 %v102
    %v782 = vunpack.c.l.b16 %v103
    %v783 = vunpack.c.l.b16 %v104
    %v784 = vunpack.c.l.b16 %v105
    %v785 = vunpack.c.l.b16 %v106
    %v786 = vunpack.c.l.b16 %v107
    %v787 = vunpack.c.l.b16 %v108
    %v788 = vunpack.c.l.b16 %v109
    %v789 = vunpack.c.l.b16 %v110
    %v790 = vunpack.c.l.b16 %v111
    %v791 = vunpack.c.l.b16 %v112
    %v792 = vunpack.c.l.b16 %v113
    %v793 = vunpack.c.l.b16 %v114
    %v794 = vunpack.c.l.b16 %v115
    %v795 = vunpack.c.l.b16 %v116
    %v796 = vunpack.c.l.b16 %v117
    %v797 = vunpack.c.l.b16 %v118
    %v798 = vunpack.c.l.b16 %v119
    %v799 = vunpack.c.l.b16 %v120
    %v800 = vunpack.c.l.b16 %v121
    %v801 = vunpack.c.l.b16 %v122
    %v802 = vunpack.c.l.b16 %v123
    %v803 = vunpack.c.l.b16 %v124
    %v804 = vunpack.c.l.b16 %v125
    %v805 = vunpack.c.l.b16 %v126
    %v806 = vunpack.c.l.b16 %v127
    %v807 = vunpack.c.l.b16 %v128
    %v808 = vunpack.c.l.b16 %v129
    %v809 = vunpack.c.l.b16 %v130
    %v810 = vunpack.c.l.b16 %v131
    %v811 = vunpack.c.l.b16 %v132
    %v812 = vunpack.c.l.b16 %v133
    %v813 = vunpack.c.l.b16 %v134
    %v814 = vunpack.c.l.b16 %v135
    %v815 = vunpack.c.l.b16 %v136
    %v816 = vunpack.c.l.b16 %v137
    %v817 = vunpack.c.l.b16 %v138
    %v818 = vunpack.c.l.b16 %v139
    %v819 = vunpack.c.l.b16 %v140
    %v820 = vunpack.c.l.b16 %v141
    %v821 = vunpack.c.l.b16 %v142
    %v822 = vunpack.c.l.b16 %v143
    %v823 = vunpack.c.l.b16 %v144
    %v824 = vunpack.c.l.b16 %v145
    %v825 = vunpack.c.l.b16 %v146
    %v826 = vunpack.c.l.b16 %v147
    %v827 = vunpack.c.l.b16 %v148
    %v828 = vunpack.c.l.b16 %v149
    %v829 = vunpack.c.l.b16 %v150
    %v830 = vunpack.c.l.b16 %v151
    %v831 = vunpack.c.l.b16 %v152
    %v832 = vunpack.c.l.b16 %v153
    %v833 = vunpack.c.l.b16 %v154
    %v834 = vunpack.c.l.b16 %v155
    %v835 = vunpack.c.l.b16 %v156
    %v836 = vunpack.c.l.b16 %v157
    %v837 = vunpack.c.l.b16 %v158
    %v838 = vunpack.c.l.b16 %v159
    %v839 = vunpack.c.l.b16 %v160
    %v840 = vunpack.c.l.b16 %v161
    %v841 = vunpack.c.l.b16 %v162
    %v842 = vunpack.c.l.b16 %v163
    %v843 = vunpack.c.l.b16 %v164
    %v844 = vunpack.c.l.b16 %v165
    %v845 = vunpack.c.l.b16 %v166
    %v846 = vunpack.c.l.b16 %v167
    %v847 = vunpack.c.l.b16 %v168
    %v848 = vunpack.c.l.b16 %v169
    %v849 = vunpack.c.l.b16 %v170
    %v850 = vunpack.c.l.b16 %v171
    %v851 = vunpack.c.l.b16 %v172
    %v852 = vunpack.c.l.b16 %v173
    %v853 = vunpack.c.l.b16 %v174
    %v854 = vunpack.c.l.b16 %v175
    %v855 = vunpack.c.l.b16 %v176
    %v856 = vunpack.c.l.b16 %v177
    %v857 = vunpack.c.l.b16 %v178
    %v858 = vunpack.c.l.b16 %v179
    %v859 = vunpack.c.l.b16 %v180
    %v860 = vunpack.c.l.b16 %v181
    %v861 = vunpack.c.l.b16 %v182
    %v862 = vunpack.c.l.b16 %v183
    %v863 = vunpack.c.l.b16 %v184
    %v864 = vunpack.c.l.b16 %v185
    %v865 = vunpack.c.l.b16 %v186
    %v866 = vunpack.c.l.b16 %v187
    %v867 = vunpack.c.l.b16 %v188
    %v868 = vunpack.c.l.b16 %v189
    %v869 = vunpack.c.l.b16 %v190
    %v870 = vunpack.c.l.b16 %v191
    %v871 = vunpack.c.l.b16 %v192
    %v872 = vunpack.c.l.b16 %v193
    %v873 = vunpack.c.l.b16 %v194
    %v874 = vunpack.c.l.b16 %v195
    %v875 = vunpack.c.l.b16 %v196
    %v876 = vunpack.c.l.b16 %v197
    %v877 = vunpack.c.l.b16 %v198
    %v878 = vunpack.c.l.b16 %v199
    %v879 = vunpack.c.l.b16 %v200
    %v880 = vunpack.c.l.b16 %v201
    %v881 = vunpack.c.l.b16 %v202
    %v882 = vunpack.c.l.b16 %v203
    %v883 = vunpack.c.l.b16 %v204
    %v884 = vunpack.c.l.b16 %v205
    %v885 = vunpack.c.l.b16 %v206
    %v886 = vunpack.c.l.b16 %v207
    %v887 = vunpack.c.l.b16 %v208
    %v888 = vunpack.c.l.b16 %v209
    %v889 = vunpack.c.l.b16 %v210
    %v890 = vunpack.c.l.b16 %v211
    %v891 = vunpack.c.l.b16 %v212
    %v892 = vunpack.c.l.b16 %v213
    %v893 = vunpack.c.l.b16 %v214
    %v894 = vunpack.c.l.b16 %v215
    %v895 = vunpack.c.l.b16 %v216
    %v896 = vunpack.c.l.b16 %v217
    %v897 = vunpack.c.l.b16 %v218
    %v898 = vunpack.c.l.b16 %v219
    %v899 = vunpack.c.l.b16 %v220
    %v900 = vunpack.c.l.b16 %v221
    %v901 = vunpack.c.l.b16 %v222
    %v902 = vunpack.c.l.b16 %v223
    %v903 = vunpack.c.l.b16 %v224
    %v904 = vunpack.c.l.b16 %v225
    %v905 = vunpack.c.l.b16 %v226
    %v906 = vunpack.c.l.b16 %v227
    %v907 = vunpack.c.l.b16 %v228
    %v908 = vunpack.c.l.b16 %v229
    %v909 = vunpack.c.l.b16 %v230
    %v910 = vunpack.c.l.b16 %v231
    %v911 = vunpack.c.l.b16 %v232
    %v912 = vunpack.c.l.b16 %v233
    %v913 = vunpack.c.l.b16 %v234
    %v914 = vunpack.c.l.b16 %v235
    %v915 = vunpack.c.l.b16 %v236
    %v916 = vunpack.c.l.b16 %v237
    %v917 = vunpack.c.l.b16 %v238
    %v918 = vunpack.c.l.b16 %v239
    %v919 = vunpack.c.l.b16 %v240
    %v920 = vunpack.c.l.b16 %v241
    %v921 = vunpack.c.l.b16 %v242
    %v922 = vunpack.c.l.b16 %v243
    %v923 = vunpack.c.l.b16 %v244
    %v924 = vunpack.c.l.b16 %v245
    %v925 = vunpack.c.l.b16 %v246
    %v926 = vunpack.c.l.b16 %v247
    %v927 = vunpack.c.l.b16 %v248
    %v928 = vunpack.c.l.b16 %v249
    %v929 = vunpack.c.l.b16 %v250
    %v930 = vunpack.c.l.b16 %v251
    %v931 = vunpack.c.l.b16 %v252
    %v932 = vunpack.c.l.b16 %v253
    %v933 = vunpack.c.l.b16 %v254
    %v934 = vunpack.c.l.b16 %v255
    %v935 = vunpack.c.l.b16 %v256
    %v936 = vunpack.c.l.b16 %v257
    %v937 = vunpack.c.l.b16 %v258
    %v938 = vunpack.c.l.b16 %v259
    %v939 = vunpack.c.l.b16 %v260
    %v940 = vunpack.c.l.b16 %v261
    %v941 = vunpack.c.l.b16 %v262
    %v942 = vunpack.c.l.b16 %v263
    %v943 = vunpack.c.l.b16 %v264
    %v944 = vunpack.c.l.b16 %v265
    %v945 = vunpack.c.l.b16 %v266
    %v946 = vunpack.c.l.b16 %v267
    %v947 = vunpack.c.l.b16 %v268
    %v948 = vunpack.c.l.b16 %v269
    %v949 = vunpack.c.l.b16 %v270
    %v950 = vunpack.c.l.b16 %v271
    %v951 = vunpack.c.l.b16 %v272
    %v952 = vunpack.c.l.b16 %v273
    %v953 = vunpack.c.l.b16 %v274
    %v954 = vunpack.c.l.b16 %v275
    %v955 = vunpack.c.l.b16 %v276
    %v956 = vunpack.c.l.b16 %v277
    %v957 = vunpack.c.l.b16 %v278
    %v958 = vunpack.c.l.b16 %v279
    %v959 = vunpack.c.l.b16 %v280
    %v960 = vunpack.c.l.b16 %v281
    %v961 = vunpack.c.l.b16 %v282
    %v962 = vunpack.c.l.b16 %v283
    %v963 = vunpack.c.l.b16 %v284
    %v964 = vunpack.c.l.b16 %v285
    %v965 = vunpack.c.l.b16 %v286
    %v966 = vunpack.c.l.b16 %v287
    %v967 = vunpack.c.l.b16 %v288
    %v968 = vunpack.c.l.b16 %v289
    %v969 = vunpack.c.l.b16 %v290
    %v970 = vunpack.c.l.b16 %v291
    %v971 = vunpack.c.l.b16 %v292
    %v972 = vunpack.c.l.b16 %v293
    %v973 = vunpack.c.l.b16 %v294
    %v974 = vunpack.c.l.b16 %v295
    %v975 = vunpack.c.l.b16 %v296
    %v976 = vunpack.c.l.b16 %v297
    %v977 = vunpack.c.l.b16 %v298
    %v978 = vunpack.c.l.b16 %v299
    %v979 = vunpack.c.l.b16 %v300
    %v980 = vunpack.c.l.b16 %v301
    %v981 = vunpack.c.l.b16 %v302
    %v982 = vunpack.c.l.b16 %v303
    %v983 = vunpack.c.l.b16 %v304
    %v984 = vunpack.c.l.b16 %v305
    %v985 = vunpack.c.l.b16 %v306
    %v986 = vunpack.c.l.b16 %v307
    %v987 = vunpack.c.l.b16 %v308
    %v988 = vunpack.c.l.b16 %v309
    %v989 = vunpack.c.l.b16 %v310
    %v990 = vunpack.c.l.b16 %v311
    %v991 = vunpack.c.l.b16 %v312
    %v992 = vunpack.c.l.b16 %v313
    %v993 = vunpack.c.l.b16 %v314
    %v994 = vunpack.c.l.b16 %v315
    %v995 = vunpack.c.l.b16 %v316
    %v996 = vunpack.c.l.b16 %v317
    %v997 = vunpack.c.l.b16 %v318
    %v998 = vunpack.c.l.b16 %v319
    %v999 = vunpack.c.l.b16 %v320
    %v1000 = vunpack.c.l.b16 %v321
    %v1001 = vunpack.c.l.b16 %v322
    %v1002 = vunpack.c.l.b16 %v323
    %v1003 = vunpack.c.l.b16 %v324
    %v1004 = vunpack.c.l.b16 %v325
    %v1005 = vunpack.c.l.b16 %v326
    %v1006 = vunpack.c.l.b16 %v327
    %v1007 = vunpack.c.l.b16 %v328
    %v1008 = vunpack.c.l.b16 %v329
    %v1009 = vunpack.c.l.b16 %v330
    %v1010 = vunpack.c.l.b16 %v331
    %v1011 = vunpack.c.l.b16 %v332
    %v1012 = vunpack.c.l.b16 %v333
    %v1013 = vunpack.c.l.b16 %v334
    %v1014 = vunpack.c.l.b16 %v335
    %v1015 = vunpack.c.l.b16 %v336
    %v1016 = vunpack.c.l.b16 %v337
    %v1017 = vunpack.c.l.b16 %v338
    %v1018 = vunpack.c.l.b16 %v339
    %v1019 = vunpack.c.l.b16 %v340
    %v1020 = vunpack.c.l.b16 %v341
    %v1021 = vunpack.c.l.b16 %v342
    %v1022 = vunpack.c.l.b16 %v343
    %v1023 = vunpack.c.l.b16 %v344
    %v1024 = vunpack.c.l.b16 %v345
    %v1025 = vunpack.c.l.b16 %v346
    %v1026 = vunpack.c.l.b16 %v347
    %v1027 = vunpack.c.l.b16 %v348
    %v1028 = vunpack.c.l.b16 %v349
    %v1029 = vunpack.c.l.b16 %v350
    %v1030 = vunpack.c.l.b16 %v351
    %v1031 = vunpack.c.l.b16 %v352
    %v1032 = vunpack.c.l.b16 %v353
    %v1033 = vunpack.c.l.b16 %v354
    %v1034 = vunpack.c.l.b16 %v355
    %v1035 = vunpack.c.l.b16 %v356
    %v1036 = vunpack.c.l.b16 %v357
    %v1037 = vunpack.c.l.b16 %v358
    %v1038 = vunpack.c.l.b16 %v359
    %v1039 = vunpack.c.l.b16 %v360
    %v1040 = vunpack.c.l.b16 %v361
    %v1041 = vunpack.c.l.b16 %v362
    %v1042 = vunpack.c.l.b16 %v363
    %v1043 = vunpack.c.l.b16 %v364
    %v1044 = vunpack.c.l.b16 %v365
    %v1045 = vunpack.c.l.b16 %v366
    %v1046 = vunpack.c.l.b16 %v367
    %v1047 = vunpack.c.l.b16 %v368
    %v1048 = vunpack.c.l.b16 %v369
    %v1049 = vunpack.c.l.b16 %v370
    %v1050 = vpack.c.b16 %v747, %v746
    %v1051 = vpack.c.b16 %v749, %v748
    %v1052 = vpack.c.b16 %v751, %v750
    %v1053 = vpack.c.b16 %v753, %v752
    %v1054 = vpack.c.b16 %v755, %v754
    %v1055 = vpack.c.b16 %v757, %v756
    %v1056 = vpack.c.b16 %v759, %v758
    %v1057 = vpack.c.b16 %v761, %v760
    %v1058 = vpack.c.b16 %v763, %v762
    %v1059 = vpack.c.b16 %v765, %v764
    %v1060 = vpack.c.b16 %v767, %v766
    %v1061 = vpack.c.b16 %v769, %v768
    %v1062 = vpack.c.b16 %v771, %v770
    %v1063 = vpack.c.b16 %v773, %v772
    %v1064 = vpack.c.b16 %v775, %v774
    %v1065 = vpack.c.b16 %v777, %v776
    %v1066 = vpack.c.b16 %v779, %v778
    %v1067 = vpack.c.b16 %v781, %v780
    %v1068 = vpack.c.b16 %v783, %v782
    %v1069 = vpack.c.b16 %v785, %v784
    %v1070 = vpack.c.b16 %v787, %v786
    %v1071 = vpack.c.b16 %v789, %v788
    %v1072 = vpack.c.b16 %v791, %v790
    %v1073 = vpack.c.b16 %v793, %v792
    %v1074 = vpack.c.b16 %v795, %v794
    %v1075 = vpack.c.b16 %v797, %v796
    %v1076 = vpack.c.b16 %v799, %v798
    %v1077 = vpack.c.b16 %v801, %v800
    %v1078 = vpack.c.b16 %v803, %v802
    %v1079 = vpack.c.b16 %v805, %v804
    %v1080 = vpack.c.b16 %v807, %v806
    %v1081 = vpack.c.b16 %v809, %v808
    %v1082 = vpack.c.b16 %v811, %v810
    %v1083 = vpack.c.b16 %v813, %v812
    %v1084 = vpack.c.b16 %v815, %v814
    %v1085 = vpack.c.b16 %v817, %v816
    %v1086 = vpack.c.b16 %v819, %v818
    %v1087 = vpack.c.b16 %v821, %v820
    %v1088 = vpack.c.b16 %v823, %v822
    %v1089 = vpack.c.b16 %v825, %v824
    %v1090 = vpack.c.b16 %v827, %v826
    %v1091 = vpack.c.b16 %v829, %v828
    %v1092 = vpack.c.b16 %v831, %v830
    %v1093 = vpack.c.b16 %v833, %v832
    %v1094 = vpack.c.b16 %v835, %v834
    %v1095 = vpack.c.b16 %v837, %v836
    %v1096 = vpack.c.b16 %v839, %v838
    %v1097 = vpack.c.b16 %v841, %v840
    %v1098 = vpack.c.b16 %v843, %v842
    %v1099 = vpack.c.b16 %v845, %v844
    %v1100 = vpack.c.b16 %v847, %v846
    %v1101 = vpack.c.b16 %v849, %v848
    %v1102 = vpack.c.b16 %v851, %v850
    %v1103 = vpack.c.b16 %v853, %v852
    %v1104 = vpack.c.b16 %v855, %v854
    %v1105 = vpack.c.b16 %v857, %v856
    %v1106 = vpack.c.b16 %v859, %v858
    %v1107 = vpack.c.b16 %v861, %v860
    %v1108 = vpack.c.b16 %v863, %v862
    %v1109 = vpack.c.b16 %v865, %v864
    %v1110 = vpack.c.b16 %v867, %v866
    %v1111 = vpack.c.b16 %v869, %v868
    %v1112 = vpack.c.b16 %v871, %v870
    %v1113 = vpack.c.b16 %v873, %v872
    %v1114 = vpack.c.b16 %v875, %v874
    %v1115 = vpack.c.b16 %v877, %v876
    %v1116 = vpack.c.b16 %v879, %v878
    %v1117 = vpack.c.b16 %v881, %v880
    %v1118 = vpack.c.b16 %v883, %v882
    %v1119 = vpack.c.b16 %v885, %v884
    %v1120 = vpack.c.b16 %v887, %v886
    %v1121 = vpack.c.b16 %v889, %v888
    %v1122 = vpack.c.b16 %v891, %v890
    %v1123 = vpack.c.b16 %v893, %v892
    %v1124 = vpack.c.b16 %v895, %v894
    %v1125 = vpack.c.b16 %v897, %v896
    %v1126 = vpack.c.b16 %v899, %v898
    %v1127 = vpack.c.b16 %v901, %v900
    %v1128 = vpack.c.b16 %v903, %v902
    %v1129 = vpack.c.b16 %v905, %v904
    %v1130 = vpack.c.b16 %v907, %v906
    %v1131 = vpack.c.b16 %v909, %v908
    %v1132 = vpack.c.b16 %v911, %v910
    %v1133 = vpack.c.b16 %v913, %v912
    %v1134 = vpack.c.b16 %v915, %v914
    %v1135 = vpack.c.b16 %v917, %v916
    %v1136 = vpack.c.b16 %v919, %v918
    %v1137 = vpack.c.b16 %v921, %v920
    %v1138 = vpack.c.b16 %v923, %v922
    %v1139 = vpack.c.b16 %v925, %v924
    %v1140 = vpack.c.b16 %v927, %v926
    %v1141 = vpack.c.b16 %v929, %v928
    %v1142 = vpack.c.b16 %v931, %v930
    %v1143 = vpack.c.b16 %v933, %v932
    %v1144 = vpack.c.b16 %v935, %v934
    %v1145 = vpack.c.b16 %v937, %v936
    %v1146 = vpack.c.b16 %v939, %v938
    %v1147 = vpack.c.b16 %v941, %v940
    %v1148 = vpack.c.b16 %v943, %v942
    %v1149 = vpack.c.b16 %v945, %v944
    %v1150 = vpack.c.b16 %v947, %v946
    %v1151 = vpack.c.b16 %v949, %v948
    %v1152 = vpack.c.b16 %v951, %v950
    %v1153 = vpack.c.b16 %v953, %v952
    %v1154 = vpack.c.b16 %v955, %v954
    %v1155 = vpack.c.b16 %v957, %v956
    %v1156 = vpack.c.b16 %v959, %v958
    %v1157 = vpack.c.b16 %v961, %v960
    %v1158 = vpack.c.b16 %v963, %v962
    %v1159 = vpack.c.b16 %v965, %v964
    %v1160 = vpack.c.b16 %v967, %v966
    %v1161 = vpack.c.b16 %v969, %v968
    %v1162 = vpack.c.b16 %v971, %v970
    %v1163 = vpack.c.b16 %v973, %v972
    %v1164 = vpack.c.b16 %v975, %v974
    %v1165 = vpack.c.b16 %v977, %v976
    %v1166 = vpack.c.b16 %v979, %v978
    %v1167 = vpack.c.b16 %v981, %v980
    %v1168 = vpack.c.b16 %v983, %v982
    %v1169 = vpack.c.b16 %v985, %v984
    %v1170 = vpack.c.b16 %v987, %v986
    %v1171 = vpack.c.b16 %v989, %v988
    %v1172 = vpack.c.b16 %v991, %v990
    %v1173 = vpack.c.b16 %v993, %v992
    %v1174 = vpack.c.b16 %v995, %v994
    %v1175 = vpack.c.b16 %v997, %v996
    %v1176 = vpack.c.b16 %v999, %v998
    %v1177 = vpack.c.b16 %v1001, %v1000
    %v1178 = vpack.c.b16 %v1003, %v1002
    %v1179 = vpack.c.b16 %v1005, %v1004
    %v1180 = vpack.c.b16 %v1007, %v1006
    %v1181 = vpack.c.b16 %v1009, %v1008
    %v1182 = vpack.c.b16 %v1011, %v1010
    %v1183 = vpack.c.b16 %v1013, %v1012
    %v1184 = vpack.c.b16 %v1015, %v1014
    %v1185 = vpack.c.b16 %v1017, %v1016
    %v1186 = vpack.c.b16 %v1019, %v1018
    %v1187 = vpack.c.b16 %v1021, %v1020
    %v1188 = vpack.c.b16 %v1023, %v1022
    %v1189 = vpack.c.b16 %v1025, %v1024
    %v1190 = vpack.c.b16 %v1027, %v1026
    %v1191 = vpack.c.b16 %v1029, %v1028
    %v1192 = vpack.c.b16 %v1031, %v1030
    %v1193 = vpack.c.b16 %v1033, %v1032
    %v1194 = vpack.c.b16 %v1035, %v1034
    %v1195 = vpack.c.b16 %v1037, %v1036
    %v1196 = vpack.c.b16 %v1039, %v1038
    %v1197 = vpack.c.b16 %v1041, %v1040
    %v1198 = vpack.c.b16 %v1043, %v1042
    %v1199 = vpack.c.b16 %v1045, %v1044
    %v1200 = vpack.c.b16 %v1047, %v1046
    %v1201 = vpack.c.b16 %v1049, %v1048
    %1354 = vmatpush.bf16.msra.mxu0 %v1057
    %1355 = vmatpush.bf16.msra.mxu0 %v1056
    %1356 = vmatpush.bf16.msra.mxu0 %v1055
    %1357 = vmatpush.bf16.msra.mxu0 %v1054
    %1358 = vmatpush.bf16.msra.mxu0 %v1053
    %1359 = vmatpush.bf16.msra.mxu0 %v1052
    %1360 = vmatpush.bf16.msra.mxu0 %v1051
    %1361 = vmatpush.bf16.msra.mxu0 %v1050
    %1362 = vmatmul.bf16.gmra.mxu0 %v404
    %v1363 = vpop.f32.mrf.mxu0
    %v1364 = vadd.f32 %v373, %v1363
    %v1365 = vpop.f32.mrf.mxu0
    %1366 = vdwg.mxu0
    %1367 = vmatpush.bf16.msra.mxu0 %v1065
    %1368 = vmatpush.bf16.msra.mxu0 %v1064
    %1369 = vmatpush.bf16.msra.mxu0 %v1063
    %1370 = vmatpush.bf16.msra.mxu0 %v1062
    %1371 = vmatpush.bf16.msra.mxu0 %v1061
    %1372 = vmatpush.bf16.msra.mxu0 %v1060
    %1373 = vmatpush.bf16.msra.mxu0 %v1059
    %1374 = vmatpush.bf16.msra.mxu0 %v1058
    %1375 = vmatmul.bf16.gmra.mxu0 %v405
    %v1376 = vpop.f32.mrf.mxu0
    %v1377 = vadd.f32 %v1364, %v1376
    %v1378 = vpop.f32.mrf.mxu0
    %1379 = vdwg.mxu0
    %1380 = vmatpush.bf16.msra.mxu0 %v1073
    %1381 = vmatpush.bf16.msra.mxu0 %v1072
    %1382 = vmatpush.bf16.msra.mxu0 %v1071
    %1383 = vmatpush.bf16.msra.mxu0 %v1070
    %1384 = vmatpush.bf16.msra.mxu0 %v1069
    %1385 = vmatpush.bf16.msra.mxu0 %v1068
    %1386 = vmatpush.bf16.msra.mxu0 %v1067
    %1387 = vmatpush.bf16.msra.mxu0 %v1066
    %1388 = vmatmul.bf16.gmra.mxu0 %v406
    %v1389 = vpop.f32.mrf.mxu0
    %v1390 = vadd.f32 %v1377, %v1389
    %v1391 = vpop.f32.mrf.mxu0
    %1392 = vdwg.mxu0
    %1393 = vmatpush.bf16.msra.mxu0 %v1081
    %1394 = vmatpush.bf16.msra.mxu0 %v1080
    %1395 = vmatpush.bf16.msra.mxu0 %v1079
    %1396 = vmatpush.bf16.msra.mxu0 %v1078
    %1397 = vmatpush.bf16.msra.mxu0 %v1077
    %1398 = vmatpush.bf16.msra.mxu0 %v1076
    %1399 = vmatpush.bf16.msra.mxu0 %v1075
    %1400 = vmatpush.bf16.msra.mxu0 %v1074
    %1401 = vmatmul.bf16.gmra.mxu0 %v407
    %v1402 = vpop.f32.mrf.mxu0
    %v1403 = vadd.f32 %v1390, %v1402
    %v1404 = vpop.f32.mrf.mxu0
    %1405 = vdwg.mxu0
    %1406 = vmatpush.bf16.msra.mxu0 %v1089
    %1407 = vmatpush.bf16.msra.mxu0 %v1088
    %1408 = vmatpush.bf16.msra.mxu0 %v1087
    %1409 = vmatpush.bf16.msra.mxu0 %v1086
    %1410 = vmatpush.bf16.msra.mxu0 %v1085
    %1411 = vmatpush.bf16.msra.mxu0 %v1084
    %1412 = vmatpush.bf16.msra.mxu0 %v1083
    %1413 = vmatpush.bf16.msra.mxu0 %v1082
    %1414 = vmatmul.bf16.gmra.mxu0 %v408
    %v1415 = vpop.f32.mrf.mxu0
    %v1416 = vadd.f32 %v1403, %v1415
    %v1417 = vpop.f32.mrf.mxu0
    %1418 = vdwg.mxu0
    %1419 = vmatpush.bf16.msra.mxu0 %v1097
    %1420 = vmatpush.bf16.msra.mxu0 %v1096
    %1421 = vmatpush.bf16.msra.mxu0 %v1095
    %1422 = vmatpush.bf16.msra.mxu0 %v1094
    %1423 = vmatpush.bf16.msra.mxu0 %v1093
    %1424 = vmatpush.bf16.msra.mxu0 %v1092
    %1425 = vmatpush.bf16.msra.mxu0 %v1091
    %1426 = vmatpush.bf16.msra.mxu0 %v1090
    %1427 = vmatmul.bf16.gmra.mxu0 %v409
    %v1428 = vpop.f32.mrf.mxu0
    %v1429 = vadd.f32 %v1416, %v1428
    %v1430 = vpop.f32.mrf.mxu0
    %1431 = vdwg.mxu0
    %1432 = vmatpush.bf16.msra.mxu0 %v1105
    %1433 = vmatpush.bf16.msra.mxu0 %v1104
    %1434 = vmatpush.bf16.msra.mxu0 %v1103
    %1435 = vmatpush.bf16.msra.mxu0 %v1102
    %1436 = vmatpush.bf16.msra.mxu0 %v1101
    %1437 = vmatpush.bf16.msra.mxu0 %v1100
    %1438 = vmatpush.bf16.msra.mxu0 %v1099
    %1439 = vmatpush.bf16.msra.mxu0 %v1098
    %1440 = vmatmul.bf16.gmra.mxu0 %v410
    %v1441 = vpop.f32.mrf.mxu0
    %v1442 = vadd.f32 %v1429, %v1441
    %v1443 = vpop.f32.mrf.mxu0
    %1444 = vdwg.mxu0
    %1445 = vmatpush.bf16.msra.mxu0 %v1113
    %1446 = vmatpush.bf16.msra.mxu0 %v1112
    %1447 = vmatpush.bf16.msra.mxu0 %v1111
    %1448 = vmatpush.bf16.msra.mxu0 %v1110
    %1449 = vmatpush.bf16.msra.mxu0 %v1109
    %1450 = vmatpush.bf16.msra.mxu0 %v1108
    %1451 = vmatpush.bf16.msra.mxu0 %v1107
    %1452 = vmatpush.bf16.msra.mxu0 %v1106
    %1453 = vmatmul.bf16.gmra.mxu0 %v411
    %v1454 = vpop.f32.mrf.mxu0
    %v1455 = vadd.f32 %v1442, %v1454
    %v1456 = vpop.f32.mrf.mxu0
    %1457 = vdwg.mxu0
    %1458 = vmatpush.bf16.msra.mxu0 %v1121
    %1459 = vmatpush.bf16.msra.mxu0 %v1120
    %1460 = vmatpush.bf16.msra.mxu0 %v1119
    %1461 = vmatpush.bf16.msra.mxu0 %v1118
    %1462 = vmatpush.bf16.msra.mxu0 %v1117
    %1463 = vmatpush.bf16.msra.mxu0 %v1116
    %1464 = vmatpush.bf16.msra.mxu0 %v1115
    %1465 = vmatpush.bf16.msra.mxu0 %v1114
    %1466 = vmatmul.bf16.gmra.mxu0 %v412
    %v1467 = vpop.f32.mrf.mxu0
    %v1468 = vadd.f32 %v1455, %v1467
    %v1469 = vpop.f32.mrf.mxu0
    %1470 = vdwg.mxu0
    %1471 = vmatpush.bf16.msra.mxu0 %v1129
    %1472 = vmatpush.bf16.msra.mxu0 %v1128
    %1473 = vmatpush.bf16.msra.mxu0 %v1127
    %1474 = vmatpush.bf16.msra.mxu0 %v1126
    %1475 = vmatpush.bf16.msra.mxu0 %v1125
    %1476 = vmatpush.bf16.msra.mxu0 %v1124
    %1477 = vmatpush.bf16.msra.mxu0 %v1123
    %1478 = vmatpush.bf16.msra.mxu0 %v1122
    %1479 = vmatmul.bf16.gmra.mxu0 %v413
    %v1480 = vpop.f32.mrf.mxu0
    %v1481 = vadd.f32 %v1468, %v1480
    %v1482 = vpop.f32.mrf.mxu0
    %1483 = vdwg.mxu0
    %1484 = vmatpush.bf16.msra.mxu0 %v1137
    %1485 = vmatpush.bf16.msra.mxu0 %v1136
    %1486 = vmatpush.bf16.msra.mxu0 %v1135
    %1487 = vmatpush.bf16.msra.mxu0 %v1134
    %1488 = vmatpush.bf16.msra.mxu0 %v1133
    %1489 = vmatpush.bf16.msra.mxu0 %v1132
    %1490 = vmatpush.bf16.msra.mxu0 %v1131
    %1491 = vmatpush.bf16.msra.mxu0 %v1130
    %1492 = vmatmul.bf16.gmra.mxu0 %v414
    %v1493 = vpop.f32.mrf.mxu0
    %v1494 = vadd.f32 %v1481, %v1493
    %v1495 = vpop.f32.mrf.mxu0
    %1496 = vdwg.mxu0
    %1497 = vmatpush.bf16.msra.mxu0 %v1145
    %1498 = vmatpush.bf16.msra.mxu0 %v1144
    %1499 = vmatpush.bf16.msra.mxu0 %v1143
    %1500 = vmatpush.bf16.msra.mxu0 %v1142
    %1501 = vmatpush.bf16.msra.mxu0 %v1141
    %1502 = vmatpush.bf16.msra.mxu0 %v1140
    %1503 = vmatpush.bf16.msra.mxu0 %v1139
    %1504 = vmatpush.bf16.msra.mxu0 %v1138
    %1505 = vmatmul.bf16.gmra.mxu0 %v415
    %v1506 = vpop.f32.mrf.mxu0
    %v1507 = vadd.f32 %v1494, %v1506
    %v1508 = vpop.f32.mrf.mxu0
    %1509 = vdwg.mxu0
    %1510 = vmatpush.bf16.msra.mxu0 %v1153
    %1511 = vmatpush.bf16.msra.mxu0 %v1152
    %1512 = vmatpush.bf16.msra.mxu0 %v1151
    %1513 = vmatpush.bf16.msra.mxu0 %v1150
    %1514 = vmatpush.bf16.msra.mxu0 %v1149
    %1515 = vmatpush.bf16.msra.mxu0 %v1148
    %1516 = vmatpush.bf16.msra.mxu0 %v1147
    %1517 = vmatpush.bf16.msra.mxu0 %v1146
    %1518 = vmatmul.bf16.gmra.mxu0 %v416
    %v1519 = vpop.f32.mrf.mxu0
    %v1520 = vadd.f32 %v1507, %v1519
    %v1521 = vpop.f32.mrf.mxu0
    %1522 = vdwg.mxu0
    %1523 = vmatpush.bf16.msra.mxu0 %v1161
    %1524 = vmatpush.bf16.msra.mxu0 %v1160
    %1525 = vmatpush.bf16.msra.mxu0 %v1159
    %1526 = vmatpush.bf16.msra.mxu0 %v1158
    %1527 = vmatpush.bf16.msra.mxu0 %v1157
    %1528 = vmatpush.bf16.msra.mxu0 %v1156
    %1529 = vmatpush.bf16.msra.mxu0 %v1155
    %1530 = vmatpush.bf16.msra.mxu0 %v1154
    %1531 = vmatmul.bf16.gmra.mxu0 %v417
    %v1532 = vpop.f32.mrf.mxu0
    %v1533 = vadd.f32 %v1520, %v1532
    %v1534 = vpop.f32.mrf.mxu0
    %1535 = vdwg.mxu0
    %1536 = vmatpush.bf16.msra.mxu0 %v1169
    %1537 = vmatpush.bf16.msra.mxu0 %v1168
    %1538 = vmatpush.bf16.msra.mxu0 %v1167
    %1539 = vmatpush.bf16.msra.mxu0 %v1166
    %1540 = vmatpush.bf16.msra.mxu0 %v1165
    %1541 = vmatpush.bf16.msra.mxu0 %v1164
    %1542 = vmatpush.bf16.msra.mxu0 %v1163
    %1543 = vmatpush.bf16.msra.mxu0 %v1162
    %1544 = vmatmul.bf16.gmra.mxu0 %v418
    %v1545 = vpop.f32.mrf.mxu0
    %v1546 = vadd.f32 %v1533, %v1545
    %v1547 = vpop.f32.mrf.mxu0
    %1548 = vdwg.mxu0
    %1549 = vmatpush.bf16.msra.mxu0 %v1177
    %1550 = vmatpush.bf16.msra.mxu0 %v1176
    %1551 = vmatpush.bf16.msra.mxu0 %v1175
    %1552 = vmatpush.bf16.msra.mxu0 %v1174
    %1553 = vmatpush.bf16.msra.mxu0 %v1173
    %1554 = vmatpush.bf16.msra.mxu0 %v1172
    %1555 = vmatpush.bf16.msra.mxu0 %v1171
    %1556 = vmatpush.bf16.msra.mxu0 %v1170
    %1557 = vmatmul.bf16.gmra.mxu0 %v419
    %v1558 = vpop.f32.mrf.mxu0
    %v1559 = vadd.f32 %v1546, %v1558
    %v1560 = vpop.f32.mrf.mxu0
    %1561 = vdwg.mxu0
    %1562 = vmatpush.bf16.msra.mxu0 %v1185
    %1563 = vmatpush.bf16.msra.mxu0 %v1184
    %1564 = vmatpush.bf16.msra.mxu0 %v1183
    %1565 = vmatpush.bf16.msra.mxu0 %v1182
    %1566 = vmatpush.bf16.msra.mxu0 %v1181
    %1567 = vmatpush.bf16.msra.mxu0 %v1180
    %1568 = vmatpush.bf16.msra.mxu0 %v1179
    %1569 = vmatpush.bf16.msra.mxu0 %v1178
    %1570 = vmatmul.bf16.gmra.mxu0 %v420
    %v1571 = vpop.f32.mrf.mxu0
    %v1572 = vadd.f32 %v1559, %v1571
    %v1573 = vpop.f32.mrf.mxu0
    %1574 = vdwg.mxu0
    %1575 = vmatpush.bf16.msra.mxu0 %v1193
    %1576 = vmatpush.bf16.msra.mxu0 %v1192
    %1577 = vmatpush.bf16.msra.mxu0 %v1191
    %1578 = vmatpush.bf16.msra.mxu0 %v1190
    %1579 = vmatpush.bf16.msra.mxu0 %v1189
    %1580 = vmatpush.bf16.msra.mxu0 %v1188
    %1581 = vmatpush.bf16.msra.mxu0 %v1187
    %1582 = vmatpush.bf16.msra.mxu0 %v1186
    %1583 = vmatmul.bf16.gmra.mxu0 %v421
    %v1584 = vpop.f32.mrf.mxu0
    %v1585 = vadd.f32 %v1572, %v1584
    %v1586 = vpop.f32.mrf.mxu0
    %1587 = vdwg.mxu0
    %1588 = vmatpush.bf16.msra.mxu0 %v1201
    %1589 = vmatpush.bf16.msra.mxu0 %v1200
    %1590 = vmatpush.bf16.msra.mxu0 %v1199
    %1591 = vmatpush.bf16.msra.mxu0 %v1198
    %1592 = vmatpush.bf16.msra.mxu0 %v1197
    %1593 = vmatpush.bf16.msra.mxu0 %v1196
    %1594 = vmatpush.bf16.msra.mxu0 %v1195
    %1595 = vmatpush.bf16.msra.mxu0 %v1194
    %1596 = vmatmul.bf16.gmra.mxu0 %v422
    %v1597 = vpop.f32.mrf.mxu0
    %v1598 = vadd.f32 %v1585, %v1597
    %v1599 = vpop.f32.mrf.mxu0
    %1600 = vdwg.mxu0
    %v1601 = vmax.f32 %v1598, 0.0
    %v1602 = vpack.c.bf16 %v1601, %v1601
    %v1603 = vld [vmem:[%s3] sm:$0xf]
    %v1604 = vld [vmem:[%s3 + $0x4] sm:$0xf]
    %v1605 = vld [vmem:[%s3 + $0x8] sm:$0xf]
    %v1606 = vld [vmem:[%s3 + $0xc] sm:$0xf]
    %v1607 = vld [vmem:[%s3 + $0x10] sm:$0xf]
    %v1608 = vld [vmem:[%s3 + $0x14] sm:$0xf]
    %v1609 = vld [vmem:[%s3 + $0x18] sm:$0xf]
    %v1610 = vld [vmem:[%s3 + $0x1c] sm:$0xf]
    %v1611 = vld [vmem:[%s3 + $0x20] sm:$0xf]
    %v1612 = vld [vmem:[%s3 + $0x24] sm:$0xf]
    %v1613 = vld [vmem:[%s3 + $0x28] sm:$0xf]
    %v1614 = vld [vmem:[%s3 + $0x2c] sm:$0xf]
    %v1615 = vld [vmem:[%s3 + $0x30] sm:$0xf]
    %v1616 = vld [vmem:[%s3 + $0x34] sm:$0xf]
    %v1617 = vld [vmem:[%s3 + $0x38] sm:$0xf]
    %v1618 = vld [vmem:[%s3 + $0x3c] sm:$0xf]
    %v1619 = vld [vmem:[%s4] sm:$0x1]
    %v1621 = vperm.slane %v1619, 0
    %v1639 = vunpack.c.l.b16 %v1603
    %v1640 = vunpack.c.l.b16 %v1604
    %v1641 = vunpack.c.l.b16 %v1605
    %v1642 = vunpack.c.l.b16 %v1606
    %v1643 = vunpack.c.l.b16 %v1607
    %v1644 = vunpack.c.l.b16 %v1608
    %v1645 = vunpack.c.l.b16 %v1609
    %v1646 = vunpack.c.l.b16 %v1610
    %v1647 = vunpack.c.l.b16 %v1611
    %v1648 = vunpack.c.l.b16 %v1612
    %v1649 = vunpack.c.l.b16 %v1613
    %v1650 = vunpack.c.l.b16 %v1614
    %v1651 = vunpack.c.l.b16 %v1615
    %v1652 = vunpack.c.l.b16 %v1616
    %v1653 = vunpack.c.l.b16 %v1617
    %v1654 = vunpack.c.l.b16 %v1618
    %v1655 = vpack.c.b16 %v1640, %v1639
    %v1656 = vpack.c.b16 %v1642, %v1641
    %v1657 = vpack.c.b16 %v1644, %v1643
    %v1658 = vpack.c.b16 %v1646, %v1645
    %v1659 = vpack.c.b16 %v1648, %v1647
    %v1660 = vpack.c.b16 %v1650, %v1649
    %v1661 = vpack.c.b16 %v1652, %v1651
    %v1662 = vpack.c.b16 %v1654, %v1653
    %1671 = vmatpush.bf16.msra.mxu0 %v1662
    %1672 = vmatpush.bf16.msra.mxu0 %v1661
    %1673 = vmatpush.bf16.msra.mxu0 %v1660
    %1674 = vmatpush.bf16.msra.mxu0 %v1659
    %1675 = vmatpush.bf16.msra.mxu0 %v1658
    %1676 = vmatpush.bf16.msra.mxu0 %v1657
    %1677 = vmatpush.bf16.msra.mxu0 %v1656
    %1678 = vmatpush.bf16.msra.mxu0 %v1655
    %1679 = vmatmul.bf16.gmra.mxu0 %v1602
    %v1680 = vpop.f32.mrf.mxu0
    %v1681 = vadd.f32 %v1621, %v1680
    %v1682 = vpop.f32.mrf.mxu0
    %1683 = vdwg.mxu0
    %v1684 = vmax.f32 %v1681, 0.0
    %v1685 = vpack.c.bf16 %v1684, %v1684
    %v1686 = vld [vmem:[%s5] sm:$0xf]
    %v1687 = vld [vmem:[%s5 + $0x4] sm:$0xf]
    %v1688 = vld [vmem:[%s5 + $0x8] sm:$0xf]
    %v1689 = vld [vmem:[%s5 + $0xc] sm:$0xf]
    %v1690 = vld [vmem:[%s5 + $0x10] sm:$0xf]
    %v1691 = vld [vmem:[%s5 + $0x14] sm:$0xf]
    %v1692 = vld [vmem:[%s5 + $0x18] sm:$0xf]
    %v1693 = vld [vmem:[%s5 + $0x1c] sm:$0xf]
    %v1694 = vld [vmem:[%s5 + $0x20] sm:$0xf]
    %v1695 = vld [vmem:[%s5 + $0x24] sm:$0xf]
    %v1696 = vld [vmem:[%s5 + $0x28] sm:$0xf]
    %v1697 = vld [vmem:[%s5 + $0x2c] sm:$0xf]
    %v1698 = vld [vmem:[%s5 + $0x30] sm:$0xf]
    %v1699 = vld [vmem:[%s5 + $0x34] sm:$0xf]
    %v1700 = vld [vmem:[%s5 + $0x38] sm:$0xf]
    %v1701 = vld [vmem:[%s5 + $0x3c] sm:$0xf]
    %v1702 = vld [vmem:[%s6] sm:$0x1]
    %v1704 = vperm.slane %v1702, 0
    %v1722 = vunpack.c.l.b16 %v1686
    %v1723 = vunpack.c.l.b16 %v1687
    %v1724 = vunpack.c.l.b16 %v1688
    %v1725 = vunpack.c.l.b16 %v1689
    %v1726 = vunpack.c.l.b16 %v1690
    %v1727 = vunpack.c.l.b16 %v1691
    %v1728 = vunpack.c.l.b16 %v1692
    %v1729 = vunpack.c.l.b16 %v1693
    %v1730 = vunpack.c.l.b16 %v1694
    %v1731 = vunpack.c.l.b16 %v1695
    %v1732 = vunpack.c.l.b16 %v1696
    %v1733 = vunpack.c.l.b16 %v1697
    %v1734 = vunpack.c.l.b16 %v1698
    %v1735 = vunpack.c.l.b16 %v1699
    %v1736 = vunpack.c.l.b16 %v1700
    %v1737 = vunpack.c.l.b16 %v1701
    %v1738 = vpack.c.b16 %v1723, %v1722
    %v1739 = vpack.c.b16 %v1725, %v1724
    %v1740 = vpack.c.b16 %v1727, %v1726
    %v1741 = vpack.c.b16 %v1729, %v1728
    %v1742 = vpack.c.b16 %v1731, %v1730
    %v1743 = vpack.c.b16 %v1733, %v1732
    %v1744 = vpack.c.b16 %v1735, %v1734
    %v1745 = vpack.c.b16 %v1737, %v1736
    %1754 = vmatpush.bf16.msra.mxu0 %v1745
    %1755 = vmatpush.bf16.msra.mxu0 %v1744
    %1756 = vmatpush.bf16.msra.mxu0 %v1743
    %1757 = vmatpush.bf16.msra.mxu0 %v1742
    %1758 = vmatpush.bf16.msra.mxu0 %v1741
    %1759 = vmatpush.bf16.msra.mxu0 %v1740
    %1760 = vmatpush.bf16.msra.mxu0 %v1739
    %1761 = vmatpush.bf16.msra.mxu0 %v1738
    %1762 = vmatmul.bf16.gmra.mxu0 %v1685
    %v1763 = vpop.f32.mrf.mxu0
    %v1764 = vadd.f32 %v1704, %v1763
    %v1765 = vpop.f32.mrf.mxu0
    %1766 = vdwg.mxu0
    %vm1767 = vcmask 80896
    %v1768 = vsel %vm1767, %v1764, -inf
    %1769 = vmax.xlane.f32.xlu0 %v1768
    %v1770 = vpop.xlane.xlu0 %1769
    %v1771 = vsub.f32 %v1764, %v1770
    %v1772 = vmul.f32 %v1771, 1.442695
    %v1773 = vpow.pop %v1772
    %v1774 = vsel %vm1767, %v1773, 0.0
    %1775 = vadd.xlane.f32.xlu0 %v1774
    %v1776 = vpop.xlane.xlu0 %1775
    %v1777 = vrcp.pop %v1776
    %v1778 = vmul.f32 %v1776, %v1777
    %v1779 = vsub.f32 1.0, %v1778
    %v1780 = vmul.f32 %v1777, %v1779
    %v1781 = vadd.f32 %v1777, %v1780
    %vm1782 = vweird.f32 %v1776
    %vm1783 = vweird.f32 %v1777
    %vm1784 = vmor %vm1782, %vm1783
    %v1785 = vsel %vm1784, %v1777, %v1781
    %v1786 = vand.u32 2147483647, %v1776
    %vm1787 = vcmp.eq.f32.partialorder %v1786, 8.507059e+37
    %v1788 = vand.u32 %v1776, 2147483648
    %v1789 = vor.u32 1.1754944e-38, %v1788
    %v1790 = vsel %vm1787, %v1789, %v1785
    %v1791 = vmul.f32 %v1773, %v1790
    %1792 = vst.msk [vmem:[#allocation7] sm:$0xff] %vm1767, %v1791
    // Predicated region
    $region38: #{tpu_custom_call.1} parent=1 // pred_check
      _
    $region39: #{tpu_custom_call.1} parent=1 // pred_check_branch
      %1794 = sbr.rel (0) target = $region41
    $region40: #{tpu_custom_call.1} parent=1 // pred_region
      %1796 = vsyncadd [#allocation4], 0
      %s1798 = sshll.u32 [#allocation7], 4
      %s1799 = int_to_ptr.vmem [resolvable:$true] %s1798
      %s1800 = sshll.u32 %s7, 4
      %s1801 = int_to_ptr.hbm [resolvable:$true] %s1800
      %1803 = dma.vmem_to_hbm [thread:$0]  %s1799, 128, %s1801, [#allocation4]
    $region41: #{tpu_custom_call.1} parent=1 // pred_fallthru
      _
    // Predicated region
    $region42: #{tpu_custom_call.1} parent=1 // pred_check
      _
    $region43: #{tpu_custom_call.1} parent=1 // pred_check_branch
      %1805 = sbr.rel (0) target = $region45
    $region44: #{tpu_custom_call.1} parent=1 // pred_region
      %1807 = dma.done [#allocation4], 128
    $region45: #{tpu_custom_call.1} parent=1 // pred_fallthru
      _
    %1808 = vsyncpa [#allocation3], 1
    %1809 = vsyncpa [#allocation6], 1
    %1810 = vsyncpa [#allocation4], 1

</llo_original>
